<compile_context>
chip_gen: v7x
topology: tpu7x:2x2x1
jax: 0.10.0
libtpu: 0.0.40
codegen_flags: <defaults>
</compile_context>

<pallas_src>
import functools
import math

import jax
import jax.numpy as jnp
from jax import lax
from jax.experimental import pallas as pl
from jax.experimental.pallas import tpu as pltpu


# ----------------------------------------------------------------------------
# Fused Pallas kernel
# ----------------------------------------------------------------------------

def _tf_fused_kernel(src_ref, pe_ref, mask_ref,
                     ew1_ref, eb1_ref, ew2_ref, eb2_ref,
                     inw_ref, inb_ref, opw_ref, opb_ref,
                     f1w_ref, f1b_ref, f2w_ref, f2b_ref,
                     g1_ref, be1_ref, g2_ref, be2_ref,
                     hw1_ref, hb1_ref, hw2t_ref, hb2_ref,
                     ow1_ref, ob1_ref, ow2_ref, ob2_ref,
                     o_ref, attn_sc, x_sc, *, nhead, eps, scale):
    """One grid step = (batch row b, encoder layer l).  The residual stream lives in the
    VMEM scratch x_sc across the layer axis; front-end and heads are phase-gated with pl.when."""
    layer = pl.program_id(1)
    last = pl.num_programs(1) - 1

    # ---- front end (once per batch row): encoder MLP (1 -> d/2 -> d, ReLU) + PE add ----
    @pl.when(layer == 0)
    def _():
        # Linear(1, d/2) has K == 1 -> outer product via broadcast (no degenerate matmul).
        hmid = jnp.maximum(src_ref[...] * ew1_ref[...] + eb1_ref[...], 0.0)           # (S, d/2)
        x0 = jnp.dot(hmid, ew2_ref[...], preferred_element_type=jnp.float32) + eb2_ref[...]
        # Bug-compatible with the reference: PE row is indexed by the *batch* dim (PE is added
        # before the (0,1) transpose), so one PE row is broadcast over all S positions.
        x_sc[...] = x0 + pe_ref[0]

    x = x_sc[...]                                   # (S, d) residual stream, resident in VMEM
    S, d = x.shape
    dh = d // nhead
    mask = mask_ref[...]                            # (S, S) additive causal mask

    # ---- self attention: QKV projection + all heads, fully in-kernel ----
    qkv = jnp.dot(x, inw_ref[0], preferred_element_type=jnp.float32) + inb_ref[0]     # (S, 3d)
    for h in range(nhead):
        q = qkv[:, h * dh:(h + 1) * dh]
        k = qkv[:, d + h * dh:d + (h + 1) * dh]
        v = qkv[:, 2 * d + h * dh:2 * d + (h + 1) * dh]
        s = lax.dot_general(q, k, (((1,), (1,)), ((), ())),
                            preferred_element_type=jnp.float32) * scale + mask        # (S, S)
        m = jnp.max(s, axis=-1, keepdims=True)
        p = jnp.exp(s - m)
        p = p * pl.reciprocal(jnp.sum(p, axis=-1, keepdims=True), approx=True)
        attn_sc[:, h * dh:(h + 1) * dh] = jnp.dot(p, v, preferred_element_type=jnp.float32)

    attn = jnp.dot(attn_sc[...], opw_ref[0], preferred_element_type=jnp.float32) + opb_ref[0]

    # ---- add & LayerNorm 1 (post-norm) ----
    x1 = x + attn
    mu = jnp.mean(x1, axis=-1, keepdims=True)
    var = jnp.mean((x1 - mu) * (x1 - mu), axis=-1, keepdims=True)
    x1 = (x1 - mu) * lax.rsqrt(var + eps) * g1_ref[0] + be1_ref[0]

    # ---- feed forward (d -> dim_ff -> d, ReLU) ----
    ff = jnp.maximum(jnp.dot(x1, f1w_ref[0], preferred_element_type=jnp.float32) + f1b_ref[0], 0.0)
    ff = jnp.dot(ff, f2w_ref[0], preferred_element_type=jnp.float32) + f2b_ref[0]

    # ---- add & LayerNorm 2 -> write back into the resident residual stream ----
    x2 = x1 + ff
    mu = jnp.mean(x2, axis=-1, keepdims=True)
    var = jnp.mean((x2 - mu) * (x2 - mu), axis=-1, keepdims=True)
    x2 = (x2 - mu) * lax.rsqrt(var + eps) * g2_ref[0] + be2_ref[0]
    x_sc[...] = x2

    # ---- tail (once per batch row, after the last layer): prediction heads ----
    @pl.when(layer == last)
    def _():
        t = jnp.maximum(jnp.dot(x2, hw1_ref[...], preferred_element_type=jnp.float32)
                        + hb1_ref[...], 0.0)                                          # (S, d/2)
        # linear-head channel 0 for all S positions: (1, d/2) x (S, d/2)^T -> (1, S),
        # using only the trans_b dot_general form (no in-kernel transposes/reshapes).
        y = lax.dot_general(hw2t_ref[...], t, (((1,), (1,)), ((), ())),
                            preferred_element_type=jnp.float32) + hb2_ref[...]        # (1, S)
        u = jnp.maximum(jnp.dot(y, ow1_ref[...], preferred_element_type=jnp.float32)
                        + ob1_ref[...], 0.0)                                          # (1, mid)
        o_ref[0] = jnp.dot(u, ow2_ref[...], preferred_element_type=jnp.float32) + ob2_ref[...]


# ----------------------------------------------------------------------------
# Wrapper: one pallas_call for the whole forward
# ----------------------------------------------------------------------------

def tf_model_forward(params, src, srcmask, *, nhead):
    """src: (B, iw, 1) f32, srcmask: (iw, iw) additive causal mask. Returns (B, ow)."""
    B, S, _ = src.shape
    d = params["enc_w2"].shape[1]
    st = params["layers"]
    L = st["in_proj_w"].shape[0]
    F = st["ff_w1"].shape[2]
    ow = params["out_w2"].shape[1]
    scale = 1.0 / math.sqrt(d // nhead)

    src2d = src.reshape(B * S, 1)
    pe_b = params["pe"][:B]                        # (B, 1, d): bug-compatible batch-indexed rows

    def full(a):                                   # resident, fetched once
        return pl.BlockSpec(a.shape, lambda b, l: (0,) * a.ndim)

    def per_layer(shape):                          # streamed / double-buffered along layer axis
        return pl.BlockSpec((1,) + shape, lambda b, l: (l, 0, 0))

    out = pl.pallas_call(
        functools.partial(_tf_fused_kernel, nhead=nhead, eps=1e-5, scale=scale),
        out_shape=jax.ShapeDtypeStruct((B, 1, ow), jnp.float32),
        grid=(B, L),
        in_specs=[
            pl.BlockSpec((S, 1), lambda b, l: (b, 0)),          # src rows of batch b
            pl.BlockSpec((1, 1, d), lambda b, l: (b, 0, 0)),    # PE row b
            pl.BlockSpec((S, S), lambda b, l: (0, 0)),          # causal mask (resident)
            full(params["enc_w1"]), full(params["enc_b1"]),     # encoder MLP
            full(params["enc_w2"]), full(params["enc_b2"]),
            per_layer((d, 3 * d)), per_layer((1, 3 * d)),       # in_proj  w/b
            per_layer((d, d)),     per_layer((1, d)),           # out_proj w/b
            per_layer((d, F)),     per_layer((1, F)),           # ff1      w/b
            per_layer((F, d)),     per_layer((1, d)),           # ff2      w/b
            per_layer((1, d)),     per_layer((1, d)),           # ln1 gamma/beta
            per_layer((1, d)),     per_layer((1, d)),           # ln2 gamma/beta
            full(params["head_w1"]), full(params["head_b1"]),   # linear head
            full(params["head_w2_t"]), full(params["head_b2"]),
            full(params["out_w1"]), full(params["out_b1"]),     # linear2
            full(params["out_w2"]), full(params["out_b2"]),
        ],
        out_specs=pl.BlockSpec((1, 1, ow), lambda b, l: (b, 0, 0)),
        scratch_shapes=[pltpu.VMEM((S, d), jnp.float32),        # per-head attention assembly
                        pltpu.VMEM((S, d), jnp.float32)],       # resident residual stream
        compiler_params=pltpu.CompilerParams(
            dimension_semantics=("parallel", "arbitrary")),     # batch parallel (v7x 2 TCs)
    )(src2d, pe_b, srcmask,
      params["enc_w1"], params["enc_b1"], params["enc_w2"], params["enc_b2"],
      st["in_proj_w"], st["in_proj_b"], st["out_proj_w"], st["out_proj_b"],
      st["ff_w1"], st["ff_b1"], st["ff_w2"], st["ff_b2"],
      st["ln1_g"], st["ln1_b"], st["ln2_g"], st["ln2_b"],
      params["head_w1"], params["head_b1"], params["head_w2_t"], params["head_b2"],
      params["out_w1"], params["out_b1"], params["out_w2"], params["out_b2"])
    return out.reshape(B, ow)


# ----------------------------------------------------------------------------
# Model glue (plain JAX: parameter bookkeeping only)
# ----------------------------------------------------------------------------

def positional_encoding(max_len, d_model):
    position = jnp.arange(max_len, dtype=jnp.float32)[:, None]
    div_term = jnp.exp(jnp.arange(0, d_model, 2, dtype=jnp.float32)
                       * (-math.log(10000.0) / d_model))
    pe = jnp.zeros((max_len, d_model), dtype=jnp.float32)
    pe = pe.at[:, 0::2].set(jnp.sin(position * div_term))
    pe = pe.at[:, 1::2].set(jnp.cos(position * div_term))
    return pe[:, None, :]  # (max_len, 1, d_model)


def generate_square_subsequent_mask(sz):
    lower = jnp.tril(jnp.ones((sz, sz), dtype=bool))
    return jnp.where(lower, 0.0, -jnp.inf).astype(jnp.float32)


def init_params(key, iw, ow, d_model, nhead, nlayers, dim_ff=2048, max_len=64):
    del nhead  # head count is a static forward-time arg; params hold only arrays

    def dense(k, fan_in, fan_out):
        w = jax.random.normal(k, (fan_in, fan_out), jnp.float32) / math.sqrt(fan_in)
        b = jnp.zeros((1, fan_out), jnp.float32)
        return w, b

    keys = list(jax.random.split(key, 6 + 4 * nlayers))
    ki = iter(keys)

    p = {}
    # self.encoder: Linear(1, d/2), ReLU, Linear(d/2, d)
    p["enc_w1"], p["enc_b1"] = dense(next(ki), 1, d_model // 2)
    p["enc_w2"], p["enc_b2"] = dense(next(ki), d_model // 2, d_model)
    # self.linear: Linear(d, d/2), ReLU, Linear(d/2, 1)
    p["head_w1"], p["head_b1"] = dense(next(ki), d_model, d_model // 2)
    hw2, p["head_b2"] = dense(next(ki), d_model // 2, 1)
    p["head_w2_t"] = hw2.T                      # stored transposed (1, d/2) for trans_b dot
    # self.linear2: Linear(iw, (iw+ow)//2), ReLU, Linear((iw+ow)//2, ow)
    mid = (iw + ow) // 2
    p["out_w1"], p["out_b1"] = dense(next(ki), iw, mid)
    p["out_w2"], p["out_b2"] = dense(next(ki), mid, ow)

    # transformer encoder layers -> stacked along a leading layer axis
    names = ("in_proj_w", "in_proj_b", "out_proj_w", "out_proj_b",
             "ff_w1", "ff_b1", "ff_w2", "ff_b2",
             "ln1_g", "ln1_b", "ln2_g", "ln2_b")
    per = {n: [] for n in names}
    for _ in range(nlayers):
        w, b = dense(next(ki), d_model, 3 * d_model); per["in_proj_w"].append(w); per["in_proj_b"].append(b)
        w, b = dense(next(ki), d_model, d_model);     per["out_proj_w"].append(w); per["out_proj_b"].append(b)
        w, b = dense(next(ki), d_model, dim_ff);      per["ff_w1"].append(w);      per["ff_b1"].append(b)
        w, b = dense(next(ki), dim_ff, d_model);      per["ff_w2"].append(w);      per["ff_b2"].append(b)
        per["ln1_g"].append(jnp.ones((1, d_model), jnp.float32))
        per["ln1_b"].append(jnp.zeros((1, d_model), jnp.float32))
        per["ln2_g"].append(jnp.ones((1, d_model), jnp.float32))
        per["ln2_b"].append(jnp.zeros((1, d_model), jnp.float32))
    p["layers"] = {n: jnp.stack(v, axis=0) for n, v in per.items()}
    p["pe"] = positional_encoding(max_len, d_model)
    return p


# ----------------------------------------------------------------------------
# Main
# ----------------------------------------------------------------------------

if __name__ == "__main__":
    # small shapes consistent with the module's forward
    B, IW, OW = 2, 16, 8
    D_MODEL, NHEAD, NLAYERS = 32, 4, 2

    key = jax.random.PRNGKey(0)
    k_params, k_src = jax.random.split(key)

    params = init_params(k_params, IW, OW, D_MODEL, NHEAD, NLAYERS)
    src = jax.random.normal(k_src, (B, IW, 1), dtype=jnp.float32)
    srcmask = generate_square_subsequent_mask(IW)

    fwd = jax.jit(functools.partial(tf_model_forward, nhead=NHEAD))
    out = jax.block_until_ready(fwd(params, src, srcmask))

    assert out.shape == (B, OW), out.shape
    assert bool(jnp.all(jnp.isfinite(out)))
    print("KERNEL_OK")
</pallas_src>

<mosaic_0001>
module attributes {stable_mosaic.version = 11 : i64} {
  func.func @_tf_fused_kernel(%arg0: i32, %arg1: i32, %arg2: memref<16x1xf32, #tpu.memory_space<vmem>>, %arg3: memref<1x1x32xf32, #tpu.memory_space<vmem>>, %arg4: memref<16x16xf32, #tpu.memory_space<vmem>>, %arg5: memref<1x16xf32, #tpu.memory_space<vmem>>, %arg6: memref<1x16xf32, #tpu.memory_space<vmem>>, %arg7: memref<16x32xf32, #tpu.memory_space<vmem>>, %arg8: memref<1x32xf32, #tpu.memory_space<vmem>>, %arg9: memref<1x32x96xf32, #tpu.memory_space<vmem>>, %arg10: memref<1x1x96xf32, #tpu.memory_space<vmem>>, %arg11: memref<1x32x32xf32, #tpu.memory_space<vmem>>, %arg12: memref<1x1x32xf32, #tpu.memory_space<vmem>>, %arg13: memref<1x32x2048xf32, #tpu.memory_space<vmem>>, %arg14: memref<1x1x2048xf32, #tpu.memory_space<vmem>>, %arg15: memref<1x2048x32xf32, #tpu.memory_space<vmem>>, %arg16: memref<1x1x32xf32, #tpu.memory_space<vmem>>, %arg17: memref<1x1x32xf32, #tpu.memory_space<vmem>>, %arg18: memref<1x1x32xf32, #tpu.memory_space<vmem>>, %arg19: memref<1x1x32xf32, #tpu.memory_space<vmem>>, %arg20: memref<1x1x32xf32, #tpu.memory_space<vmem>>, %arg21: memref<32x16xf32, #tpu.memory_space<vmem>>, %arg22: memref<1x16xf32, #tpu.memory_space<vmem>>, %arg23: memref<1x16xf32, #tpu.memory_space<vmem>>, %arg24: memref<1x1xf32, #tpu.memory_space<vmem>>, %arg25: memref<16x12xf32, #tpu.memory_space<vmem>>, %arg26: memref<1x12xf32, #tpu.memory_space<vmem>>, %arg27: memref<12x8xf32, #tpu.memory_space<vmem>>, %arg28: memref<1x8xf32, #tpu.memory_space<vmem>>, %arg29: memref<1x1x8xf32, #tpu.memory_space<vmem>>, %arg30: memref<16x32xf32, #tpu.memory_space<vmem>>, %arg31: memref<16x32xf32, #tpu.memory_space<vmem>>) attributes {dimension_semantics = [#tpu.dimension_semantics<parallel>, #tpu.dimension_semantics<arbitrary>], iteration_bounds = array<i64: 2, 2>, scalar_prefetch = 0 : i64, scratch_operands = 2 : i64, tpu.core_type = #tpu.core_type<tc>, window_params = [{transform_indices = @transform_0, window_bounds = array<i64: 16, 1>}, {transform_indices = @transform_1, window_bounds = array<i64: 1, 1, 32>}, {pipeline_mode = #tpu.pipeline_mode<synchronous>, transform_indices = @transform_2, window_bounds = array<i64: 16, 16>}, {pipeline_mode = #tpu.pipeline_mode<synchronous>, transform_indices = @transform_3, window_bounds = array<i64: 1, 16>}, {pipeline_mode = #tpu.pipeline_mode<synchronous>, transform_indices = @transform_4, window_bounds = array<i64: 1, 16>}, {pipeline_mode = #tpu.pipeline_mode<synchronous>, transform_indices = @transform_5, window_bounds = array<i64: 16, 32>}, {pipeline_mode = #tpu.pipeline_mode<synchronous>, transform_indices = @transform_6, window_bounds = array<i64: 1, 32>}, {transform_indices = @transform_7, window_bounds = array<i64: 1, 32, 96>}, {transform_indices = @transform_8, window_bounds = array<i64: 1, 1, 96>}, {transform_indices = @transform_9, window_bounds = array<i64: 1, 32, 32>}, {transform_indices = @transform_10, window_bounds = array<i64: 1, 1, 32>}, {transform_indices = @transform_11, window_bounds = array<i64: 1, 32, 2048>}, {transform_indices = @transform_12, window_bounds = array<i64: 1, 1, 2048>}, {transform_indices = @transform_13, window_bounds = array<i64: 1, 2048, 32>}, {transform_indices = @transform_14, window_bounds = array<i64: 1, 1, 32>}, {transform_indices = @transform_15, window_bounds = array<i64: 1, 1, 32>}, {transform_indices = @transform_16, window_bounds = array<i64: 1, 1, 32>}, {transform_indices = @transform_17, window_bounds = array<i64: 1, 1, 32>}, {transform_indices = @transform_18, window_bounds = array<i64: 1, 1, 32>}, {pipeline_mode = #tpu.pipeline_mode<synchronous>, transform_indices = @transform_19, window_bounds = array<i64: 32, 16>}, {pipeline_mode = #tpu.pipeline_mode<synchronous>, transform_indices = @transform_20, window_bounds = array<i64: 1, 16>}, {pipeline_mode = #tpu.pipeline_mode<synchronous>, transform_indices = @transform_21, window_bounds = array<i64: 1, 16>}, {pipeline_mode = #tpu.pipeline_mode<synchronous>, transform_indices = @transform_22, window_bounds = array<i64: 1, 1>}, {pipeline_mode = #tpu.pipeline_mode<synchronous>, transform_indices = @transform_23, window_bounds = array<i64: 16, 12>}, {pipeline_mode = #tpu.pipeline_mode<synchronous>, transform_indices = @transform_24, window_bounds = array<i64: 1, 12>}, {pipeline_mode = #tpu.pipeline_mode<synchronous>, transform_indices = @transform_25, window_bounds = array<i64: 12, 8>}, {pipeline_mode = #tpu.pipeline_mode<synchronous>, transform_indices = @transform_26, window_bounds = array<i64: 1, 8>}, {transform_indices = @transform_27, window_bounds = array<i64: 1, 1, 8>}]} {
    %c0_i32 = arith.constant 0 : i32
    %0 = arith.cmpi eq, %arg1, %c0_i32 : i32
    %1 = arith.extui %0 : i1 to i32
    %c0_i32_0 = arith.constant 0 : i32
    %2 = arith.cmpi ne, %1, %c0_i32_0 : i32
    scf.if %2 {
      %c0_84 = arith.constant 0 : index
      %c0_85 = arith.constant 0 : index
      %174 = vector.load %arg2[%c0_84, %c0_85] : memref<16x1xf32, #tpu.memory_space<vmem>>, vector<16x1xf32>
      %c0_86 = arith.constant 0 : index
      %c0_87 = arith.constant 0 : index
      %175 = vector.load %arg5[%c0_86, %c0_87] : memref<1x16xf32, #tpu.memory_space<vmem>>, vector<1x16xf32>
      %176 = vector.broadcast %174 : vector<16x1xf32> to vector<16x16xf32>
      %177 = vector.broadcast %175 : vector<1x16xf32> to vector<16x16xf32>
      %178 = arith.mulf %176, %177 : vector<16x16xf32>
      %c0_88 = arith.constant 0 : index
      %c0_89 = arith.constant 0 : index
      %179 = vector.load %arg6[%c0_88, %c0_89] : memref<1x16xf32, #tpu.memory_space<vmem>>, vector<1x16xf32>
      %180 = vector.broadcast %179 : vector<1x16xf32> to vector<16x16xf32>
      %181 = arith.addf %178, %180 : vector<16x16xf32>
      %cst_90 = arith.constant 0.000000e+00 : f32
      %182 = vector.broadcast %cst_90 : f32 to vector<16x16xf32>
      %183 = arith.maximumf %181, %182 : vector<16x16xf32>
      %c0_91 = arith.constant 0 : index
      %c0_92 = arith.constant 0 : index
      %184 = vector.load %arg7[%c0_91, %c0_92] : memref<16x32xf32, #tpu.memory_space<vmem>>, vector<16x32xf32>
      %cst_93 = arith.constant dense<0.000000e+00> : vector<16x32xf32>
      %185 = tpu.matmul %183, %184, %cst_93 {dimension_numbers = #tpu.dot_dimension_numbers<[1], [0], [0], [1], [0, 0, 1, 1], [], []>} : vector<16x16xf32>, vector<16x32xf32>, vector<16x32xf32> -> vector<16x32xf32>
      %c0_94 = arith.constant 0 : index
      %c0_95 = arith.constant 0 : index
      %186 = vector.load %arg8[%c0_94, %c0_95] : memref<1x32xf32, #tpu.memory_space<vmem>>, vector<1x32xf32>
      %187 = vector.broadcast %186 : vector<1x32xf32> to vector<16x32xf32>
      %188 = arith.addf %185, %187 : vector<16x32xf32>
      %c0_96 = arith.constant 0 : index
      %c0_97 = arith.constant 0 : index
      %c0_98 = arith.constant 0 : index
      %189 = vector.load %arg3[%c0_96, %c0_97, %c0_98] : memref<1x1x32xf32, #tpu.memory_space<vmem>>, vector<1x1x32xf32>
      %190 = vector.shape_cast %189 : vector<1x1x32xf32> to vector<1x32xf32>
      %191 = vector.broadcast %190 : vector<1x32xf32> to vector<16x32xf32>
      %192 = arith.addf %188, %191 : vector<16x32xf32>
      %c0_99 = arith.constant 0 : index
      %c0_100 = arith.constant 0 : index
      %193 = vector.load %arg31[%c0_99, %c0_100] : memref<16x32xf32, #tpu.memory_space<vmem>>, vector<16x32xf32>
      tpu.vector_store %arg31[%c0_99, %c0_100], %192 {strides = array<i32>} : memref<16x32xf32, #tpu.memory_space<vmem>>, vector<16x32xf32>,
    } else {
    }
    %c0 = arith.constant 0 : index
    %c0_1 = arith.constant 0 : index
    %3 = vector.load %arg31[%c0, %c0_1] : memref<16x32xf32, #tpu.memory_space<vmem>>, vector<16x32xf32>
    %c0_2 = arith.constant 0 : index
    %c0_3 = arith.constant 0 : index
    %4 = vector.load %arg4[%c0_2, %c0_3] : memref<16x16xf32, #tpu.memory_space<vmem>>, vector<16x16xf32>
    %c0_4 = arith.constant 0 : index
    %c0_5 = arith.constant 0 : index
    %c0_6 = arith.constant 0 : index
    %5 = vector.load %arg9[%c0_4, %c0_5, %c0_6] : memref<1x32x96xf32, #tpu.memory_space<vmem>>, vector<1x32x96xf32>
    %6 = vector.shape_cast %5 : vector<1x32x96xf32> to vector<32x96xf32>
    %cst = arith.constant dense<0.000000e+00> : vector<16x96xf32>
    %7 = tpu.matmul %3, %6, %cst {dimension_numbers = #tpu.dot_dimension_numbers<[1], [0], [0], [1], [0, 0, 1, 1], [], []>} : vector<16x32xf32>, vector<32x96xf32>, vector<16x96xf32> -> vector<16x96xf32>
    %c0_7 = arith.constant 0 : index
    %c0_8 = arith.constant 0 : index
    %c0_9 = arith.constant 0 : index
    %8 = vector.load %arg10[%c0_7, %c0_8, %c0_9] : memref<1x1x96xf32, #tpu.memory_space<vmem>>, vector<1x1x96xf32>
    %9 = vector.shape_cast %8 : vector<1x1x96xf32> to vector<1x96xf32>
    %10 = vector.broadcast %9 : vector<1x96xf32> to vector<16x96xf32>
    %11 = arith.addf %7, %10 : vector<16x96xf32>
    %12 = vector.extract_strided_slice %11 {offsets = [0, 0], sizes = [16, 8], strides = [1, 1]} : vector<16x96xf32> to vector<16x8xf32>
    %13 = vector.extract_strided_slice %11 {offsets = [0, 32], sizes = [16, 8], strides = [1, 1]} : vector<16x96xf32> to vector<16x8xf32>
    %14 = vector.extract_strided_slice %11 {offsets = [0, 64], sizes = [16, 8], strides = [1, 1]} : vector<16x96xf32> to vector<16x8xf32>
    %cst_10 = arith.constant dense<0.000000e+00> : vector<16x16xf32>
    %15 = tpu.matmul %12, %13, %cst_10 {dimension_numbers = #tpu.dot_dimension_numbers<[1], [1], [0], [0], [0, 0, 1, 0], [], []>} : vector<16x8xf32>, vector<16x8xf32>, vector<16x16xf32> -> vector<16x16xf32>
    %cst_11 = arith.constant 0.353553385 : f32
    %16 = vector.broadcast %cst_11 : f32 to vector<16x16xf32>
    %17 = arith.mulf %15, %16 : vector<16x16xf32>
    %18 = arith.addf %17, %4 : vector<16x16xf32>
    %cst_12 = arith.constant dense<0xFF800000> : vector<16xf32>
    %19 = vector.multi_reduction <maximumf>, %18, %cst_12 [1] : vector<16x16xf32> to vector<16xf32>
    %20 = vector.shape_cast %19 : vector<16xf32> to vector<16x1xf32>
    %21 = vector.broadcast %20 : vector<16x1xf32> to vector<16x16xf32>
    %22 = arith.subf %18, %21 : vector<16x16xf32>
    %23 = math.exp %22 : vector<16x16xf32>
    %cst_13 = arith.constant dense<0.000000e+00> : vector<16xf32>
    %24 = vector.multi_reduction <add>, %23, %cst_13 [1] : vector<16x16xf32> to vector<16xf32>
    %25 = vector.shape_cast %24 : vector<16xf32> to vector<16x1xf32>
    %26 = tpu.reciprocal %25 {approx = true} : vector<16x1xf32> -> vector<16x1xf32>
    %27 = vector.broadcast %26 : vector<16x1xf32> to vector<16x16xf32>
    %28 = arith.mulf %23, %27 : vector<16x16xf32>
    %cst_14 = arith.constant dense<0.000000e+00> : vector<16x8xf32>
    %29 = tpu.matmul %28, %14, %cst_14 {dimension_numbers = #tpu.dot_dimension_numbers<[1], [0], [0], [1], [0, 0, 1, 1], [], []>} : vector<16x16xf32>, vector<16x8xf32>, vector<16x8xf32> -> vector<16x8xf32>
    %c0_15 = arith.constant 0 : index
    %c0_16 = arith.constant 0 : index
    %30 = vector.load %arg30[%c0_15, %c0_16] : memref<16x32xf32, #tpu.memory_space<vmem>>, vector<16x8xf32>
    tpu.vector_store %arg30[%c0_15, %c0_16], %29 {strides = array<i32>} : memref<16x32xf32, #tpu.memory_space<vmem>>, vector<16x8xf32>,
    %31 = vector.extract_strided_slice %11 {offsets = [0, 8], sizes = [16, 8], strides = [1, 1]} : vector<16x96xf32> to vector<16x8xf32>
    %32 = vector.extract_strided_slice %11 {offsets = [0, 40], sizes = [16, 8], strides = [1, 1]} : vector<16x96xf32> to vector<16x8xf32>
    %33 = vector.extract_strided_slice %11 {offsets = [0, 72], sizes = [16, 8], strides = [1, 1]} : vector<16x96xf32> to vector<16x8xf32>
    %cst_17 = arith.constant dense<0.000000e+00> : vector<16x16xf32>
    %34 = tpu.matmul %31, %32, %cst_17 {dimension_numbers = #tpu.dot_dimension_numbers<[1], [1], [0], [0], [0, 0, 1, 0], [], []>} : vector<16x8xf32>, vector<16x8xf32>, vector<16x16xf32> -> vector<16x16xf32>
    %cst_18 = arith.constant 0.353553385 : f32
    %35 = vector.broadcast %cst_18 : f32 to vector<16x16xf32>
    %36 = arith.mulf %34, %35 : vector<16x16xf32>
    %37 = arith.addf %36, %4 : vector<16x16xf32>
    %cst_19 = arith.constant dense<0xFF800000> : vector<16xf32>
    %38 = vector.multi_reduction <maximumf>, %37, %cst_19 [1] : vector<16x16xf32> to vector<16xf32>
    %39 = vector.shape_cast %38 : vector<16xf32> to vector<16x1xf32>
    %40 = vector.broadcast %39 : vector<16x1xf32> to vector<16x16xf32>
    %41 = arith.subf %37, %40 : vector<16x16xf32>
    %42 = math.exp %41 : vector<16x16xf32>
    %cst_20 = arith.constant dense<0.000000e+00> : vector<16xf32>
    %43 = vector.multi_reduction <add>, %42, %cst_20 [1] : vector<16x16xf32> to vector<16xf32>
    %44 = vector.shape_cast %43 : vector<16xf32> to vector<16x1xf32>
    %45 = tpu.reciprocal %44 {approx = true} : vector<16x1xf32> -> vector<16x1xf32>
    %46 = vector.broadcast %45 : vector<16x1xf32> to vector<16x16xf32>
    %47 = arith.mulf %42, %46 : vector<16x16xf32>
    %cst_21 = arith.constant dense<0.000000e+00> : vector<16x8xf32>
    %48 = tpu.matmul %47, %33, %cst_21 {dimension_numbers = #tpu.dot_dimension_numbers<[1], [0], [0], [1], [0, 0, 1, 1], [], []>} : vector<16x16xf32>, vector<16x8xf32>, vector<16x8xf32> -> vector<16x8xf32>
    %c0_22 = arith.constant 0 : index
    %c8 = arith.constant 8 : index
    %49 = vector.load %arg30[%c0_22, %c8] : memref<16x32xf32, #tpu.memory_space<vmem>>, vector<16x8xf32>
    tpu.vector_store %arg30[%c0_22, %c8], %48 {strides = array<i32>} : memref<16x32xf32, #tpu.memory_space<vmem>>, vector<16x8xf32>,
    %50 = vector.extract_strided_slice %11 {offsets = [0, 16], sizes = [16, 8], strides = [1, 1]} : vector<16x96xf32> to vector<16x8xf32>
    %51 = vector.extract_strided_slice %11 {offsets = [0, 48], sizes = [16, 8], strides = [1, 1]} : vector<16x96xf32> to vector<16x8xf32>
    %52 = vector.extract_strided_slice %11 {offsets = [0, 80], sizes = [16, 8], strides = [1, 1]} : vector<16x96xf32> to vector<16x8xf32>
    %cst_23 = arith.constant dense<0.000000e+00> : vector<16x16xf32>
    %53 = tpu.matmul %50, %51, %cst_23 {dimension_numbers = #tpu.dot_dimension_numbers<[1], [1], [0], [0], [0, 0, 1, 0], [], []>} : vector<16x8xf32>, vector<16x8xf32>, vector<16x16xf32> -> vector<16x16xf32>
    %cst_24 = arith.constant 0.353553385 : f32
    %54 = vector.broadcast %cst_24 : f32 to vector<16x16xf32>
    %55 = arith.mulf %53, %54 : vector<16x16xf32>
    %56 = arith.addf %55, %4 : vector<16x16xf32>
    %cst_25 = arith.constant dense<0xFF800000> : vector<16xf32>
    %57 = vector.multi_reduction <maximumf>, %56, %cst_25 [1] : vector<16x16xf32> to vector<16xf32>
    %58 = vector.shape_cast %57 : vector<16xf32> to vector<16x1xf32>
    %59 = vector.broadcast %58 : vector<16x1xf32> to vector<16x16xf32>
    %60 = arith.subf %56, %59 : vector<16x16xf32>
    %61 = math.exp %60 : vector<16x16xf32>
    %cst_26 = arith.constant dense<0.000000e+00> : vector<16xf32>
    %62 = vector.multi_reduction <add>, %61, %cst_26 [1] : vector<16x16xf32> to vector<16xf32>
    %63 = vector.shape_cast %62 : vector<16xf32> to vector<16x1xf32>
    %64 = tpu.reciprocal %63 {approx = true} : vector<16x1xf32> -> vector<16x1xf32>
    %65 = vector.broadcast %64 : vector<16x1xf32> to vector<16x16xf32>
    %66 = arith.mulf %61, %65 : vector<16x16xf32>
    %cst_27 = arith.constant dense<0.000000e+00> : vector<16x8xf32>
    %67 = tpu.matmul %66, %52, %cst_27 {dimension_numbers = #tpu.dot_dimension_numbers<[1], [0], [0], [1], [0, 0, 1, 1], [], []>} : vector<16x16xf32>, vector<16x8xf32>, vector<16x8xf32> -> vector<16x8xf32>
    %c0_28 = arith.constant 0 : index
    %c16 = arith.constant 16 : index
    %68 = vector.load %arg30[%c0_28, %c16] : memref<16x32xf32, #tpu.memory_space<vmem>>, vector<16x8xf32>
    tpu.vector_store %arg30[%c0_28, %c16], %67 {strides = array<i32>} : memref<16x32xf32, #tpu.memory_space<vmem>>, vector<16x8xf32>,
    %69 = vector.extract_strided_slice %11 {offsets = [0, 24], sizes = [16, 8], strides = [1, 1]} : vector<16x96xf32> to vector<16x8xf32>
    %70 = vector.extract_strided_slice %11 {offsets = [0, 56], sizes = [16, 8], strides = [1, 1]} : vector<16x96xf32> to vector<16x8xf32>
    %71 = vector.extract_strided_slice %11 {offsets = [0, 88], sizes = [16, 8], strides = [1, 1]} : vector<16x96xf32> to vector<16x8xf32>
    %cst_29 = arith.constant dense<0.000000e+00> : vector<16x16xf32>
    %72 = tpu.matmul %69, %70, %cst_29 {dimension_numbers = #tpu.dot_dimension_numbers<[1], [1], [0], [0], [0, 0, 1, 0], [], []>} : vector<16x8xf32>, vector<16x8xf32>, vector<16x16xf32> -> vector<16x16xf32>
    %cst_30 = arith.constant 0.353553385 : f32
    %73 = vector.broadcast %cst_30 : f32 to vector<16x16xf32>
    %74 = arith.mulf %72, %73 : vector<16x16xf32>
    %75 = arith.addf %74, %4 : vector<16x16xf32>
    %cst_31 = arith.constant dense<0xFF800000> : vector<16xf32>
    %76 = vector.multi_reduction <maximumf>, %75, %cst_31 [1] : vector<16x16xf32> to vector<16xf32>
    %77 = vector.shape_cast %76 : vector<16xf32> to vector<16x1xf32>
    %78 = vector.broadcast %77 : vector<16x1xf32> to vector<16x16xf32>
    %79 = arith.subf %75, %78 : vector<16x16xf32>
    %80 = math.exp %79 : vector<16x16xf32>
    %cst_32 = arith.constant dense<0.000000e+00> : vector<16xf32>
    %81 = vector.multi_reduction <add>, %80, %cst_32 [1] : vector<16x16xf32> to vector<16xf32>
    %82 = vector.shape_cast %81 : vector<16xf32> to vector<16x1xf32>
    %83 = tpu.reciprocal %82 {approx = true} : vector<16x1xf32> -> vector<16x1xf32>
    %84 = vector.broadcast %83 : vector<16x1xf32> to vector<16x16xf32>
    %85 = arith.mulf %80, %84 : vector<16x16xf32>
    %cst_33 = arith.constant dense<0.000000e+00> : vector<16x8xf32>
    %86 = tpu.matmul %85, %71, %cst_33 {dimension_numbers = #tpu.dot_dimension_numbers<[1], [0], [0], [1], [0, 0, 1, 1], [], []>} : vector<16x16xf32>, vector<16x8xf32>, vector<16x8xf32> -> vector<16x8xf32>
    %c0_34 = arith.constant 0 : index
    %c24 = arith.constant 24 : index
    %87 = vector.load %arg30[%c0_34, %c24] : memref<16x32xf32, #tpu.memory_space<vmem>>, vector<16x8xf32>
    tpu.vector_store %arg30[%c0_34, %c24], %86 {strides = array<i32>} : memref<16x32xf32, #tpu.memory_space<vmem>>, vector<16x8xf32>,
    %c0_35 = arith.constant 0 : index
    %c0_36 = arith.constant 0 : index
    %88 = vector.load %arg30[%c0_35, %c0_36] : memref<16x32xf32, #tpu.memory_space<vmem>>, vector<16x32xf32>
    %c0_37 = arith.constant 0 : index
    %c0_38 = arith.constant 0 : index
    %c0_39 = arith.constant 0 : index
    %89 = vector.load %arg11[%c0_37, %c0_38, %c0_39] : memref<1x32x32xf32, #tpu.memory_space<vmem>>, vector<1x32x32xf32>
    %90 = vector.shape_cast %89 : vector<1x32x32xf32> to vector<32x32xf32>
    %cst_40 = arith.constant dense<0.000000e+00> : vector<16x32xf32>
    %91 = tpu.matmul %88, %90, %cst_40 {dimension_numbers = #tpu.dot_dimension_numbers<[1], [0], [0], [1], [0, 0, 1, 1], [], []>} : vector<16x32xf32>, vector<32x32xf32>, vector<16x32xf32> -> vector<16x32xf32>
    %c0_41 = arith.constant 0 : index
    %c0_42 = arith.constant 0 : index
    %c0_43 = arith.constant 0 : index
    %92 = vector.load %arg12[%c0_41, %c0_42, %c0_43] : memref<1x1x32xf32, #tpu.memory_space<vmem>>, vector<1x1x32xf32>
    %93 = vector.shape_cast %92 : vector<1x1x32xf32> to vector<1x32xf32>
    %94 = vector.broadcast %93 : vector<1x32xf32> to vector<16x32xf32>
    %95 = arith.addf %91, %94 : vector<16x32xf32>
    %96 = arith.addf %3, %95 : vector<16x32xf32>
    %cst_44 = arith.constant dense<0.000000e+00> : vector<16xf32>
    %97 = vector.multi_reduction <add>, %96, %cst_44 [1] : vector<16x32xf32> to vector<16xf32>
    %98 = vector.shape_cast %97 : vector<16xf32> to vector<16x1xf32>
    %cst_45 = arith.constant 3.200000e+01 : f32
    %99 = vector.broadcast %cst_45 : f32 to vector<16x1xf32>
    %100 = arith.divf %98, %99 : vector<16x1xf32>
    %101 = vector.broadcast %100 : vector<16x1xf32> to vector<16x32xf32>
    %102 = arith.subf %96, %101 : vector<16x32xf32>
    %103 = vector.broadcast %100 : vector<16x1xf32> to vector<16x32xf32>
    %104 = arith.subf %96, %103 : vector<16x32xf32>
    %105 = arith.mulf %102, %104 : vector<16x32xf32>
    %cst_46 = arith.constant dense<0.000000e+00> : vector<16xf32>
    %106 = vector.multi_reduction <add>, %105, %cst_46 [1] : vector<16x32xf32> to vector<16xf32>
    %107 = vector.shape_cast %106 : vector<16xf32> to vector<16x1xf32>
    %cst_47 = arith.constant 3.200000e+01 : f32
    %108 = vector.broadcast %cst_47 : f32 to vector<16x1xf32>
    %109 = arith.divf %107, %108 : vector<16x1xf32>
    %110 = vector.broadcast %100 : vector<16x1xf32> to vector<16x32xf32>
    %111 = arith.subf %96, %110 : vector<16x32xf32>
    %cst_48 = arith.constant 9.99999974E-6 : f32
    %112 = vector.broadcast %cst_48 : f32 to vector<16x1xf32>
    %113 = arith.addf %109, %112 : vector<16x1xf32>
    %114 = math.rsqrt %113 : vector<16x1xf32>
    %115 = vector.broadcast %114 : vector<16x1xf32> to vector<16x32xf32>
    %116 = arith.mulf %111, %115 : vector<16x32xf32>
    %c0_49 = arith.constant 0 : index
    %c0_50 = arith.constant 0 : index
    %c0_51 = arith.constant 0 : index
    %117 = vector.load %arg17[%c0_49, %c0_50, %c0_51] : memref<1x1x32xf32, #tpu.memory_space<vmem>>, vector<1x1x32xf32>
    %118 = vector.shape_cast %117 : vector<1x1x32xf32> to vector<1x32xf32>
    %119 = vector.broadcast %118 : vector<1x32xf32> to vector<16x32xf32>
    %120 = arith.mulf %116, %119 : vector<16x32xf32>
    %c0_52 = arith.constant 0 : index
    %c0_53 = arith.constant 0 : index
    %c0_54 = arith.constant 0 : index
    %121 = vector.load %arg18[%c0_52, %c0_53, %c0_54] : memref<1x1x32xf32, #tpu.memory_space<vmem>>, vector<1x1x32xf32>
    %122 = vector.shape_cast %121 : vector<1x1x32xf32> to vector<1x32xf32>
    %123 = vector.broadcast %122 : vector<1x32xf32> to vector<16x32xf32>
    %124 = arith.addf %120, %123 : vector<16x32xf32>
    %c0_55 = arith.constant 0 : index
    %c0_56 = arith.constant 0 : index
    %c0_57 = arith.constant 0 : index
    %125 = vector.load %arg13[%c0_55, %c0_56, %c0_57] : memref<1x32x2048xf32, #tpu.memory_space<vmem>>, vector<1x32x2048xf32>
    %126 = vector.shape_cast %125 : vector<1x32x2048xf32> to vector<32x2048xf32>
    %cst_58 = arith.constant dense<0.000000e+00> : vector<16x2048xf32>
    %127 = tpu.matmul %124, %126, %cst_58 {dimension_numbers = #tpu.dot_dimension_numbers<[1], [0], [0], [1], [0, 0, 1, 1], [], []>} : vector<16x32xf32>, vector<32x2048xf32>, vector<16x2048xf32> -> vector<16x2048xf32>
    %c0_59 = arith.constant 0 : index
    %c0_60 = arith.constant 0 : index
    %c0_61 = arith.constant 0 : index
    %128 = vector.load %arg14[%c0_59, %c0_60, %c0_61] : memref<1x1x2048xf32, #tpu.memory_space<vmem>>, vector<1x1x2048xf32>
    %129 = vector.shape_cast %128 : vector<1x1x2048xf32> to vector<1x2048xf32>
    %130 = vector.broadcast %129 : vector<1x2048xf32> to vector<16x2048xf32>
    %131 = arith.addf %127, %130 : vector<16x2048xf32>
    %cst_62 = arith.constant 0.000000e+00 : f32
    %132 = vector.broadcast %cst_62 : f32 to vector<16x2048xf32>
    %133 = arith.maximumf %131, %132 : vector<16x2048xf32>
    %c0_63 = arith.constant 0 : index
    %c0_64 = arith.constant 0 : index
    %c0_65 = arith.constant 0 : index
    %134 = vector.load %arg15[%c0_63, %c0_64, %c0_65] : memref<1x2048x32xf32, #tpu.memory_space<vmem>>, vector<1x2048x32xf32>
    %135 = vector.shape_cast %134 : vector<1x2048x32xf32> to vector<2048x32xf32>
    %cst_66 = arith.constant dense<0.000000e+00> : vector<16x32xf32>
    %136 = tpu.matmul %133, %135, %cst_66 {dimension_numbers = #tpu.dot_dimension_numbers<[1], [0], [0], [1], [0, 0, 1, 1], [], []>} : vector<16x2048xf32>, vector<2048x32xf32>, vector<16x32xf32> -> vector<16x32xf32>
    %c0_67 = arith.constant 0 : index
    %c0_68 = arith.constant 0 : index
    %c0_69 = arith.constant 0 : index
    %137 = vector.load %arg16[%c0_67, %c0_68, %c0_69] : memref<1x1x32xf32, #tpu.memory_space<vmem>>, vector<1x1x32xf32>
    %138 = vector.shape_cast %137 : vector<1x1x32xf32> to vector<1x32xf32>
    %139 = vector.broadcast %138 : vector<1x32xf32> to vector<16x32xf32>
    %140 = arith.addf %136, %139 : vector<16x32xf32>
    %141 = arith.addf %124, %140 : vector<16x32xf32>
    %cst_70 = arith.constant dense<0.000000e+00> : vector<16xf32>
    %142 = vector.multi_reduction <add>, %141, %cst_70 [1] : vector<16x32xf32> to vector<16xf32>
    %143 = vector.shape_cast %142 : vector<16xf32> to vector<16x1xf32>
    %cst_71 = arith.constant 3.200000e+01 : f32
    %144 = vector.broadcast %cst_71 : f32 to vector<16x1xf32>
    %145 = arith.divf %143, %144 : vector<16x1xf32>
    %146 = vector.broadcast %145 : vector<16x1xf32> to vector<16x32xf32>
    %147 = arith.subf %141, %146 : vector<16x32xf32>
    %148 = vector.broadcast %145 : vector<16x1xf32> to vector<16x32xf32>
    %149 = arith.subf %141, %148 : vector<16x32xf32>
    %150 = arith.mulf %147, %149 : vector<16x32xf32>
    %cst_72 = arith.constant dense<0.000000e+00> : vector<16xf32>
    %151 = vector.multi_reduction <add>, %150, %cst_72 [1] : vector<16x32xf32> to vector<16xf32>
    %152 = vector.shape_cast %151 : vector<16xf32> to vector<16x1xf32>
    %cst_73 = arith.constant 3.200000e+01 : f32
    %153 = vector.broadcast %cst_73 : f32 to vector<16x1xf32>
    %154 = arith.divf %152, %153 : vector<16x1xf32>
    %155 = vector.broadcast %145 : vector<16x1xf32> to vector<16x32xf32>
    %156 = arith.subf %141, %155 : vector<16x32xf32>
    %cst_74 = arith.constant 9.99999974E-6 : f32
    %157 = vector.broadcast %cst_74 : f32 to vector<16x1xf32>
    %158 = arith.addf %154, %157 : vector<16x1xf32>
    %159 = math.rsqrt %158 : vector<16x1xf32>
    %160 = vector.broadcast %159 : vector<16x1xf32> to vector<16x32xf32>
    %161 = arith.mulf %156, %160 : vector<16x32xf32>
    %c0_75 = arith.constant 0 : index
    %c0_76 = arith.constant 0 : index
    %c0_77 = arith.constant 0 : index
    %162 = vector.load %arg19[%c0_75, %c0_76, %c0_77] : memref<1x1x32xf32, #tpu.memory_space<vmem>>, vector<1x1x32xf32>
    %163 = vector.shape_cast %162 : vector<1x1x32xf32> to vector<1x32xf32>
    %164 = vector.broadcast %163 : vector<1x32xf32> to vector<16x32xf32>
    %165 = arith.mulf %161, %164 : vector<16x32xf32>
    %c0_78 = arith.constant 0 : index
    %c0_79 = arith.constant 0 : index
    %c0_80 = arith.constant 0 : index
    %166 = vector.load %arg20[%c0_78, %c0_79, %c0_80] : memref<1x1x32xf32, #tpu.memory_space<vmem>>, vector<1x1x32xf32>
    %167 = vector.shape_cast %166 : vector<1x1x32xf32> to vector<1x32xf32>
    %168 = vector.broadcast %167 : vector<1x32xf32> to vector<16x32xf32>
    %169 = arith.addf %165, %168 : vector<16x32xf32>
    %c0_81 = arith.constant 0 : index
    %c0_82 = arith.constant 0 : index
    %170 = vector.load %arg31[%c0_81, %c0_82] : memref<16x32xf32, #tpu.memory_space<vmem>>, vector<16x32xf32>
    tpu.vector_store %arg31[%c0_81, %c0_82], %169 {strides = array<i32>} : memref<16x32xf32, #tpu.memory_space<vmem>>, vector<16x32xf32>,
    %c1_i32 = arith.constant 1 : i32
    %171 = arith.cmpi eq, %arg1, %c1_i32 : i32
    %172 = arith.extui %171 : i1 to i32
    %c0_i32_83 = arith.constant 0 : i32
    %173 = arith.cmpi ne, %172, %c0_i32_83 : i32
    scf.if %173 {
      %c0_84 = arith.constant 0 : index
      %c0_85 = arith.constant 0 : index
      %174 = vector.load %arg21[%c0_84, %c0_85] : memref<32x16xf32, #tpu.memory_space<vmem>>, vector<32x16xf32>
      %cst_86 = arith.constant dense<0.000000e+00> : vector<16x16xf32>
      %175 = tpu.matmul %169, %174, %cst_86 {dimension_numbers = #tpu.dot_dimension_numbers<[1], [0], [0], [1], [0, 0, 1, 1], [], []>} : vector<16x32xf32>, vector<32x16xf32>, vector<16x16xf32> -> vector<16x16xf32>
      %c0_87 = arith.constant 0 : index
      %c0_88 = arith.constant 0 : index
      %176 = vector.load %arg22[%c0_87, %c0_88] : memref<1x16xf32, #tpu.memory_space<vmem>>, vector<1x16xf32>
      %177 = vector.broadcast %176 : vector<1x16xf32> to vector<16x16xf32>
      %178 = arith.addf %175, %177 : vector<16x16xf32>
      %cst_89 = arith.constant 0.000000e+00 : f32
      %179 = vector.broadcast %cst_89 : f32 to vector<16x16xf32>
      %180 = arith.maximumf %178, %179 : vector<16x16xf32>
      %c0_90 = arith.constant 0 : index
      %c0_91 = arith.constant 0 : index
      %181 = vector.load %arg23[%c0_90, %c0_91] : memref<1x16xf32, #tpu.memory_space<vmem>>, vector<1x16xf32>
      %cst_92 = arith.constant dense<0.000000e+00> : vector<1x16xf32>
      %182 = tpu.matmul %181, %180, %cst_92 {dimension_numbers = #tpu.dot_dimension_numbers<[1], [1], [0], [0], [0, 0, 1, 0], [], []>} : vector<1x16xf32>, vector<16x16xf32>, vector<1x16xf32> -> vector<1x16xf32>
      %c0_93 = arith.constant 0 : index
      %c0_94 = arith.constant 0 : index
      %183 = vector.load %arg24[%c0_93, %c0_94] : memref<1x1xf32, #tpu.memory_space<vmem>>, vector<1x1xf32>
      %184 = vector.broadcast %183 : vector<1x1xf32> to vector<1x16xf32>
      %185 = arith.addf %182, %184 : vector<1x16xf32>
      %c0_95 = arith.constant 0 : index
      %c0_96 = arith.constant 0 : index
      %186 = vector.load %arg25[%c0_95, %c0_96] : memref<16x12xf32, #tpu.memory_space<vmem>>, vector<16x12xf32>
      %cst_97 = arith.constant dense<0.000000e+00> : vector<1x12xf32>
      %187 = tpu.matmul %185, %186, %cst_97 {dimension_numbers = #tpu.dot_dimension_numbers<[1], [0], [0], [1], [0, 0, 1, 1], [], []>} : vector<1x16xf32>, vector<16x12xf32>, vector<1x12xf32> -> vector<1x12xf32>
      %c0_98 = arith.constant 0 : index
      %c0_99 = arith.constant 0 : index
      %188 = vector.load %arg26[%c0_98, %c0_99] : memref<1x12xf32, #tpu.memory_space<vmem>>, vector<1x12xf32>
      %189 = arith.addf %187, %188 : vector<1x12xf32>
      %cst_100 = arith.constant 0.000000e+00 : f32
      %190 = vector.broadcast %cst_100 : f32 to vector<1x12xf32>
      %191 = arith.maximumf %189, %190 : vector<1x12xf32>
      %c0_101 = arith.constant 0 : index
      %c0_102 = arith.constant 0 : index
      %192 = vector.load %arg27[%c0_101, %c0_102] : memref<12x8xf32, #tpu.memory_space<vmem>>, vector<12x8xf32>
      %cst_103 = arith.constant dense<0.000000e+00> : vector<1x8xf32>
      %193 = tpu.matmul %191, %192, %cst_103 {dimension_numbers = #tpu.dot_dimension_numbers<[1], [0], [0], [1], [0, 0, 1, 1], [], []>} : vector<1x12xf32>, vector<12x8xf32>, vector<1x8xf32> -> vector<1x8xf32>
      %c0_104 = arith.constant 0 : index
      %c0_105 = arith.constant 0 : index
      %194 = vector.load %arg28[%c0_104, %c0_105] : memref<1x8xf32, #tpu.memory_space<vmem>>, vector<1x8xf32>
      %195 = arith.addf %193, %194 : vector<1x8xf32>
      %c0_106 = arith.constant 0 : index
      %c0_107 = arith.constant 0 : index
      %c0_108 = arith.constant 0 : index
      %196 = vector.load %arg29[%c0_106, %c0_107, %c0_108] : memref<1x1x8xf32, #tpu.memory_space<vmem>>, vector<1x1x8xf32>
      %197 = vector.shape_cast %196 : vector<1x1x8xf32> to vector<1x8xf32>
      %198 = vector.shape_cast %195 : vector<1x8xf32> to vector<1x1x8xf32>
      tpu.vector_store %arg29[%c0_106, %c0_107, %c0_108], %198 {strides = array<i32>} : memref<1x1x8xf32, #tpu.memory_space<vmem>>, vector<1x1x8xf32>,
    } else {
    }
    return
  }
  func.func @transform_0(%arg0: i32, %arg1: i32) -> (i32, i32) {
    %c0_i32 = arith.constant 0 : i32
    %c0_i32_0 = arith.constant 0 : i32
    return %arg0, %c0_i32 : i32, i32
  }
  func.func @transform_1(%arg0: i32, %arg1: i32) -> (i32, i32, i32) {
    %c0_i32 = arith.constant 0 : i32
    %c0_i32_0 = arith.constant 0 : i32
    %c0_i32_1 = arith.constant 0 : i32
    return %arg0, %c0_i32, %c0_i32_0 : i32, i32, i32
  }
  func.func @transform_2(%arg0: i32, %arg1: i32) -> (i32, i32) {
    %c0_i32 = arith.constant 0 : i32
    %c0_i32_0 = arith.constant 0 : i32
    %c0_i32_1 = arith.constant 0 : i32
    return %c0_i32, %c0_i32_0 : i32, i32
  }
  func.func @transform_3(%arg0: i32, %arg1: i32) -> (i32, i32) {
    %c0_i32 = arith.constant 0 : i32
    %c0_i32_0 = arith.constant 0 : i32
    %c0_i32_1 = arith.constant 0 : i32
    return %c0_i32, %c0_i32_0 : i32, i32
  }
  func.func @transform_4(%arg0: i32, %arg1: i32) -> (i32, i32) {
    %c0_i32 = arith.constant 0 : i32
    %c0_i32_0 = arith.constant 0 : i32
    %c0_i32_1 = arith.constant 0 : i32
    return %c0_i32, %c0_i32_0 : i32, i32
  }
  func.func @transform_5(%arg0: i32, %arg1: i32) -> (i32, i32) {
    %c0_i32 = arith.constant 0 : i32
    %c0_i32_0 = arith.constant 0 : i32
    %c0_i32_1 = arith.constant 0 : i32
    return %c0_i32, %c0_i32_0 : i32, i32
  }
  func.func @transform_6(%arg0: i32, %arg1: i32) -> (i32, i32) {
    %c0_i32 = arith.constant 0 : i32
    %c0_i32_0 = arith.constant 0 : i32
    %c0_i32_1 = arith.constant 0 : i32
    return %c0_i32, %c0_i32_0 : i32, i32
  }
  func.func @transform_7(%arg0: i32, %arg1: i32) -> (i32, i32, i32) {
    %c0_i32 = arith.constant 0 : i32
    %c0_i32_0 = arith.constant 0 : i32
    %c0_i32_1 = arith.constant 0 : i32
    return %arg1, %c0_i32, %c0_i32_0 : i32, i32, i32
  }
  func.func @transform_8(%arg0: i32, %arg1: i32) -> (i32, i32, i32) {
    %c0_i32 = arith.constant 0 : i32
    %c0_i32_0 = arith.constant 0 : i32
    %c0_i32_1 = arith.constant 0 : i32
    return %arg1, %c0_i32, %c0_i32_0 : i32, i32, i32
  }
  func.func @transform_9(%arg0: i32, %arg1: i32) -> (i32, i32, i32) {
    %c0_i32 = arith.constant 0 : i32
    %c0_i32_0 = arith.constant 0 : i32
    %c0_i32_1 = arith.constant 0 : i32
    return %arg1, %c0_i32, %c0_i32_0 : i32, i32, i32
  }
  func.func @transform_10(%arg0: i32, %arg1: i32) -> (i32, i32, i32) {
    %c0_i32 = arith.constant 0 : i32
    %c0_i32_0 = arith.constant 0 : i32
    %c0_i32_1 = arith.constant 0 : i32
    return %arg1, %c0_i32, %c0_i32_0 : i32, i32, i32
  }
  func.func @transform_11(%arg0: i32, %arg1: i32) -> (i32, i32, i32) {
    %c0_i32 = arith.constant 0 : i32
    %c0_i32_0 = arith.constant 0 : i32
    %c0_i32_1 = arith.constant 0 : i32
    return %arg1, %c0_i32, %c0_i32_0 : i32, i32, i32
  }
  func.func @transform_12(%arg0: i32, %arg1: i32) -> (i32, i32, i32) {
    %c0_i32 = arith.constant 0 : i32
    %c0_i32_0 = arith.constant 0 : i32
    %c0_i32_1 = arith.constant 0 : i32
    return %arg1, %c0_i32, %c0_i32_0 : i32, i32, i32
  }
  func.func @transform_13(%arg0: i32, %arg1: i32) -> (i32, i32, i32) {
    %c0_i32 = arith.constant 0 : i32
    %c0_i32_0 = arith.constant 0 : i32
    %c0_i32_1 = arith.constant 0 : i32
    return %arg1, %c0_i32, %c0_i32_0 : i32, i32, i32
  }
  func.func @transform_14(%arg0: i32, %arg1: i32) -> (i32, i32, i32) {
    %c0_i32 = arith.constant 0 : i32
    %c0_i32_0 = arith.constant 0 : i32
    %c0_i32_1 = arith.constant 0 : i32
    return %arg1, %c0_i32, %c0_i32_0 : i32, i32, i32
  }
  func.func @transform_15(%arg0: i32, %arg1: i32) -> (i32, i32, i32) {
    %c0_i32 = arith.constant 0 : i32
    %c0_i32_0 = arith.constant 0 : i32
    %c0_i32_1 = arith.constant 0 : i32
    return %arg1, %c0_i32, %c0_i32_0 : i32, i32, i32
  }
  func.func @transform_16(%arg0: i32, %arg1: i32) -> (i32, i32, i32) {
    %c0_i32 = arith.constant 0 : i32
    %c0_i32_0 = arith.constant 0 : i32
    %c0_i32_1 = arith.constant 0 : i32
    return %arg1, %c0_i32, %c0_i32_0 : i32, i32, i32
  }
  func.func @transform_17(%arg0: i32, %arg1: i32) -> (i32, i32, i32) {
    %c0_i32 = arith.constant 0 : i32
    %c0_i32_0 = arith.constant 0 : i32
    %c0_i32_1 = arith.constant 0 : i32
    return %arg1, %c0_i32, %c0_i32_0 : i32, i32, i32
  }
  func.func @transform_18(%arg0: i32, %arg1: i32) -> (i32, i32, i32) {
    %c0_i32 = arith.constant 0 : i32
    %c0_i32_0 = arith.constant 0 : i32
    %c0_i32_1 = arith.constant 0 : i32
    return %arg1, %c0_i32, %c0_i32_0 : i32, i32, i32
  }
  func.func @transform_19(%arg0: i32, %arg1: i32) -> (i32, i32) {
    %c0_i32 = arith.constant 0 : i32
    %c0_i32_0 = arith.constant 0 : i32
    %c0_i32_1 = arith.constant 0 : i32
    return %c0_i32, %c0_i32_0 : i32, i32
  }
  func.func @transform_20(%arg0: i32, %arg1: i32) -> (i32, i32) {
    %c0_i32 = arith.constant 0 : i32
    %c0_i32_0 = arith.constant 0 : i32
    %c0_i32_1 = arith.constant 0 : i32
    return %c0_i32, %c0_i32_0 : i32, i32
  }
  func.func @transform_21(%arg0: i32, %arg1: i32) -> (i32, i32) {
    %c0_i32 = arith.constant 0 : i32
    %c0_i32_0 = arith.constant 0 : i32
    %c0_i32_1 = arith.constant 0 : i32
    return %c0_i32, %c0_i32_0 : i32, i32
  }
  func.func @transform_22(%arg0: i32, %arg1: i32) -> (i32, i32) {
    %c0_i32 = arith.constant 0 : i32
    %c0_i32_0 = arith.constant 0 : i32
    %c0_i32_1 = arith.constant 0 : i32
    return %c0_i32, %c0_i32_0 : i32, i32
  }
  func.func @transform_23(%arg0: i32, %arg1: i32) -> (i32, i32) {
    %c0_i32 = arith.constant 0 : i32
    %c0_i32_0 = arith.constant 0 : i32
    %c0_i32_1 = arith.constant 0 : i32
    return %c0_i32, %c0_i32_0 : i32, i32
  }
  func.func @transform_24(%arg0: i32, %arg1: i32) -> (i32, i32) {
    %c0_i32 = arith.constant 0 : i32
    %c0_i32_0 = arith.constant 0 : i32
    %c0_i32_1 = arith.constant 0 : i32
    return %c0_i32, %c0_i32_0 : i32, i32
  }
  func.func @transform_25(%arg0: i32, %arg1: i32) -> (i32, i32) {
    %c0_i32 = arith.constant 0 : i32
    %c0_i32_0 = arith.constant 0 : i32
    %c0_i32_1 = arith.constant 0 : i32
    return %c0_i32, %c0_i32_0 : i32, i32
  }
  func.func @transform_26(%arg0: i32, %arg1: i32) -> (i32, i32) {
    %c0_i32 = arith.constant 0 : i32
    %c0_i32_0 = arith.constant 0 : i32
    %c0_i32_1 = arith.constant 0 : i32
    return %c0_i32, %c0_i32_0 : i32, i32
  }
  func.func @transform_27(%arg0: i32, %arg1: i32) -> (i32, i32, i32) {
    %c0_i32 = arith.constant 0 : i32
    %c0_i32_0 = arith.constant 0 : i32
    %c0_i32_1 = arith.constant 0 : i32
    return %arg0, %c0_i32, %c0_i32_0 : i32, i32, i32
  }
}

</mosaic_0001>

<llo_original>
// kernel: tf_model_forward.1
$region0: #{tf_model_forward.1}
  #allocation0 [shape = 'u32[]', space=smem, size = 0x4, offset = 0x4, fixed_abs, tag = 'smem constant byte address 0x4 - core index']
  #allocation1 [shape = 'u32[144,128]{1,0:T(1,128)}', space=vmem, size = 0x12000, scoped, tag = 'internal scratch']
  #allocation2 [shape = 'f32[16,32]{1,0:T(8,128)}', space=vmem, size = 0x2000, scoped, tag = 'scratch operand']
  #allocation3 [shape = 'f32[16,32]{1,0:T(8,128)}', space=vmem, size = 0x2000, scoped, tag = 'scratch operand']
  #allocation4 [shape = 'f32[1,1]{1,0:T(1,128)S(1)}', space=vmem, size = 0x200, scoped, tag = 'scoped memory for tf_model_forward.1']
  %s0 = inlined_call_operand.vmem [shape: f32[32,1], index: 0, kind: input, shape index: {}]
  %s1 = inlined_call_operand.vmem [shape: f32[2,1,32], index: 1, kind: input, shape index: {}]
  %s2 = inlined_call_operand.vmem [shape: f32[16,16], index: 2, kind: input, shape index: {}]
  %s3 = inlined_call_operand.vmem [shape: f32[1,16], index: 3, kind: input, shape index: {}]
  %s4 = inlined_call_operand.vmem [shape: f32[1,16], index: 4, kind: input, shape index: {}]
  %s5 = inlined_call_operand.vmem [shape: f32[16,32], index: 5, kind: input, shape index: {}]
  %s6 = inlined_call_operand.vmem [shape: f32[1,32], index: 6, kind: input, shape index: {}]
  %s7 = inlined_call_operand.vmem [shape: f32[2,32,96], index: 7, kind: input, shape index: {}]
  %s8 = inlined_call_operand.vmem [shape: f32[2,1,96], index: 8, kind: input, shape index: {}]
  %s9 = inlined_call_operand.vmem [shape: f32[2,32,32], index: 9, kind: input, shape index: {}]
  %s10 = inlined_call_operand.vmem [shape: f32[2,1,32], index: 10, kind: input, shape index: {}]
  %s11 = inlined_call_operand.vmem [shape: f32[2,32,2048], index: 11, kind: input, shape index: {}]
  %s12 = inlined_call_operand.vmem [shape: f32[2,1,2048], index: 12, kind: input, shape index: {}]
  %s13 = inlined_call_operand.vmem [shape: f32[2,2048,32], index: 13, kind: input, shape index: {}]
  %s14 = inlined_call_operand.vmem [shape: f32[2,1,32], index: 14, kind: input, shape index: {}]
  %s15 = inlined_call_operand.vmem [shape: f32[2,1,32], index: 15, kind: input, shape index: {}]
  %s16 = inlined_call_operand.vmem [shape: f32[2,1,32], index: 16, kind: input, shape index: {}]
  %s17 = inlined_call_operand.vmem [shape: f32[2,1,32], index: 17, kind: input, shape index: {}]
  %s18 = inlined_call_operand.vmem [shape: f32[2,1,32], index: 18, kind: input, shape index: {}]
  %s19 = inlined_call_operand.vmem [shape: f32[32,16], index: 19, kind: input, shape index: {}]
  %s20 = inlined_call_operand.vmem [shape: f32[1,16], index: 20, kind: input, shape index: {}]
  %s21 = inlined_call_operand.vmem [shape: f32[1,16], index: 21, kind: input, shape index: {}]
  %s22 = inlined_call_operand.<no memory space> [shape: f32[1,1], index: 22, kind: input, shape index: {}]
  %s23 = inlined_call_operand.vmem [shape: f32[16,12], index: 23, kind: input, shape index: {}]
  %s24 = inlined_call_operand.vmem [shape: f32[1,12], index: 24, kind: input, shape index: {}]
  %s25 = inlined_call_operand.vmem [shape: f32[12,8], index: 25, kind: input, shape index: {}]
  %s26 = inlined_call_operand.vmem [shape: f32[1,8], index: 26, kind: input, shape index: {}]
  %s27 = inlined_call_operand.hbm [shape: f32[2,1,8], index: 27, kind: output, shape index: {}]
  %s28 = sld [smem:[#allocation0]]
  $region149: #{tf_model_forward.1} parent=0
    _
  %s30 = ssub.s32 1, %s28
  %s31 = scalar_select 0, %s30, %s28
  %v32 = vstv %s22
  %33 = vst [vmem:[#allocation4] sm:$0x1] %v32
  $region1: #{tf_model_forward.1} parent=0
    #allocation5 [shape = 'u8[1024]{0}', space=vmem, size = 0x400, scoped, tag = 'output window, operand 0']
    #allocation6 [shape = 's32[2]{0}', space=sflag, size = 0x8, scoped, tag = 'scoped memory for tf_model_forward.1']
    %34 = vsyncpa [#allocation6], 0
    %s35 = scalar_lea.sflag [#allocation6], 1
    %36 = vsyncpa %s35, 0
    loop: start=0, step=1, limit=6
    $region2: #{tf_model_forward.1} parent=1 // loop_pre_header
      _
    $region3: #{tf_model_forward.1} parent=1 // loop_header
      %s38 = sphi 0, %s42
      %p39 = scmp.ge.s32.totalorder %s38, 6
      %s45 = sphi 0, %s57
      %s46 = sphi 0, %s53
      %s47 = sphi 0, %s45
      %s48 = sphi 0, %s46
      %s49 = sphi 0, %s47
      %s50 = sphi 0, %s48
      %s60 = sphi 0, %s62
      %s63 = sphi 0, %s60
      %s64 = sphi 0, %s63
      %s80 = sphi 0, %s64
      %s86 = sphi 0, %s88
      %s89 = sphi 0, %s86
      %s90 = sphi 0, %s89
      %s106 = sphi 0, %s90
      %s110 = sphi 0, %s110
      %s112 = sphi 0, %s110
      %s113 = sphi 0, %s112
      %s127 = sphi 0, %s113
      %s131 = sphi 0, %s131
      %s133 = sphi 0, %s131
      %s134 = sphi 0, %s133
      %s148 = sphi 0, %s134
      %s152 = sphi 0, %s152
      %s154 = sphi 0, %s152
      %s155 = sphi 0, %s154
      %s169 = sphi 0, %s155
      %s173 = sphi 0, %s173
      %s175 = sphi 0, %s173
      %s176 = sphi 0, %s175
      %s190 = sphi 0, %s176
      %s194 = sphi 0, %s194
      %s196 = sphi 0, %s194
      %s197 = sphi 0, %s196
      %s211 = sphi 0, %s197
      %s217 = sphi 0, %s219
      %s220 = sphi 0, %s217
      %s221 = sphi 0, %s220
      %s237 = sphi 0, %s221
      %s243 = sphi 0, %s245
      %s246 = sphi 0, %s243
      %s247 = sphi 0, %s246
      %s263 = sphi 0, %s247
      %s269 = sphi 0, %s271
      %s272 = sphi 0, %s269
      %s273 = sphi 0, %s272
      %s289 = sphi 0, %s273
      %s295 = sphi 0, %s297
      %s298 = sphi 0, %s295
      %s299 = sphi 0, %s298
      %s315 = sphi 0, %s299
      %s321 = sphi 0, %s323
      %s324 = sphi 0, %s321
      %s325 = sphi 0, %s324
      %s341 = sphi 0, %s325
      %s347 = sphi 0, %s349
      %s350 = sphi 0, %s347
      %s351 = sphi 0, %s350
      %s367 = sphi 0, %s351
      %s373 = sphi 0, %s375
      %s376 = sphi 0, %s373
      %s377 = sphi 0, %s376
      %s393 = sphi 0, %s377
      %s399 = sphi 0, %s401
      %s402 = sphi 0, %s399
      %s403 = sphi 0, %s402
      %s419 = sphi 0, %s403
      %s425 = sphi 0, %s427
      %s428 = sphi 0, %s425
      %s429 = sphi 0, %s428
      %s445 = sphi 0, %s429
      %s451 = sphi 0, %s453
      %s454 = sphi 0, %s451
      %s455 = sphi 0, %s454
      %s471 = sphi 0, %s455
      %s477 = sphi 0, %s479
      %s480 = sphi 0, %s477
      %s481 = sphi 0, %s480
      %s497 = sphi 0, %s481
      %s503 = sphi 0, %s505
      %s506 = sphi 0, %s503
      %s507 = sphi 0, %s506
      %s523 = sphi 0, %s507
      %s527 = sphi 0, %s527
      %s529 = sphi 0, %s527
      %s530 = sphi 0, %s529
      %s544 = sphi 0, %s530
      %s548 = sphi 0, %s548
      %s550 = sphi 0, %s548
      %s551 = sphi 0, %s550
      %s565 = sphi 0, %s551
      %s569 = sphi 0, %s569
      %s571 = sphi 0, %s569
      %s572 = sphi 0, %s571
      %s586 = sphi 0, %s572
      %s590 = sphi 0, %s590
      %s592 = sphi 0, %s590
      %s593 = sphi 0, %s592
      %s607 = sphi 0, %s593
      %s611 = sphi 0, %s611
      %s613 = sphi 0, %s611
      %s614 = sphi 0, %s613
      %s628 = sphi 0, %s614
      %s632 = sphi 0, %s632
      %s634 = sphi 0, %s632
      %s635 = sphi 0, %s634
      %s649 = sphi 0, %s635
      %s653 = sphi 0, %s653
      %s655 = sphi 0, %s653
      %s656 = sphi 0, %s655
      %s670 = sphi 0, %s656
      %s674 = sphi 0, %s674
      %s676 = sphi 0, %s674
      %s677 = sphi 0, %s676
      %s691 = sphi 0, %s677
      %s697 = sphi 0, %s699
      %s700 = sphi 0, %s697
      %s701 = sphi 0, %s700
      %s717 = sphi 0, %s701
    $region4: #{tf_model_forward.1} parent=1 // loop_header_branch
      %41 = sbr.rel (%p39) target = $region8
    $region5: #{tf_model_forward.1} parent=1 // loop_body
      %s43 = ssub.s32 %s38, 1
      %s44 = ssub.s32 %s38, 2
      %s51 = sadd.s32 1, %s46
      %p52 = scmp.ge.s32.totalorder %s51, 2
      %s53 = scalar_select %p52, 0, %s51
      %s54 = sadd.s32 1, %s45
      %s55 = scalar_select %p52, %s54, %s45
      %p56 = scmp.ge.s32.totalorder %s55, 2
      %s57 = scalar_select %p56, 0, %s55
      %s58 = ssub.s32 %s45, %s57
      %p59 = scmp.eq.s32.totalorder %s58, 0
      %s61 = sadd.s32 %s60, 1
      %s62 = scalar_select %p59, %s60, %s61
      %p65 = pneg %p59
      %p66 = scmp.eq.s32.totalorder %s38, 3
      %p67 = por %p65, %p66
      %p68 = scmp.ne.s32.totalorder %s60, %s63
      %p69 = scmp.eq.s32.totalorder %s38, 0
      %p70 = por %p68, %p69
      %p71 = scmp.ne.s32.totalorder %s60, %s63
      %p72 = scmp.eq.s32.totalorder %s43, 3
      %p73 = por %p71, %p72
      %p74 = scmp.ne.s32.totalorder %s63, %s64
      %p75 = scmp.eq.s32.totalorder %s43, 0
      %p76 = por %p74, %p75
      %p77 = scmp.ne.s32.totalorder %s63, %s64
      %p78 = scmp.eq.s32.totalorder %s44, 3
      %p79 = por %p77, %p78
      %p81 = scmp.ne.s32.totalorder %s64, %s80
      %p82 = scmp.eq.s32.totalorder %s44, 0
      %p83 = por %p81, %p82
      %s84 = ssub.s32 %s45, %s57
      %p85 = scmp.eq.s32.totalorder %s84, 0
      %s87 = sadd.s32 %s86, 1
      %s88 = scalar_select %p85, %s86, %s87
      %p91 = pneg %p85
      %p92 = scmp.eq.s32.totalorder %s38, 3
      %p93 = por %p91, %p92
      %p94 = scmp.ne.s32.totalorder %s86, %s89
      %p95 = scmp.eq.s32.totalorder %s38, 0
      %p96 = por %p94, %p95
      %p97 = scmp.ne.s32.totalorder %s86, %s89
      %p98 = scmp.eq.s32.totalorder %s43, 3
      %p99 = por %p97, %p98
      %p100 = scmp.ne.s32.totalorder %s89, %s90
      %p101 = scmp.eq.s32.totalorder %s43, 0
      %p102 = por %p100, %p101
      %p103 = scmp.ne.s32.totalorder %s89, %s90
      %p104 = scmp.eq.s32.totalorder %s44, 3
      %p105 = por %p103, %p104
      %p107 = scmp.ne.s32.totalorder %s90, %s106
      %p108 = scmp.eq.s32.totalorder %s44, 0
      %p109 = por %p107, %p108
      %s111 = sadd.s32 %s110, 1
      %p114 = scmp.eq.s32.totalorder %s38, 3
      %p115 = scmp.ne.s32.totalorder %s110, %s112
      %p116 = scmp.eq.s32.totalorder %s38, 0
      %p117 = por %p115, %p116
      %p118 = scmp.ne.s32.totalorder %s110, %s112
      %p119 = scmp.eq.s32.totalorder %s43, 3
      %p120 = por %p118, %p119
      %p121 = scmp.ne.s32.totalorder %s112, %s113
      %p122 = scmp.eq.s32.totalorder %s43, 0
      %p123 = por %p121, %p122
      %p124 = scmp.ne.s32.totalorder %s112, %s113
      %p125 = scmp.eq.s32.totalorder %s44, 3
      %p126 = por %p124, %p125
      %p128 = scmp.ne.s32.totalorder %s113, %s127
      %p129 = scmp.eq.s32.totalorder %s44, 0
      %p130 = por %p128, %p129
      %s132 = sadd.s32 %s131, 1
      %p135 = scmp.eq.s32.totalorder %s38, 3
      %p136 = scmp.ne.s32.totalorder %s131, %s133
      %p137 = scmp.eq.s32.totalorder %s38, 0
      %p138 = por %p136, %p137
      %p139 = scmp.ne.s32.totalorder %s131, %s133
      %p140 = scmp.eq.s32.totalorder %s43, 3
      %p141 = por %p139, %p140
      %p142 = scmp.ne.s32.totalorder %s133, %s134
      %p143 = scmp.eq.s32.totalorder %s43, 0
      %p144 = por %p142, %p143
      %p145 = scmp.ne.s32.totalorder %s133, %s134
      %p146 = scmp.eq.s32.totalorder %s44, 3
      %p147 = por %p145, %p146
      %p149 = scmp.ne.s32.totalorder %s134, %s148
      %p150 = scmp.eq.s32.totalorder %s44, 0
      %p151 = por %p149, %p150
      %s153 = sadd.s32 %s152, 1
      %p156 = scmp.eq.s32.totalorder %s38, 3
      %p157 = scmp.ne.s32.totalorder %s152, %s154
      %p158 = scmp.eq.s32.totalorder %s38, 0
      %p159 = por %p157, %p158
      %p160 = scmp.ne.s32.totalorder %s152, %s154
      %p161 = scmp.eq.s32.totalorder %s43, 3
      %p162 = por %p160, %p161
      %p163 = scmp.ne.s32.totalorder %s154, %s155
      %p164 = scmp.eq.s32.totalorder %s43, 0
      %p165 = por %p163, %p164
      %p166 = scmp.ne.s32.totalorder %s154, %s155
      %p167 = scmp.eq.s32.totalorder %s44, 3
      %p168 = por %p166, %p167
      %p170 = scmp.ne.s32.totalorder %s155, %s169
      %p171 = scmp.eq.s32.totalorder %s44, 0
      %p172 = por %p170, %p171
      %s174 = sadd.s32 %s173, 1
      %p177 = scmp.eq.s32.totalorder %s38, 3
      %p178 = scmp.ne.s32.totalorder %s173, %s175
      %p179 = scmp.eq.s32.totalorder %s38, 0
      %p180 = por %p178, %p179
      %p181 = scmp.ne.s32.totalorder %s173, %s175
      %p182 = scmp.eq.s32.totalorder %s43, 3
      %p183 = por %p181, %p182
      %p184 = scmp.ne.s32.totalorder %s175, %s176
      %p185 = scmp.eq.s32.totalorder %s43, 0
      %p186 = por %p184, %p185
      %p187 = scmp.ne.s32.totalorder %s175, %s176
      %p188 = scmp.eq.s32.totalorder %s44, 3
      %p189 = por %p187, %p188
      %p191 = scmp.ne.s32.totalorder %s176, %s190
      %p192 = scmp.eq.s32.totalorder %s44, 0
      %p193 = por %p191, %p192
      %s195 = sadd.s32 %s194, 1
      %p198 = scmp.eq.s32.totalorder %s38, 3
      %p199 = scmp.ne.s32.totalorder %s194, %s196
      %p200 = scmp.eq.s32.totalorder %s38, 0
      %p201 = por %p199, %p200
      %p202 = scmp.ne.s32.totalorder %s194, %s196
      %p203 = scmp.eq.s32.totalorder %s43, 3
      %p204 = por %p202, %p203
      %p205 = scmp.ne.s32.totalorder %s196, %s197
      %p206 = scmp.eq.s32.totalorder %s43, 0
      %p207 = por %p205, %p206
      %p208 = scmp.ne.s32.totalorder %s196, %s197
      %p209 = scmp.eq.s32.totalorder %s44, 3
      %p210 = por %p208, %p209
      %p212 = scmp.ne.s32.totalorder %s197, %s211
      %p213 = scmp.eq.s32.totalorder %s44, 0
      %p214 = por %p212, %p213
      %s215 = ssub.s32 %s46, %s53
      %p216 = scmp.eq.s32.totalorder %s215, 0
      %s218 = sadd.s32 %s217, 1
      %s219 = scalar_select %p216, %s217, %s218
      %p222 = pneg %p216
      %p223 = scmp.eq.s32.totalorder %s38, 3
      %p224 = por %p222, %p223
      %p225 = scmp.ne.s32.totalorder %s217, %s220
      %p226 = scmp.eq.s32.totalorder %s38, 0
      %p227 = por %p225, %p226
      %p228 = scmp.ne.s32.totalorder %s217, %s220
      %p229 = scmp.eq.s32.totalorder %s43, 3
      %p230 = por %p228, %p229
      %p231 = scmp.ne.s32.totalorder %s220, %s221
      %p232 = scmp.eq.s32.totalorder %s43, 0
      %p233 = por %p231, %p232
      %p234 = scmp.ne.s32.totalorder %s220, %s221
      %p235 = scmp.eq.s32.totalorder %s44, 3
      %p236 = por %p234, %p235
      %p238 = scmp.ne.s32.totalorder %s221, %s237
      %p239 = scmp.eq.s32.totalorder %s44, 0
      %p240 = por %p238, %p239
      %s241 = ssub.s32 %s46, %s53
      %p242 = scmp.eq.s32.totalorder %s241, 0
      %s244 = sadd.s32 %s243, 1
      %s245 = scalar_select %p242, %s243, %s244
      %p248 = pneg %p242
      %p249 = scmp.eq.s32.totalorder %s38, 3
      %p250 = por %p248, %p249
      %p251 = scmp.ne.s32.totalorder %s243, %s246
      %p252 = scmp.eq.s32.totalorder %s38, 0
      %p253 = por %p251, %p252
      %p254 = scmp.ne.s32.totalorder %s243, %s246
      %p255 = scmp.eq.s32.totalorder %s43, 3
      %p256 = por %p254, %p255
      %p257 = scmp.ne.s32.totalorder %s246, %s247
      %p258 = scmp.eq.s32.totalorder %s43, 0
      %p259 = por %p257, %p258
      %p260 = scmp.ne.s32.totalorder %s246, %s247
      %p261 = scmp.eq.s32.totalorder %s44, 3
      %p262 = por %p260, %p261
      %p264 = scmp.ne.s32.totalorder %s247, %s263
      %p265 = scmp.eq.s32.totalorder %s44, 0
      %p266 = por %p264, %p265
      %s267 = ssub.s32 %s46, %s53
      %p268 = scmp.eq.s32.totalorder %s267, 0
      %s270 = sadd.s32 %s269, 1
      %s271 = scalar_select %p268, %s269, %s270
      %p274 = pneg %p268
      %p275 = scmp.eq.s32.totalorder %s38, 3
      %p276 = por %p274, %p275
      %p277 = scmp.ne.s32.totalorder %s269, %s272
      %p278 = scmp.eq.s32.totalorder %s38, 0
      %p279 = por %p277, %p278
      %p280 = scmp.ne.s32.totalorder %s269, %s272
      %p281 = scmp.eq.s32.totalorder %s43, 3
      %p282 = por %p280, %p281
      %p283 = scmp.ne.s32.totalorder %s272, %s273
      %p284 = scmp.eq.s32.totalorder %s43, 0
      %p285 = por %p283, %p284
      %p286 = scmp.ne.s32.totalorder %s272, %s273
      %p287 = scmp.eq.s32.totalorder %s44, 3
      %p288 = por %p286, %p287
      %p290 = scmp.ne.s32.totalorder %s273, %s289
      %p291 = scmp.eq.s32.totalorder %s44, 0
      %p292 = por %p290, %p291
      %s293 = ssub.s32 %s46, %s53
      %p294 = scmp.eq.s32.totalorder %s293, 0
      %s296 = sadd.s32 %s295, 1
      %s297 = scalar_select %p294, %s295, %s296
      %p300 = pneg %p294
      %p301 = scmp.eq.s32.totalorder %s38, 3
      %p302 = por %p300, %p301
      %p303 = scmp.ne.s32.totalorder %s295, %s298
      %p304 = scmp.eq.s32.totalorder %s38, 0
      %p305 = por %p303, %p304
      %p306 = scmp.ne.s32.totalorder %s295, %s298
      %p307 = scmp.eq.s32.totalorder %s43, 3
      %p308 = por %p306, %p307
      %p309 = scmp.ne.s32.totalorder %s298, %s299
      %p310 = scmp.eq.s32.totalorder %s43, 0
      %p311 = por %p309, %p310
      %p312 = scmp.ne.s32.totalorder %s298, %s299
      %p313 = scmp.eq.s32.totalorder %s44, 3
      %p314 = por %p312, %p313
      %p316 = scmp.ne.s32.totalorder %s299, %s315
      %p317 = scmp.eq.s32.totalorder %s44, 0
      %p318 = por %p316, %p317
      %s319 = ssub.s32 %s46, %s53
      %p320 = scmp.eq.s32.totalorder %s319, 0
      %s322 = sadd.s32 %s321, 1
      %s323 = scalar_select %p320, %s321, %s322
      %p326 = pneg %p320
      %p327 = scmp.eq.s32.totalorder %s38, 3
      %p328 = por %p326, %p327
      %p329 = scmp.ne.s32.totalorder %s321, %s324
      %p330 = scmp.eq.s32.totalorder %s38, 0
      %p331 = por %p329, %p330
      %p332 = scmp.ne.s32.totalorder %s321, %s324
      %p333 = scmp.eq.s32.totalorder %s43, 3
      %p334 = por %p332, %p333
      %p335 = scmp.ne.s32.totalorder %s324, %s325
      %p336 = scmp.eq.s32.totalorder %s43, 0
      %p337 = por %p335, %p336
      %p338 = scmp.ne.s32.totalorder %s324, %s325
      %p339 = scmp.eq.s32.totalorder %s44, 3
      %p340 = por %p338, %p339
      %p342 = scmp.ne.s32.totalorder %s325, %s341
      %p343 = scmp.eq.s32.totalorder %s44, 0
      %p344 = por %p342, %p343
      %s345 = ssub.s32 %s46, %s53
      %p346 = scmp.eq.s32.totalorder %s345, 0
      %s348 = sadd.s32 %s347, 1
      %s349 = scalar_select %p346, %s347, %s348
      %p352 = pneg %p346
      %p353 = scmp.eq.s32.totalorder %s38, 3
      %p354 = por %p352, %p353
      %p355 = scmp.ne.s32.totalorder %s347, %s350
      %p356 = scmp.eq.s32.totalorder %s38, 0
      %p357 = por %p355, %p356
      %p358 = scmp.ne.s32.totalorder %s347, %s350
      %p359 = scmp.eq.s32.totalorder %s43, 3
      %p360 = por %p358, %p359
      %p361 = scmp.ne.s32.totalorder %s350, %s351
      %p362 = scmp.eq.s32.totalorder %s43, 0
      %p363 = por %p361, %p362
      %p364 = scmp.ne.s32.totalorder %s350, %s351
      %p365 = scmp.eq.s32.totalorder %s44, 3
      %p366 = por %p364, %p365
      %p368 = scmp.ne.s32.totalorder %s351, %s367
      %p369 = scmp.eq.s32.totalorder %s44, 0
      %p370 = por %p368, %p369
      %s371 = ssub.s32 %s46, %s53
      %p372 = scmp.eq.s32.totalorder %s371, 0
      %s374 = sadd.s32 %s373, 1
      %s375 = scalar_select %p372, %s373, %s374
      %p378 = pneg %p372
      %p379 = scmp.eq.s32.totalorder %s38, 3
      %p380 = por %p378, %p379
      %p381 = scmp.ne.s32.totalorder %s373, %s376
      %p382 = scmp.eq.s32.totalorder %s38, 0
      %p383 = por %p381, %p382
      %p384 = scmp.ne.s32.totalorder %s373, %s376
      %p385 = scmp.eq.s32.totalorder %s43, 3
      %p386 = por %p384, %p385
      %p387 = scmp.ne.s32.totalorder %s376, %s377
      %p388 = scmp.eq.s32.totalorder %s43, 0
      %p389 = por %p387, %p388
      %p390 = scmp.ne.s32.totalorder %s376, %s377
      %p391 = scmp.eq.s32.totalorder %s44, 3
      %p392 = por %p390, %p391
      %p394 = scmp.ne.s32.totalorder %s377, %s393
      %p395 = scmp.eq.s32.totalorder %s44, 0
      %p396 = por %p394, %p395
      %s397 = ssub.s32 %s46, %s53
      %p398 = scmp.eq.s32.totalorder %s397, 0
      %s400 = sadd.s32 %s399, 1
      %s401 = scalar_select %p398, %s399, %s400
      %p404 = pneg %p398
      %p405 = scmp.eq.s32.totalorder %s38, 3
      %p406 = por %p404, %p405
      %p407 = scmp.ne.s32.totalorder %s399, %s402
      %p408 = scmp.eq.s32.totalorder %s38, 0
      %p409 = por %p407, %p408
      %p410 = scmp.ne.s32.totalorder %s399, %s402
      %p411 = scmp.eq.s32.totalorder %s43, 3
      %p412 = por %p410, %p411
      %p413 = scmp.ne.s32.totalorder %s402, %s403
      %p414 = scmp.eq.s32.totalorder %s43, 0
      %p415 = por %p413, %p414
      %p416 = scmp.ne.s32.totalorder %s402, %s403
      %p417 = scmp.eq.s32.totalorder %s44, 3
      %p418 = por %p416, %p417
      %p420 = scmp.ne.s32.totalorder %s403, %s419
      %p421 = scmp.eq.s32.totalorder %s44, 0
      %p422 = por %p420, %p421
      %s423 = ssub.s32 %s46, %s53
      %p424 = scmp.eq.s32.totalorder %s423, 0
      %s426 = sadd.s32 %s425, 1
      %s427 = scalar_select %p424, %s425, %s426
      %p430 = pneg %p424
      %p431 = scmp.eq.s32.totalorder %s38, 3
      %p432 = por %p430, %p431
      %p433 = scmp.ne.s32.totalorder %s425, %s428
      %p434 = scmp.eq.s32.totalorder %s38, 0
      %p435 = por %p433, %p434
      %p436 = scmp.ne.s32.totalorder %s425, %s428
      %p437 = scmp.eq.s32.totalorder %s43, 3
      %p438 = por %p436, %p437
      %p439 = scmp.ne.s32.totalorder %s428, %s429
      %p440 = scmp.eq.s32.totalorder %s43, 0
      %p441 = por %p439, %p440
      %p442 = scmp.ne.s32.totalorder %s428, %s429
      %p443 = scmp.eq.s32.totalorder %s44, 3
      %p444 = por %p442, %p443
      %p446 = scmp.ne.s32.totalorder %s429, %s445
      %p447 = scmp.eq.s32.totalorder %s44, 0
      %p448 = por %p446, %p447
      %s449 = ssub.s32 %s46, %s53
      %p450 = scmp.eq.s32.totalorder %s449, 0
      %s452 = sadd.s32 %s451, 1
      %s453 = scalar_select %p450, %s451, %s452
      %p456 = pneg %p450
      %p457 = scmp.eq.s32.totalorder %s38, 3
      %p458 = por %p456, %p457
      %p459 = scmp.ne.s32.totalorder %s451, %s454
      %p460 = scmp.eq.s32.totalorder %s38, 0
      %p461 = por %p459, %p460
      %p462 = scmp.ne.s32.totalorder %s451, %s454
      %p463 = scmp.eq.s32.totalorder %s43, 3
      %p464 = por %p462, %p463
      %p465 = scmp.ne.s32.totalorder %s454, %s455
      %p466 = scmp.eq.s32.totalorder %s43, 0
      %p467 = por %p465, %p466
      %p468 = scmp.ne.s32.totalorder %s454, %s455
      %p469 = scmp.eq.s32.totalorder %s44, 3
      %p470 = por %p468, %p469
      %p472 = scmp.ne.s32.totalorder %s455, %s471
      %p473 = scmp.eq.s32.totalorder %s44, 0
      %p474 = por %p472, %p473
      %s475 = ssub.s32 %s46, %s53
      %p476 = scmp.eq.s32.totalorder %s475, 0
      %s478 = sadd.s32 %s477, 1
      %s479 = scalar_select %p476, %s477, %s478
      %p482 = pneg %p476
      %p483 = scmp.eq.s32.totalorder %s38, 3
      %p484 = por %p482, %p483
      %p485 = scmp.ne.s32.totalorder %s477, %s480
      %p486 = scmp.eq.s32.totalorder %s38, 0
      %p487 = por %p485, %p486
      %p488 = scmp.ne.s32.totalorder %s477, %s480
      %p489 = scmp.eq.s32.totalorder %s43, 3
      %p490 = por %p488, %p489
      %p491 = scmp.ne.s32.totalorder %s480, %s481
      %p492 = scmp.eq.s32.totalorder %s43, 0
      %p493 = por %p491, %p492
      %p494 = scmp.ne.s32.totalorder %s480, %s481
      %p495 = scmp.eq.s32.totalorder %s44, 3
      %p496 = por %p494, %p495
      %p498 = scmp.ne.s32.totalorder %s481, %s497
      %p499 = scmp.eq.s32.totalorder %s44, 0
      %p500 = por %p498, %p499
      %s501 = ssub.s32 %s46, %s53
      %p502 = scmp.eq.s32.totalorder %s501, 0
      %s504 = sadd.s32 %s503, 1
      %s505 = scalar_select %p502, %s503, %s504
      %p508 = pneg %p502
      %p509 = scmp.eq.s32.totalorder %s38, 3
      %p510 = por %p508, %p509
      %p511 = scmp.ne.s32.totalorder %s503, %s506
      %p512 = scmp.eq.s32.totalorder %s38, 0
      %p513 = por %p511, %p512
      %p514 = scmp.ne.s32.totalorder %s503, %s506
      %p515 = scmp.eq.s32.totalorder %s43, 3
      %p516 = por %p514, %p515
      %p517 = scmp.ne.s32.totalorder %s506, %s507
      %p518 = scmp.eq.s32.totalorder %s43, 0
      %p519 = por %p517, %p518
      %p520 = scmp.ne.s32.totalorder %s506, %s507
      %p521 = scmp.eq.s32.totalorder %s44, 3
      %p522 = por %p520, %p521
      %p524 = scmp.ne.s32.totalorder %s507, %s523
      %p525 = scmp.eq.s32.totalorder %s44, 0
      %p526 = por %p524, %p525
      %s528 = sadd.s32 %s527, 1
      %p531 = scmp.eq.s32.totalorder %s38, 3
      %p532 = scmp.ne.s32.totalorder %s527, %s529
      %p533 = scmp.eq.s32.totalorder %s38, 0
      %p534 = por %p532, %p533
      %p535 = scmp.ne.s32.totalorder %s527, %s529
      %p536 = scmp.eq.s32.totalorder %s43, 3
      %p537 = por %p535, %p536
      %p538 = scmp.ne.s32.totalorder %s529, %s530
      %p539 = scmp.eq.s32.totalorder %s43, 0
      %p540 = por %p538, %p539
      %p541 = scmp.ne.s32.totalorder %s529, %s530
      %p542 = scmp.eq.s32.totalorder %s44, 3
      %p543 = por %p541, %p542
      %p545 = scmp.ne.s32.totalorder %s530, %s544
      %p546 = scmp.eq.s32.totalorder %s44, 0
      %p547 = por %p545, %p546
      %s549 = sadd.s32 %s548, 1
      %p552 = scmp.eq.s32.totalorder %s38, 3
      %p553 = scmp.ne.s32.totalorder %s548, %s550
      %p554 = scmp.eq.s32.totalorder %s38, 0
      %p555 = por %p553, %p554
      %p556 = scmp.ne.s32.totalorder %s548, %s550
      %p557 = scmp.eq.s32.totalorder %s43, 3
      %p558 = por %p556, %p557
      %p559 = scmp.ne.s32.totalorder %s550, %s551
      %p560 = scmp.eq.s32.totalorder %s43, 0
      %p561 = por %p559, %p560
      %p562 = scmp.ne.s32.totalorder %s550, %s551
      %p563 = scmp.eq.s32.totalorder %s44, 3
      %p564 = por %p562, %p563
      %p566 = scmp.ne.s32.totalorder %s551, %s565
      %p567 = scmp.eq.s32.totalorder %s44, 0
      %p568 = por %p566, %p567
      %s570 = sadd.s32 %s569, 1
      %p573 = scmp.eq.s32.totalorder %s38, 3
      %p574 = scmp.ne.s32.totalorder %s569, %s571
      %p575 = scmp.eq.s32.totalorder %s38, 0
      %p576 = por %p574, %p575
      %p577 = scmp.ne.s32.totalorder %s569, %s571
      %p578 = scmp.eq.s32.totalorder %s43, 3
      %p579 = por %p577, %p578
      %p580 = scmp.ne.s32.totalorder %s571, %s572
      %p581 = scmp.eq.s32.totalorder %s43, 0
      %p582 = por %p580, %p581
      %p583 = scmp.ne.s32.totalorder %s571, %s572
      %p584 = scmp.eq.s32.totalorder %s44, 3
      %p585 = por %p583, %p584
      %p587 = scmp.ne.s32.totalorder %s572, %s586
      %p588 = scmp.eq.s32.totalorder %s44, 0
      %p589 = por %p587, %p588
      %s591 = sadd.s32 %s590, 1
      %p594 = scmp.eq.s32.totalorder %s38, 3
      %p595 = scmp.ne.s32.totalorder %s590, %s592
      %p596 = scmp.eq.s32.totalorder %s38, 0
      %p597 = por %p595, %p596
      %p598 = scmp.ne.s32.totalorder %s590, %s592
      %p599 = scmp.eq.s32.totalorder %s43, 3
      %p600 = por %p598, %p599
      %p601 = scmp.ne.s32.totalorder %s592, %s593
      %p602 = scmp.eq.s32.totalorder %s43, 0
      %p603 = por %p601, %p602
      %p604 = scmp.ne.s32.totalorder %s592, %s593
      %p605 = scmp.eq.s32.totalorder %s44, 3
      %p606 = por %p604, %p605
      %p608 = scmp.ne.s32.totalorder %s593, %s607
      %p609 = scmp.eq.s32.totalorder %s44, 0
      %p610 = por %p608, %p609
      %s612 = sadd.s32 %s611, 1
      %p615 = scmp.eq.s32.totalorder %s38, 3
      %p616 = scmp.ne.s32.totalorder %s611, %s613
      %p617 = scmp.eq.s32.totalorder %s38, 0
      %p618 = por %p616, %p617
      %p619 = scmp.ne.s32.totalorder %s611, %s613
      %p620 = scmp.eq.s32.totalorder %s43, 3
      %p621 = por %p619, %p620
      %p622 = scmp.ne.s32.totalorder %s613, %s614
      %p623 = scmp.eq.s32.totalorder %s43, 0
      %p624 = por %p622, %p623
      %p625 = scmp.ne.s32.totalorder %s613, %s614
      %p626 = scmp.eq.s32.totalorder %s44, 3
      %p627 = por %p625, %p626
      %p629 = scmp.ne.s32.totalorder %s614, %s628
      %p630 = scmp.eq.s32.totalorder %s44, 0
      %p631 = por %p629, %p630
      %s633 = sadd.s32 %s632, 1
      %p636 = scmp.eq.s32.totalorder %s38, 3
      %p637 = scmp.ne.s32.totalorder %s632, %s634
      %p638 = scmp.eq.s32.totalorder %s38, 0
      %p639 = por %p637, %p638
      %p640 = scmp.ne.s32.totalorder %s632, %s634
      %p641 = scmp.eq.s32.totalorder %s43, 3
      %p642 = por %p640, %p641
      %p643 = scmp.ne.s32.totalorder %s634, %s635
      %p644 = scmp.eq.s32.totalorder %s43, 0
      %p645 = por %p643, %p644
      %p646 = scmp.ne.s32.totalorder %s634, %s635
      %p647 = scmp.eq.s32.totalorder %s44, 3
      %p648 = por %p646, %p647
      %p650 = scmp.ne.s32.totalorder %s635, %s649
      %p651 = scmp.eq.s32.totalorder %s44, 0
      %p652 = por %p650, %p651
      %s654 = sadd.s32 %s653, 1
      %p657 = scmp.eq.s32.totalorder %s38, 3
      %p658 = scmp.ne.s32.totalorder %s653, %s655
      %p659 = scmp.eq.s32.totalorder %s38, 0
      %p660 = por %p658, %p659
      %p661 = scmp.ne.s32.totalorder %s653, %s655
      %p662 = scmp.eq.s32.totalorder %s43, 3
      %p663 = por %p661, %p662
      %p664 = scmp.ne.s32.totalorder %s655, %s656
      %p665 = scmp.eq.s32.totalorder %s43, 0
      %p666 = por %p664, %p665
      %p667 = scmp.ne.s32.totalorder %s655, %s656
      %p668 = scmp.eq.s32.totalorder %s44, 3
      %p669 = por %p667, %p668
      %p671 = scmp.ne.s32.totalorder %s656, %s670
      %p672 = scmp.eq.s32.totalorder %s44, 0
      %p673 = por %p671, %p672
      %s675 = sadd.s32 %s674, 1
      %p678 = scmp.eq.s32.totalorder %s38, 3
      %p679 = scmp.ne.s32.totalorder %s674, %s676
      %p680 = scmp.eq.s32.totalorder %s38, 0
      %p681 = por %p679, %p680
      %p682 = scmp.ne.s32.totalorder %s674, %s676
      %p683 = scmp.eq.s32.totalorder %s43, 3
      %p684 = por %p682, %p683
      %p685 = scmp.ne.s32.totalorder %s676, %s677
      %p686 = scmp.eq.s32.totalorder %s43, 0
      %p687 = por %p685, %p686
      %p688 = scmp.ne.s32.totalorder %s676, %s677
      %p689 = scmp.eq.s32.totalorder %s44, 3
      %p690 = por %p688, %p689
      %p692 = scmp.ne.s32.totalorder %s677, %s691
      %p693 = scmp.eq.s32.totalorder %s44, 0
      %p694 = por %p692, %p693
      %s695 = ssub.s32 %s45, %s57
      %p696 = scmp.eq.s32.totalorder %s695, 0
      %s698 = sadd.s32 %s697, 1
      %s699 = scalar_select %p696, %s697, %s698
      %p702 = pneg %p696
      %p703 = scmp.eq.s32.totalorder %s38, 3
      %p704 = por %p702, %p703
      %p705 = scmp.ne.s32.totalorder %s697, %s700
      %p706 = scmp.eq.s32.totalorder %s38, 0
      %p707 = por %p705, %p706
      %p708 = scmp.ne.s32.totalorder %s697, %s700
      %p709 = scmp.eq.s32.totalorder %s43, 3
      %p710 = por %p708, %p709
      %p711 = scmp.ne.s32.totalorder %s700, %s701
      %p712 = scmp.eq.s32.totalorder %s43, 0
      %p713 = por %p711, %p712
      %p714 = scmp.ne.s32.totalorder %s700, %s701
      %p715 = scmp.eq.s32.totalorder %s44, 3
      %p716 = por %p714, %p715
      %p718 = scmp.ne.s32.totalorder %s701, %s717
      %p719 = scmp.eq.s32.totalorder %s44, 0
      %p720 = por %p718, %p719
      %p721 = scmp.le.s32.totalorder 1, %s38
      %p722 = scmp.lt.s32.totalorder %s38, 5
      %p723 = pnand %p721, %p722
      %p724 = pneg %p723
      // Predicated region
      $region9: #{tf_model_forward.1} parent=5 // pred_check
        _
      $region10: #{tf_model_forward.1} parent=5 // pred_check_branch
        %726 = sbr.rel (%p723) target = $region12
      $region11: #{tf_model_forward.1} parent=5 // pred_region
        %s727 = ssub.s32 %s38, 1
        // Predicated region
        $region13: #{tf_model_forward.1} parent=11 // pred_check
          %p728 = pneg %p123
        $region14: #{tf_model_forward.1} parent=11 // pred_check_branch
          %730 = sbr.rel (%p728) target = $region16
        $region15: #{tf_model_forward.1} parent=11 // pred_region
          _
        $region16: #{tf_model_forward.1} parent=11 // pred_fallthru
          _
        // Predicated region
        $region17: #{tf_model_forward.1} parent=11 // pred_check
          %p731 = pneg %p144
        $region18: #{tf_model_forward.1} parent=11 // pred_check_branch
          %733 = sbr.rel (%p731) target = $region20
        $region19: #{tf_model_forward.1} parent=11 // pred_region
          _
        $region20: #{tf_model_forward.1} parent=11 // pred_fallthru
          _
        // Predicated region
        $region21: #{tf_model_forward.1} parent=11 // pred_check
          %p734 = pneg %p165
        $region22: #{tf_model_forward.1} parent=11 // pred_check_branch
          %736 = sbr.rel (%p734) target = $region24
        $region23: #{tf_model_forward.1} parent=11 // pred_region
          _
        $region24: #{tf_model_forward.1} parent=11 // pred_fallthru
          _
        // Predicated region
        $region25: #{tf_model_forward.1} parent=11 // pred_check
          %p737 = pneg %p186
        $region26: #{tf_model_forward.1} parent=11 // pred_check_branch
          %739 = sbr.rel (%p737) target = $region28
        $region27: #{tf_model_forward.1} parent=11 // pred_region
          _
        $region28: #{tf_model_forward.1} parent=11 // pred_fallthru
          _
        // Predicated region
        $region29: #{tf_model_forward.1} parent=11 // pred_check
          %p740 = pneg %p207
        $region30: #{tf_model_forward.1} parent=11 // pred_check_branch
          %742 = sbr.rel (%p740) target = $region32
        $region31: #{tf_model_forward.1} parent=11 // pred_region
          _
        $region32: #{tf_model_forward.1} parent=11 // pred_fallthru
          _
        // Predicated region
        $region33: #{tf_model_forward.1} parent=11 // pred_check
          %p743 = pneg %p540
        $region34: #{tf_model_forward.1} parent=11 // pred_check_branch
          %745 = sbr.rel (%p743) target = $region36
        $region35: #{tf_model_forward.1} parent=11 // pred_region
          _
        $region36: #{tf_model_forward.1} parent=11 // pred_fallthru
          _
        // Predicated region
        $region37: #{tf_model_forward.1} parent=11 // pred_check
          %p746 = pneg %p561
        $region38: #{tf_model_forward.1} parent=11 // pred_check_branch
          %748 = sbr.rel (%p746) target = $region40
        $region39: #{tf_model_forward.1} parent=11 // pred_region
          _
        $region40: #{tf_model_forward.1} parent=11 // pred_fallthru
          _
        // Predicated region
        $region41: #{tf_model_forward.1} parent=11 // pred_check
          %p749 = pneg %p582
        $region42: #{tf_model_forward.1} parent=11 // pred_check_branch
          %751 = sbr.rel (%p749) target = $region44
        $region43: #{tf_model_forward.1} parent=11 // pred_region
          _
        $region44: #{tf_model_forward.1} parent=11 // pred_fallthru
          _
        // Predicated region
        $region45: #{tf_model_forward.1} parent=11 // pred_check
          %p752 = pneg %p603
        $region46: #{tf_model_forward.1} parent=11 // pred_check_branch
          %754 = sbr.rel (%p752) target = $region48
        $region47: #{tf_model_forward.1} parent=11 // pred_region
          _
        $region48: #{tf_model_forward.1} parent=11 // pred_fallthru
          _
        // Predicated region
        $region49: #{tf_model_forward.1} parent=11 // pred_check
          %p755 = pneg %p624
        $region50: #{tf_model_forward.1} parent=11 // pred_check_branch
          %757 = sbr.rel (%p755) target = $region52
        $region51: #{tf_model_forward.1} parent=11 // pred_region
          _
        $region52: #{tf_model_forward.1} parent=11 // pred_fallthru
          _
        // Predicated region
        $region53: #{tf_model_forward.1} parent=11 // pred_check
          %p758 = pneg %p645
        $region54: #{tf_model_forward.1} parent=11 // pred_check_branch
          %760 = sbr.rel (%p758) target = $region56
        $region55: #{tf_model_forward.1} parent=11 // pred_region
          _
        $region56: #{tf_model_forward.1} parent=11 // pred_fallthru
          _
        // Predicated region
        $region57: #{tf_model_forward.1} parent=11 // pred_check
          %p761 = pneg %p666
        $region58: #{tf_model_forward.1} parent=11 // pred_check_branch
          %763 = sbr.rel (%p761) target = $region60
        $region59: #{tf_model_forward.1} parent=11 // pred_region
          _
        $region60: #{tf_model_forward.1} parent=11 // pred_fallthru
          _
        // Predicated region
        $region61: #{tf_model_forward.1} parent=11 // pred_check
          %p764 = pneg %p687
        $region62: #{tf_model_forward.1} parent=11 // pred_check_branch
          %766 = sbr.rel (%p764) target = $region64
        $region63: #{tf_model_forward.1} parent=11 // pred_region
          _
        $region64: #{tf_model_forward.1} parent=11 // pred_fallthru
          _
      $region12: #{tf_model_forward.1} parent=5 // pred_fallthru
        _
      %p767 = scmp.lt.s32.totalorder %s38, 4
      // Predicated region
      $region65: #{tf_model_forward.1} parent=5 // pred_check
        %p768 = pneg %p767
      $region66: #{tf_model_forward.1} parent=5 // pred_check_branch
        %770 = sbr.rel (%p768) target = $region68
      $region67: #{tf_model_forward.1} parent=5 // pred_region
        // Predicated region
        $region69: #{tf_model_forward.1} parent=67 // pred_check
          %p771 = pneg %p70
        $region70: #{tf_model_forward.1} parent=67 // pred_check_branch
          %773 = sbr.rel (%p771) target = $region72
        $region71: #{tf_model_forward.1} parent=67 // pred_region
          %s774 = smul.u32 2, %s45
          %p775 = scmp.lt.s32.totalorder %s774, 3
          %s776 = scalar_select %p775, %s774, 3
          %s777 = smul.addr %s776, 8
          %s778 = scalar_lea.vmem %s0, %s777
          %s779 = smul.u32 2, %s45
        $region72: #{tf_model_forward.1} parent=67 // pred_fallthru
          _
        // Predicated region
        $region73: #{tf_model_forward.1} parent=67 // pred_check
          %p780 = pneg %p96
        $region74: #{tf_model_forward.1} parent=67 // pred_check_branch
          %782 = sbr.rel (%p780) target = $region76
        $region75: #{tf_model_forward.1} parent=67 // pred_region
          %p783 = scmp.lt.s32.totalorder %s45, 1
          %s784 = scalar_select %p783, %s45, 1
          %s785 = scalar_lea.vmem %s1, %s784
        $region76: #{tf_model_forward.1} parent=67 // pred_fallthru
          _
        // Predicated region
        $region77: #{tf_model_forward.1} parent=67 // pred_check
          %p786 = pneg %p227
        $region78: #{tf_model_forward.1} parent=67 // pred_check_branch
          %788 = sbr.rel (%p786) target = $region80
        $region79: #{tf_model_forward.1} parent=67 // pred_region
          %p789 = scmp.lt.s32.totalorder %s46, 1
          %s790 = scalar_select %p789, %s46, 1
          %s791 = smul.addr %s790, 4
          %s792 = smul.addr %s791, 8
          %s793 = scalar_lea.vmem %s7, %s792
        $region80: #{tf_model_forward.1} parent=67 // pred_fallthru
          _
        // Predicated region
        $region81: #{tf_model_forward.1} parent=67 // pred_check
          %p794 = pneg %p253
        $region82: #{tf_model_forward.1} parent=67 // pred_check_branch
          %796 = sbr.rel (%p794) target = $region84
        $region83: #{tf_model_forward.1} parent=67 // pred_region
          %p797 = scmp.lt.s32.totalorder %s46, 1
          %s798 = scalar_select %p797, %s46, 1
          %s799 = scalar_lea.vmem %s8, %s798
        $region84: #{tf_model_forward.1} parent=67 // pred_fallthru
          _
        // Predicated region
        $region85: #{tf_model_forward.1} parent=67 // pred_check
          %p800 = pneg %p279
        $region86: #{tf_model_forward.1} parent=67 // pred_check_branch
          %802 = sbr.rel (%p800) target = $region88
        $region87: #{tf_model_forward.1} parent=67 // pred_region
          %p803 = scmp.lt.s32.totalorder %s46, 1
          %s804 = scalar_select %p803, %s46, 1
          %s805 = smul.addr %s804, 4
          %s806 = smul.addr %s805, 8
          %s807 = scalar_lea.vmem %s9, %s806
        $region88: #{tf_model_forward.1} parent=67 // pred_fallthru
          _
        // Predicated region
        $region89: #{tf_model_forward.1} parent=67 // pred_check
          %p808 = pneg %p305
        $region90: #{tf_model_forward.1} parent=67 // pred_check_branch
          %810 = sbr.rel (%p808) target = $region92
        $region91: #{tf_model_forward.1} parent=67 // pred_region
          %p811 = scmp.lt.s32.totalorder %s46, 1
          %s812 = scalar_select %p811, %s46, 1
          %s813 = scalar_lea.vmem %s10, %s812
        $region92: #{tf_model_forward.1} parent=67 // pred_fallthru
          _
        // Predicated region
        $region93: #{tf_model_forward.1} parent=67 // pred_check
          %p814 = pneg %p331
        $region94: #{tf_model_forward.1} parent=67 // pred_check_branch
          %816 = sbr.rel (%p814) target = $region96
        $region95: #{tf_model_forward.1} parent=67 // pred_region
          %p817 = scmp.lt.s32.totalorder %s46, 1
          %s818 = scalar_select %p817, %s46, 1
          %s819 = smul.addr %s818, 64
          %s820 = smul.addr %s819, 8
          %s821 = scalar_lea.vmem %s11, %s820
        $region96: #{tf_model_forward.1} parent=67 // pred_fallthru
          _
        // Predicated region
        $region97: #{tf_model_forward.1} parent=67 // pred_check
          %p822 = pneg %p357
        $region98: #{tf_model_forward.1} parent=67 // pred_check_branch
          %824 = sbr.rel (%p822) target = $region100
        $region99: #{tf_model_forward.1} parent=67 // pred_region
          %p825 = scmp.lt.s32.totalorder %s46, 1
          %s826 = scalar_select %p825, %s46, 1
          %s827 = smul.addr %s826, 16
          %s828 = scalar_lea.vmem %s12, %s827
        $region100: #{tf_model_forward.1} parent=67 // pred_fallthru
          _
        // Predicated region
        $region101: #{tf_model_forward.1} parent=67 // pred_check
          %p829 = pneg %p383
        $region102: #{tf_model_forward.1} parent=67 // pred_check_branch
          %831 = sbr.rel (%p829) target = $region104
        $region103: #{tf_model_forward.1} parent=67 // pred_region
          %p832 = scmp.lt.s32.totalorder %s46, 1
          %s833 = scalar_select %p832, %s46, 1
          %s834 = smul.addr %s833, 256
          %s835 = smul.addr %s834, 8
          %s836 = scalar_lea.vmem %s13, %s835
        $region104: #{tf_model_forward.1} parent=67 // pred_fallthru
          _
        // Predicated region
        $region105: #{tf_model_forward.1} parent=67 // pred_check
          %p837 = pneg %p409
        $region106: #{tf_model_forward.1} parent=67 // pred_check_branch
          %839 = sbr.rel (%p837) target = $region108
        $region107: #{tf_model_forward.1} parent=67 // pred_region
          %p840 = scmp.lt.s32.totalorder %s46, 1
          %s841 = scalar_select %p840, %s46, 1
          %s842 = scalar_lea.vmem %s14, %s841
        $region108: #{tf_model_forward.1} parent=67 // pred_fallthru
          _
        // Predicated region
        $region109: #{tf_model_forward.1} parent=67 // pred_check
          %p843 = pneg %p435
        $region110: #{tf_model_forward.1} parent=67 // pred_check_branch
          %845 = sbr.rel (%p843) target = $region112
        $region111: #{tf_model_forward.1} parent=67 // pred_region
          %p846 = scmp.lt.s32.totalorder %s46, 1
          %s847 = scalar_select %p846, %s46, 1
          %s848 = scalar_lea.vmem %s15, %s847
        $region112: #{tf_model_forward.1} parent=67 // pred_fallthru
          _
        // Predicated region
        $region113: #{tf_model_forward.1} parent=67 // pred_check
          %p849 = pneg %p461
        $region114: #{tf_model_forward.1} parent=67 // pred_check_branch
          %851 = sbr.rel (%p849) target = $region116
        $region115: #{tf_model_forward.1} parent=67 // pred_region
          %p852 = scmp.lt.s32.totalorder %s46, 1
          %s853 = scalar_select %p852, %s46, 1
          %s854 = scalar_lea.vmem %s16, %s853
        $region116: #{tf_model_forward.1} parent=67 // pred_fallthru
          _
        // Predicated region
        $region117: #{tf_model_forward.1} parent=67 // pred_check
          %p855 = pneg %p487
        $region118: #{tf_model_forward.1} parent=67 // pred_check_branch
          %857 = sbr.rel (%p855) target = $region120
        $region119: #{tf_model_forward.1} parent=67 // pred_region
          %p858 = scmp.lt.s32.totalorder %s46, 1
          %s859 = scalar_select %p858, %s46, 1
          %s860 = scalar_lea.vmem %s17, %s859
        $region120: #{tf_model_forward.1} parent=67 // pred_fallthru
          _
        // Predicated region
        $region121: #{tf_model_forward.1} parent=67 // pred_check
          %p861 = pneg %p513
        $region122: #{tf_model_forward.1} parent=67 // pred_check_branch
          %863 = sbr.rel (%p861) target = $region124
        $region123: #{tf_model_forward.1} parent=67 // pred_region
          %p864 = scmp.lt.s32.totalorder %s46, 1
          %s865 = scalar_select %p864, %s46, 1
          %s866 = scalar_lea.vmem %s18, %s865
        $region124: #{tf_model_forward.1} parent=67 // pred_fallthru
          _
      $region68: #{tf_model_forward.1} parent=5 // pred_fallthru
        _
      %p867 = scmp.le.s32.totalorder 1, %s38
      %p868 = scmp.lt.s32.totalorder %s38, 5
      %p869 = pnand %p867, %p868
      %p870 = pneg %p869
      // Predicated region
      $region125: #{tf_model_forward.1} parent=5 // pred_check
        _
      $region126: #{tf_model_forward.1} parent=5 // pred_check_branch
        %872 = sbr.rel (%p869) target = $region128
      $region127: #{tf_model_forward.1} parent=5 // pred_region
        %s873 = ssub.s32 %s38, 1
        %s874 = smul.u32 2, %s47
        %p875 = scmp.lt.s32.totalorder %s874, 3
        %s876 = scalar_select %p875, %s874, 3
        %s877 = smul.addr %s876, 8
        %s878 = scalar_lea.vmem %s0, %s877
        %p879 = pneg %p76
        %p880 = pneg %p73
        %p881 = scmp.lt.s32.totalorder %s47, 1
        %s882 = scalar_select %p881, %s47, 1
        %s883 = scalar_lea.vmem %s1, %s882
        %p884 = pneg %p102
        %p885 = pneg %p99
        %p886 = pneg %p123
        %p887 = pneg %p120
        %p888 = pneg %p144
        %p889 = pneg %p141
        %p890 = pneg %p165
        %p891 = pneg %p162
        %p892 = pneg %p186
        %p893 = pneg %p183
        %p894 = pneg %p207
        %p895 = pneg %p204
        %p896 = scmp.lt.s32.totalorder %s48, 1
        %s897 = scalar_select %p896, %s48, 1
        %s898 = smul.addr %s897, 4
        %s899 = smul.addr %s898, 8
        %s900 = scalar_lea.vmem %s7, %s899
        %p901 = pneg %p233
        %p902 = pneg %p230
        %p903 = scmp.lt.s32.totalorder %s48, 1
        %s904 = scalar_select %p903, %s48, 1
        %s905 = scalar_lea.vmem %s8, %s904
        %p906 = pneg %p259
        %p907 = pneg %p256
        %p908 = scmp.lt.s32.totalorder %s48, 1
        %s909 = scalar_select %p908, %s48, 1
        %s910 = smul.addr %s909, 4
        %s911 = smul.addr %s910, 8
        %s912 = scalar_lea.vmem %s9, %s911
        %p913 = pneg %p285
        %p914 = pneg %p282
        %p915 = scmp.lt.s32.totalorder %s48, 1
        %s916 = scalar_select %p915, %s48, 1
        %s917 = scalar_lea.vmem %s10, %s916
        %p918 = pneg %p311
        %p919 = pneg %p308
        %p920 = scmp.lt.s32.totalorder %s48, 1
        %s921 = scalar_select %p920, %s48, 1
        %s922 = smul.addr %s921, 64
        %s923 = smul.addr %s922, 8
        %s924 = scalar_lea.vmem %s11, %s923
        %p925 = pneg %p337
        %p926 = pneg %p334
        %p927 = scmp.lt.s32.totalorder %s48, 1
        %s928 = scalar_select %p927, %s48, 1
        %s929 = smul.addr %s928, 16
        %s930 = scalar_lea.vmem %s12, %s929
        %p931 = pneg %p363
        %p932 = pneg %p360
        %p933 = scmp.lt.s32.totalorder %s48, 1
        %s934 = scalar_select %p933, %s48, 1
        %s935 = smul.addr %s934, 256
        %s936 = smul.addr %s935, 8
        %s937 = scalar_lea.vmem %s13, %s936
        %p938 = pneg %p389
        %p939 = pneg %p386
        %p940 = scmp.lt.s32.totalorder %s48, 1
        %s941 = scalar_select %p940, %s48, 1
        %s942 = scalar_lea.vmem %s14, %s941
        %p943 = pneg %p415
        %p944 = pneg %p412
        %p945 = scmp.lt.s32.totalorder %s48, 1
        %s946 = scalar_select %p945, %s48, 1
        %s947 = scalar_lea.vmem %s15, %s946
        %p948 = pneg %p441
        %p949 = pneg %p438
        %p950 = scmp.lt.s32.totalorder %s48, 1
        %s951 = scalar_select %p950, %s48, 1
        %s952 = scalar_lea.vmem %s16, %s951
        %p953 = pneg %p467
        %p954 = pneg %p464
        %p955 = scmp.lt.s32.totalorder %s48, 1
        %s956 = scalar_select %p955, %s48, 1
        %s957 = scalar_lea.vmem %s17, %s956
        %p958 = pneg %p493
        %p959 = pneg %p490
        %p960 = scmp.lt.s32.totalorder %s48, 1
        %s961 = scalar_select %p960, %s48, 1
        %s962 = scalar_lea.vmem %s18, %s961
        %p963 = pneg %p519
        %p964 = pneg %p516
        %p965 = pneg %p540
        %p966 = pneg %p537
        %p967 = pneg %p561
        %p968 = pneg %p558
        %p969 = pneg %p582
        %p970 = pneg %p579
        %p971 = pneg %p603
        %p972 = pneg %p600
        %p973 = pneg %p624
        %p974 = pneg %p621
        %p975 = pneg %p645
        %p976 = pneg %p642
        %p977 = pneg %p666
        %p978 = pneg %p663
        %p979 = pneg %p687
        %p980 = pneg %p684
        %p981 = pneg %p713
        %p982 = pneg %p710
        %s983 = sand.u32 %s700, 1
        %s984 = scalar_lea.sflag [#allocation6], %s983
        %s985 = sand.u32 %s700, 1
        %s986 = scalar_lea.vmem [#allocation5], %s985
        %s987 = smul.u32 2, %s47
        %p988 = scmp.lt.s32.totalorder %s987, 3
        %s989 = scalar_select %p988, %s987, 3
        %s990 = smul.addr %s989, 8
        %s991 = scalar_lea.vmem %s0, %s990
        %s992 = smul.u32 2, %s47
        %p993 = scmp.lt.s32.totalorder %s47, 1
        %s994 = scalar_select %p993, %s47, 1
        %s995 = scalar_lea.vmem %s1, %s994
        %p996 = scmp.lt.s32.totalorder %s48, 1
        %s997 = scalar_select %p996, %s48, 1
        %s998 = smul.addr %s997, 4
        %s999 = smul.addr %s998, 8
        %s1000 = scalar_lea.vmem %s7, %s999
        %p1001 = scmp.lt.s32.totalorder %s48, 1
        %s1002 = scalar_select %p1001, %s48, 1
        %s1003 = scalar_lea.vmem %s8, %s1002
        %p1004 = scmp.lt.s32.totalorder %s48, 1
        %s1005 = scalar_select %p1004, %s48, 1
        %s1006 = smul.addr %s1005, 4
        %s1007 = smul.addr %s1006, 8
        %s1008 = scalar_lea.vmem %s9, %s1007
        %p1009 = scmp.lt.s32.totalorder %s48, 1
        %s1010 = scalar_select %p1009, %s48, 1
        %s1011 = scalar_lea.vmem %s10, %s1010
        %p1012 = scmp.lt.s32.totalorder %s48, 1
        %s1013 = scalar_select %p1012, %s48, 1
        %s1014 = smul.addr %s1013, 64
        %s1015 = smul.addr %s1014, 8
        %s1016 = scalar_lea.vmem %s11, %s1015
        %p1017 = scmp.lt.s32.totalorder %s48, 1
        %s1018 = scalar_select %p1017, %s48, 1
        %s1019 = smul.addr %s1018, 16
        %s1020 = scalar_lea.vmem %s12, %s1019
        %p1021 = scmp.lt.s32.totalorder %s48, 1
        %s1022 = scalar_select %p1021, %s48, 1
        %s1023 = smul.addr %s1022, 256
        %s1024 = smul.addr %s1023, 8
        %s1025 = scalar_lea.vmem %s13, %s1024
        %p1026 = scmp.lt.s32.totalorder %s48, 1
        %s1027 = scalar_select %p1026, %s48, 1
        %s1028 = scalar_lea.vmem %s14, %s1027
        %p1029 = scmp.lt.s32.totalorder %s48, 1
        %s1030 = scalar_select %p1029, %s48, 1
        %s1031 = scalar_lea.vmem %s15, %s1030
        %p1032 = scmp.lt.s32.totalorder %s48, 1
        %s1033 = scalar_select %p1032, %s48, 1
        %s1034 = scalar_lea.vmem %s16, %s1033
        %p1035 = scmp.lt.s32.totalorder %s48, 1
        %s1036 = scalar_select %p1035, %s48, 1
        %s1037 = scalar_lea.vmem %s17, %s1036
        %p1038 = scmp.lt.s32.totalorder %s48, 1
        %s1039 = scalar_select %p1038, %s48, 1
        %s1040 = scalar_lea.vmem %s18, %s1039
        %p1041 = scmp.eq.s32.totalorder %s48, 0
        // Predicated region
        $region129: #{tf_model_forward.1} parent=127 // pred_check
          %p1042 = pneg %p1041
        $region130: #{tf_model_forward.1} parent=127 // pred_check_branch
          %1044 = sbr.rel (%p1042) target = $region132
        $region131: #{tf_model_forward.1} parent=127 // pred_region
          %v1045 = vld [vmem:[%s991] sm:$0xff]
          %v1046 = vld [vmem:[%s991 + $0x8] sm:$0xff]
          %v1047 = vld [vmem:[%s3] sm:$0x1]
          %1049 = vset.pattern.permute.xlu0 0
          %1050 = vperm.xlu0 %1049, %v1045
          %v1051 = vpop.permute.xlu0 %1050
          %1054 = vset.pattern.permute.xlu0 0
          %1055 = vperm.xlu0 %1054, %v1046
          %v1056 = vpop.permute.xlu0 %1055
          %v1059 = vlaneseq
          %v1060 = vshrl.u32 %v1059, 7
          %v1061 = vsub.s32 0, %v1060
          %v1062 = vrot.slane %v1047, %v1061
          %v1064 = vmul.f32 %v1051, %v1062
          %v1065 = vmul.f32 %v1056, %v1062
          %v1066 = vld [vmem:[%s4] sm:$0x1]
          %v1068 = vlaneseq
          %v1069 = vshrl.u32 %v1068, 7
          %v1070 = vsub.s32 0, %v1069
          %v1071 = vrot.slane %v1066, %v1070
          %v1073 = vadd.f32 %v1064, %v1071
          %v1074 = vadd.f32 %v1065, %v1071
          %v1075 = vmax.f32 %v1073, 0.0
          %v1076 = vmax.f32 %v1074, 0.0
          %v1077 = vld [vmem:[%s5] sm:$0xff]
          %v1078 = vld [vmem:[%s5 + $0x8] sm:$0xff]
          %v1079 = vld [vmem:[%s6] sm:$0x1]
          %v1081 = vlaneseq
          %v1082 = vshrl.u32 %v1081, 7
          %v1083 = vsub.s32 0, %v1082
          %v1084 = vrot.slane %v1079, %v1083
          %vm1086 = vcmask 130048
          %v1088 = vsel %vm1086, %v1075, 0
          %v1091 = vsel %vm1086, %v1076, 0
          %1093 = vmatprep.subr.mxu0 0.0
          %1094 = vmatpush1.msra.mxu0 %v1077
          %1095 = vmatprep.subr.mxu0 0.0
          %1096 = vmatpush1.msra.mxu0 %v1078
          %1097 = vmatprep.subr.mxu0 0.0
          %1098 = vmatpush1.msra.mxu0 0.0
          %1099 = vmatprep.subr.mxu0 0.0
          %1100 = vmatpush1.msra.mxu0 0.0
          %1101 = vmatprep.subr.mxu0 0.0
          %1102 = vmatpush1.msra.mxu0 0.0
          %1103 = vmatprep.subr.mxu0 0.0
          %1104 = vmatpush1.msra.mxu0 0.0
          %1105 = vmatprep.subr.mxu0 0.0
          %1106 = vmatpush1.msra.mxu0 0.0
          %1107 = vmatprep.subr.mxu0 0.0
          %1108 = vmatpush1.msra.mxu0 0.0
          %1109 = vmatprep.subr.mxu0 0.0
          %1110 = vmatpush1.msra.mxu0 0.0
          %1111 = vmatprep.subr.mxu0 0.0
          %1112 = vmatpush1.msra.mxu0 0.0
          %1113 = vmatprep.subr.mxu0 0.0
          %1114 = vmatpush1.msra.mxu0 0.0
          %1115 = vmatprep.subr.mxu0 0.0
          %1116 = vmatpush1.msra.mxu0 0.0
          %1117 = vmatprep.subr.mxu0 0.0
          %1118 = vmatpush1.msra.mxu0 0.0
          %1119 = vmatprep.subr.mxu0 0.0
          %1120 = vmatpush1.msra.mxu0 0.0
          %1121 = vmatprep.subr.mxu0 0.0
          %1122 = vmatpush1.msra.mxu0 0.0
          %1123 = vmatprep.subr.mxu0 0.0
          %1124 = vmatpush1.msra.mxu0 0.0
          %1125 = vmatprep.subr.mxu0 0.0
          %1126 = vmatpush1.msra.mxu0 0.0
          %1127 = vmatprep.subr.mxu0 0.0
          %1128 = vmatpush1.msra.mxu0 0.0
          %1129 = vmatprep.subr.mxu0 0.0
          %1130 = vmatpush1.msra.mxu0 0.0
          %1131 = vmatprep.subr.mxu0 0.0
          %1132 = vmatpush1.msra.mxu0 0.0
          %1133 = vmatprep.subr.mxu0 0.0
          %1134 = vmatpush1.msra.mxu0 0.0
          %1135 = vmatprep.subr.mxu0 0.0
          %1136 = vmatpush1.msra.mxu0 0.0
          %1137 = vmatprep.subr.mxu0 0.0
          %1138 = vmatpush1.msra.mxu0 0.0
          %1139 = vmatprep.subr.mxu0 0.0
          %1140 = vmatpush1.msra.mxu0 0.0
          %1141 = vmatprep.subr.mxu0 0.0
          %1142 = vmatpush1.msra.mxu0 0.0
          %1143 = vmatprep.subr.mxu0 0.0
          %1144 = vmatpush1.msra.mxu0 0.0
          %1145 = vmatprep.subr.mxu0 0.0
          %1146 = vmatpush1.msra.mxu0 0.0
          %1147 = vmatprep.subr.mxu0 0.0
          %1148 = vmatpush1.msra.mxu0 0.0
          %1149 = vmatprep.subr.mxu0 0.0
          %1150 = vmatpush1.msra.mxu0 0.0
          %1151 = vmatprep.subr.mxu0 0.0
          %1152 = vmatpush1.msra.mxu0 0.0
          %1153 = vmatprep.subr.mxu0 0.0
          %1154 = vmatpush1.msra.mxu0 0.0
          %1155 = vmatprep.subr.mxu0 0.0
          %1156 = vmatpush1.msra.mxu0 0.0
          %1157 = vmatprep.mubr.f32.mxu0 0.0
          %1158 = vmatmul.mubr.f32.gmra.mrb[0].mxu0 %v1088
          %v1159 = vpop.f32.mrb[0].mxu0
          %v1160 = vadd.f32 %v1084, %v1159
          %v1161 = vpop.f32.mrb[0].mxu0
          %1162 = vmatprep.mubr.f32.mxu0 0.0
          %1163 = vmatmul.mubr.f32.gmra.mrb[0].mxu0 %v1091
          %v1164 = vpop.f32.mrb[0].mxu0
          %v1165 = vadd.f32 %v1084, %v1164
          %v1166 = vpop.f32.mrb[0].mxu0
          %1167 = vdwg.mxu0
          %v1168 = vld [vmem:[%s995] sm:$0x1]
          %v1170 = vlaneseq
          %v1171 = vshrl.u32 %v1170, 7
          %v1172 = vsub.s32 0, %v1171
          %v1173 = vrot.slane %v1168, %v1172
          %v1175 = vadd.f32 %v1160, %v1173
          %v1176 = vadd.f32 %v1165, %v1173
          %vm1177 = vcmask 261120
          %1178 = vst.msk [vmem:[#allocation3] sm:$0xff] %vm1177, %v1175
          %1179 = vst.msk [vmem:[#allocation3 + $0x8] sm:$0xff] %vm1177, %v1176
        $region132: #{tf_model_forward.1} parent=127 // pred_fallthru
          _
        %v1180 = vld [vmem:[#allocation3] sm:$0xff]
        %v1181 = vld [vmem:[#allocation3 + $0x8] sm:$0xff]
        %v1182 = vld [vmem:[%s2] sm:$0xff]
        %v1183 = vld [vmem:[%s2 + $0x8] sm:$0xff]
        %v1184 = vld [vmem:[%s1000] sm:$0xff]
        %v1185 = vld [vmem:[%s1000 + $0x8] sm:$0xff]
        %v1186 = vld [vmem:[%s1000 + $0x10] sm:$0xff]
        %v1187 = vld [vmem:[%s1000 + $0x18] sm:$0xff]
        %v1188 = vld [vmem:[%s1003] sm:$0x1]
        %v1190 = vlaneseq
        %v1191 = vshrl.u32 %v1190, 7
        %v1192 = vsub.s32 0, %v1191
        %v1193 = vrot.slane %v1188, %v1192
        %vm1195 = vcmask 261120
        %v1197 = vsel %vm1195, %v1180, 0
        %v1200 = vsel %vm1195, %v1181, 0
        %1202 = vmatprep.subr.mxu0 0.0
        %1203 = vmatpush1.msra.mxu0 %v1184
        %1204 = vmatprep.subr.mxu0 0.0
        %1205 = vmatpush1.msra.mxu0 %v1185
        %1206 = vmatprep.subr.mxu0 0.0
        %1207 = vmatpush1.msra.mxu0 %v1186
        %1208 = vmatprep.subr.mxu0 0.0
        %1209 = vmatpush1.msra.mxu0 %v1187
        %1210 = vmatprep.subr.mxu0 0.0
        %1211 = vmatpush1.msra.mxu0 0.0
        %1212 = vmatprep.subr.mxu0 0.0
        %1213 = vmatpush1.msra.mxu0 0.0
        %1214 = vmatprep.subr.mxu0 0.0
        %1215 = vmatpush1.msra.mxu0 0.0
        %1216 = vmatprep.subr.mxu0 0.0
        %1217 = vmatpush1.msra.mxu0 0.0
        %1218 = vmatprep.subr.mxu0 0.0
        %1219 = vmatpush1.msra.mxu0 0.0
        %1220 = vmatprep.subr.mxu0 0.0
        %1221 = vmatpush1.msra.mxu0 0.0
        %1222 = vmatprep.subr.mxu0 0.0
        %1223 = vmatpush1.msra.mxu0 0.0
        %1224 = vmatprep.subr.mxu0 0.0
        %1225 = vmatpush1.msra.mxu0 0.0
        %1226 = vmatprep.subr.mxu0 0.0
        %1227 = vmatpush1.msra.mxu0 0.0
        %1228 = vmatprep.subr.mxu0 0.0
        %1229 = vmatpush1.msra.mxu0 0.0
        %1230 = vmatprep.subr.mxu0 0.0
        %1231 = vmatpush1.msra.mxu0 0.0
        %1232 = vmatprep.subr.mxu0 0.0
        %1233 = vmatpush1.msra.mxu0 0.0
        %1234 = vmatprep.subr.mxu0 0.0
        %1235 = vmatpush1.msra.mxu0 0.0
        %1236 = vmatprep.subr.mxu0 0.0
        %1237 = vmatpush1.msra.mxu0 0.0
        %1238 = vmatprep.subr.mxu0 0.0
        %1239 = vmatpush1.msra.mxu0 0.0
        %1240 = vmatprep.subr.mxu0 0.0
        %1241 = vmatpush1.msra.mxu0 0.0
        %1242 = vmatprep.subr.mxu0 0.0
        %1243 = vmatpush1.msra.mxu0 0.0
        %1244 = vmatprep.subr.mxu0 0.0
        %1245 = vmatpush1.msra.mxu0 0.0
        %1246 = vmatprep.subr.mxu0 0.0
        %1247 = vmatpush1.msra.mxu0 0.0
        %1248 = vmatprep.subr.mxu0 0.0
        %1249 = vmatpush1.msra.mxu0 0.0
        %1250 = vmatprep.subr.mxu0 0.0
        %1251 = vmatpush1.msra.mxu0 0.0
        %1252 = vmatprep.subr.mxu0 0.0
        %1253 = vmatpush1.msra.mxu0 0.0
        %1254 = vmatprep.subr.mxu0 0.0
        %1255 = vmatpush1.msra.mxu0 0.0
        %1256 = vmatprep.subr.mxu0 0.0
        %1257 = vmatpush1.msra.mxu0 0.0
        %1258 = vmatprep.subr.mxu0 0.0
        %1259 = vmatpush1.msra.mxu0 0.0
        %1260 = vmatprep.subr.mxu0 0.0
        %1261 = vmatpush1.msra.mxu0 0.0
        %1262 = vmatprep.subr.mxu0 0.0
        %1263 = vmatpush1.msra.mxu0 0.0
        %1264 = vmatprep.subr.mxu0 0.0
        %1265 = vmatpush1.msra.mxu0 0.0
        %1266 = vmatprep.mubr.f32.mxu0 0.0
        %1267 = vmatmul.mubr.f32.gmra.mrb[0].mxu0 %v1197
        %v1268 = vpop.f32.mrb[0].mxu0
        %v1269 = vadd.f32 %v1193, %v1268
        %v1270 = vpop.f32.mrb[0].mxu0
        %1271 = vmatprep.mubr.f32.mxu0 0.0
        %1272 = vmatmul.mubr.f32.gmra.mrb[0].mxu0 %v1200
        %v1273 = vpop.f32.mrb[0].mxu0
        %v1274 = vadd.f32 %v1193, %v1273
        %v1275 = vpop.f32.mrb[0].mxu0
        %1276 = vdwg.mxu0
        %1279 = vrot.lane.b32.xlu0 %v1269, 96
        %v1280 = vpop.permute.xlu0 %1279
        %1281 = vrot.lane.b32.xlu0 %v1274, 96
        %v1282 = vpop.permute.xlu0 %1281
        %vm1283 = vcmask 64512
        %v1284 = vsel %vm1283, %v1269, 0
        %v1286 = vsel %vm1283, %v1274, 0
        %v1288 = vsel %vm1283, %v1280, 0
        %v1290 = vsel %vm1283, %v1282, 0
        %1292 = vmatprep.subr.mxu0 0.0
        %1293 = vmatpush1.xpose.msra.mxu0 %v1288
        %1294 = vmatprep.subr.mxu0 0.0
        %1295 = vmatpush1.xpose.msra.mxu0 %v1290
        %1296 = vmatprep.subr.mxu0 0.0
        %1297 = vmatpush1.xpose.msra.mxu0 0.0
        %1298 = vmatprep.subr.mxu0 0.0
        %1299 = vmatpush1.xpose.msra.mxu0 0.0
        %1300 = vmatprep.subr.mxu0 0.0
        %1301 = vmatpush1.xpose.msra.mxu0 0.0
        %1302 = vmatprep.subr.mxu0 0.0
        %1303 = vmatpush1.xpose.msra.mxu0 0.0
        %1304 = vmatprep.subr.mxu0 0.0
        %1305 = vmatpush1.xpose.msra.mxu0 0.0
        %1306 = vmatprep.subr.mxu0 0.0
        %1307 = vmatpush1.xpose.msra.mxu0 0.0
        %1308 = vmatprep.subr.mxu0 0.0
        %1309 = vmatpush1.xpose.msra.mxu0 0.0
        %1310 = vmatprep.subr.mxu0 0.0
        %1311 = vmatpush1.xpose.msra.mxu0 0.0
        %1312 = vmatprep.subr.mxu0 0.0
        %1313 = vmatpush1.xpose.msra.mxu0 0.0
        %1314 = vmatprep.subr.mxu0 0.0
        %1315 = vmatpush1.xpose.msra.mxu0 0.0
        %1316 = vmatprep.subr.mxu0 0.0
        %1317 = vmatpush1.xpose.msra.mxu0 0.0
        %1318 = vmatprep.subr.mxu0 0.0
        %1319 = vmatpush1.xpose.msra.mxu0 0.0
        %1320 = vmatprep.subr.mxu0 0.0
        %1321 = vmatpush1.xpose.msra.mxu0 0.0
        %1322 = vmatprep.subr.mxu0 0.0
        %1323 = vmatpush1.xpose.msra.mxu0 0.0
        %1324 = vmatprep.subr.mxu0 0.0
        %1325 = vmatpush1.xpose.msra.mxu0 0.0
        %1326 = vmatprep.subr.mxu0 0.0
        %1327 = vmatpush1.xpose.msra.mxu0 0.0
        %1328 = vmatprep.subr.mxu0 0.0
        %1329 = vmatpush1.xpose.msra.mxu0 0.0
        %1330 = vmatprep.subr.mxu0 0.0
        %1331 = vmatpush1.xpose.msra.mxu0 0.0
        %1332 = vmatprep.subr.mxu0 0.0
        %1333 = vmatpush1.xpose.msra.mxu0 0.0
        %1334 = vmatprep.subr.mxu0 0.0
        %1335 = vmatpush1.xpose.msra.mxu0 0.0
        %1336 = vmatprep.subr.mxu0 0.0
        %1337 = vmatpush1.xpose.msra.mxu0 0.0
        %1338 = vmatprep.subr.mxu0 0.0
        %1339 = vmatpush1.xpose.msra.mxu0 0.0
        %1340 = vmatprep.subr.mxu0 0.0
        %1341 = vmatpush1.xpose.msra.mxu0 0.0
        %1342 = vmatprep.subr.mxu0 0.0
        %1343 = vmatpush1.xpose.msra.mxu0 0.0
        %1344 = vmatprep.subr.mxu0 0.0
        %1345 = vmatpush1.xpose.msra.mxu0 0.0
        %1346 = vmatprep.subr.mxu0 0.0
        %1347 = vmatpush1.xpose.msra.mxu0 0.0
        %1348 = vmatprep.subr.mxu0 0.0
        %1349 = vmatpush1.xpose.msra.mxu0 0.0
        %1350 = vmatprep.subr.mxu0 0.0
        %1351 = vmatpush1.xpose.msra.mxu0 0.0
        %1352 = vmatprep.subr.mxu0 0.0
        %1353 = vmatpush1.xpose.msra.mxu0 0.0
        %1354 = vmatprep.subr.mxu0 0.0
        %1355 = vmatpush1.xpose.msra.mxu0 0.0
        %1356 = vmatprep.mubr.f32.mxu0 0.0
        %1357 = vmatmul.mubr.f32.gmra.mrb[0].mxu0 %v1284
        %v1358 = vpop.f32.mrb[0].mxu0
        %v1359 = vadd.f32 0.0, %v1358
        %v1360 = vpop.f32.mrb[0].mxu0
        %1361 = vmatprep.mubr.f32.mxu0 0.0
        %1362 = vmatmul.mubr.f32.gmra.mrb[0].mxu0 %v1286
        %v1363 = vpop.f32.mrb[0].mxu0
        %v1364 = vadd.f32 0.0, %v1363
        %v1365 = vpop.f32.mrb[0].mxu0
        %1366 = vdwg.mxu0
        %v1367 = vmul.f32 %v1359, 0.35355338
        %v1368 = vmul.f32 %v1364, 0.35355338
        %v1369 = vadd.f32 %v1367, %v1182
        %v1370 = vadd.f32 %v1368, %v1183
        %vm1371 = vcmask 130048
        %v1372 = vsel %vm1371, %v1369, -inf
        %1373 = vmax.xlane.f32.xlu0 %v1372
        %v1374 = vpop.xlane.xlu0 %1373
        %v1375 = vsel %vm1371, %v1370, -inf
        %1376 = vmax.xlane.f32.xlu0 %v1375
        %v1377 = vpop.xlane.xlu0 %1376
        %v1378 = vsub.f32 %v1369, %v1374
        %v1379 = vsub.f32 %v1370, %v1377
        %v1380 = vmul.f32 %v1378, 1.442695
        %v1381 = vpow.pop %v1380
        %v1382 = vmul.f32 %v1379, 1.442695
        %v1383 = vpow.pop %v1382
        %v1384 = vsel %vm1371, %v1381, 0.0
        %1385 = vadd.xlane.f32.xlu0 %v1384
        %v1386 = vpop.xlane.xlu0 %1385
        %v1387 = vsel %vm1371, %v1383, 0.0
        %1388 = vadd.xlane.f32.xlu0 %v1387
        %v1389 = vpop.xlane.xlu0 %1388
        %v1390 = vrcp.pop %v1386
        %v1391 = vrcp.pop %v1389
        %v1392 = vmul.f32 %v1381, %v1390
        %v1393 = vmul.f32 %v1383, %v1391
        %1394 = vrot.lane.b32.xlu0 %v1269, 64
        %v1395 = vpop.permute.xlu0 %1394
        %1396 = vrot.lane.b32.xlu0 %v1274, 64
        %v1397 = vpop.permute.xlu0 %1396
        %v1401 = vsel %vm1371, %v1392, 0
        %v1404 = vsel %vm1371, %v1393, 0
        %1406 = vmatprep.subr.mxu0 0.0
        %1407 = vmatpush1.msra.mxu0 %v1395
        %1408 = vmatprep.subr.mxu0 0.0
        %1409 = vmatpush1.msra.mxu0 %v1397
        %1410 = vmatprep.subr.mxu0 0.0
        %1411 = vmatpush1.msra.mxu0 0.0
        %1412 = vmatprep.subr.mxu0 0.0
        %1413 = vmatpush1.msra.mxu0 0.0
        %1414 = vmatprep.subr.mxu0 0.0
        %1415 = vmatpush1.msra.mxu0 0.0
        %1416 = vmatprep.subr.mxu0 0.0
        %1417 = vmatpush1.msra.mxu0 0.0
        %1418 = vmatprep.subr.mxu0 0.0
        %1419 = vmatpush1.msra.mxu0 0.0
        %1420 = vmatprep.subr.mxu0 0.0
        %1421 = vmatpush1.msra.mxu0 0.0
        %1422 = vmatprep.subr.mxu0 0.0
        %1423 = vmatpush1.msra.mxu0 0.0
        %1424 = vmatprep.subr.mxu0 0.0
        %1425 = vmatpush1.msra.mxu0 0.0
        %1426 = vmatprep.subr.mxu0 0.0
        %1427 = vmatpush1.msra.mxu0 0.0
        %1428 = vmatprep.subr.mxu0 0.0
        %1429 = vmatpush1.msra.mxu0 0.0
        %1430 = vmatprep.subr.mxu0 0.0
        %1431 = vmatpush1.msra.mxu0 0.0
        %1432 = vmatprep.subr.mxu0 0.0
        %1433 = vmatpush1.msra.mxu0 0.0
        %1434 = vmatprep.subr.mxu0 0.0
        %1435 = vmatpush1.msra.mxu0 0.0
        %1436 = vmatprep.subr.mxu0 0.0
        %1437 = vmatpush1.msra.mxu0 0.0
        %1438 = vmatprep.subr.mxu0 0.0
        %1439 = vmatpush1.msra.mxu0 0.0
        %1440 = vmatprep.subr.mxu0 0.0
        %1441 = vmatpush1.msra.mxu0 0.0
        %1442 = vmatprep.subr.mxu0 0.0
        %1443 = vmatpush1.msra.mxu0 0.0
        %1444 = vmatprep.subr.mxu0 0.0
        %1445 = vmatpush1.msra.mxu0 0.0
        %1446 = vmatprep.subr.mxu0 0.0
        %1447 = vmatpush1.msra.mxu0 0.0
        %1448 = vmatprep.subr.mxu0 0.0
        %1449 = vmatpush1.msra.mxu0 0.0
        %1450 = vmatprep.subr.mxu0 0.0
        %1451 = vmatpush1.msra.mxu0 0.0
        %1452 = vmatprep.subr.mxu0 0.0
        %1453 = vmatpush1.msra.mxu0 0.0
        %1454 = vmatprep.subr.mxu0 0.0
        %1455 = vmatpush1.msra.mxu0 0.0
        %1456 = vmatprep.subr.mxu0 0.0
        %1457 = vmatpush1.msra.mxu0 0.0
        %1458 = vmatprep.subr.mxu0 0.0
        %1459 = vmatpush1.msra.mxu0 0.0
        %1460 = vmatprep.subr.mxu0 0.0
        %1461 = vmatpush1.msra.mxu0 0.0
        %1462 = vmatprep.subr.mxu0 0.0
        %1463 = vmatpush1.msra.mxu0 0.0
        %1464 = vmatprep.subr.mxu0 0.0
        %1465 = vmatpush1.msra.mxu0 0.0
        %1466 = vmatprep.subr.mxu0 0.0
        %1467 = vmatpush1.msra.mxu0 0.0
        %1468 = vmatprep.subr.mxu0 0.0
        %1469 = vmatpush1.msra.mxu0 0.0
        %1470 = vmatprep.mubr.f32.mxu0 0.0
        %1471 = vmatmul.mubr.f32.gmra.mrb[0].mxu0 %v1401
        %v1472 = vpop.f32.mrb[0].mxu0
        %v1473 = vadd.f32 0.0, %v1472
        %v1474 = vpop.f32.mrb[0].mxu0
        %1475 = vmatprep.mubr.f32.mxu0 0.0
        %1476 = vmatmul.mubr.f32.gmra.mrb[0].mxu0 %v1404
        %v1477 = vpop.f32.mrb[0].mxu0
        %v1478 = vadd.f32 0.0, %v1477
        %v1479 = vpop.f32.mrb[0].mxu0
        %1480 = vdwg.mxu0
        %1481 = vst.msk [vmem:[#allocation2] sm:$0xff] %vm1283, %v1473
        %1482 = vst.msk [vmem:[#allocation2 + $0x8] sm:$0xff] %vm1283, %v1478
        %1483 = vrot.lane.b32.xlu0 %v1269, 120
        %v1484 = vpop.permute.xlu0 %1483
        %1485 = vrot.lane.b32.xlu0 %v1274, 120
        %v1486 = vpop.permute.xlu0 %1485
        %1487 = vrot.lane.b32.xlu0 %v1269, 88
        %v1488 = vpop.permute.xlu0 %1487
        %1489 = vrot.lane.b32.xlu0 %v1274, 88
        %v1490 = vpop.permute.xlu0 %1489
        %v1491 = vsel %vm1283, %v1484, 0
        %v1493 = vsel %vm1283, %v1486, 0
        %v1495 = vsel %vm1283, %v1488, 0
        %v1497 = vsel %vm1283, %v1490, 0
        %1499 = vmatprep.subr.mxu0 0.0
        %1500 = vmatpush1.xpose.msra.mxu0 %v1495
        %1501 = vmatprep.subr.mxu0 0.0
        %1502 = vmatpush1.xpose.msra.mxu0 %v1497
        %1503 = vmatprep.subr.mxu0 0.0
        %1504 = vmatpush1.xpose.msra.mxu0 0.0
        %1505 = vmatprep.subr.mxu0 0.0
        %1506 = vmatpush1.xpose.msra.mxu0 0.0
        %1507 = vmatprep.subr.mxu0 0.0
        %1508 = vmatpush1.xpose.msra.mxu0 0.0
        %1509 = vmatprep.subr.mxu0 0.0
        %1510 = vmatpush1.xpose.msra.mxu0 0.0
        %1511 = vmatprep.subr.mxu0 0.0
        %1512 = vmatpush1.xpose.msra.mxu0 0.0
        %1513 = vmatprep.subr.mxu0 0.0
        %1514 = vmatpush1.xpose.msra.mxu0 0.0
        %1515 = vmatprep.subr.mxu0 0.0
        %1516 = vmatpush1.xpose.msra.mxu0 0.0
        %1517 = vmatprep.subr.mxu0 0.0
        %1518 = vmatpush1.xpose.msra.mxu0 0.0
        %1519 = vmatprep.subr.mxu0 0.0
        %1520 = vmatpush1.xpose.msra.mxu0 0.0
        %1521 = vmatprep.subr.mxu0 0.0
        %1522 = vmatpush1.xpose.msra.mxu0 0.0
        %1523 = vmatprep.subr.mxu0 0.0
        %1524 = vmatpush1.xpose.msra.mxu0 0.0
        %1525 = vmatprep.subr.mxu0 0.0
        %1526 = vmatpush1.xpose.msra.mxu0 0.0
        %1527 = vmatprep.subr.mxu0 0.0
        %1528 = vmatpush1.xpose.msra.mxu0 0.0
        %1529 = vmatprep.subr.mxu0 0.0
        %1530 = vmatpush1.xpose.msra.mxu0 0.0
        %1531 = vmatprep.subr.mxu0 0.0
        %1532 = vmatpush1.xpose.msra.mxu0 0.0
        %1533 = vmatprep.subr.mxu0 0.0
        %1534 = vmatpush1.xpose.msra.mxu0 0.0
        %1535 = vmatprep.subr.mxu0 0.0
        %1536 = vmatpush1.xpose.msra.mxu0 0.0
        %1537 = vmatprep.subr.mxu0 0.0
        %1538 = vmatpush1.xpose.msra.mxu0 0.0
        %1539 = vmatprep.subr.mxu0 0.0
        %1540 = vmatpush1.xpose.msra.mxu0 0.0
        %1541 = vmatprep.subr.mxu0 0.0
        %1542 = vmatpush1.xpose.msra.mxu0 0.0
        %1543 = vmatprep.subr.mxu0 0.0
        %1544 = vmatpush1.xpose.msra.mxu0 0.0
        %1545 = vmatprep.subr.mxu0 0.0
        %1546 = vmatpush1.xpose.msra.mxu0 0.0
        %1547 = vmatprep.subr.mxu0 0.0
        %1548 = vmatpush1.xpose.msra.mxu0 0.0
        %1549 = vmatprep.subr.mxu0 0.0
        %1550 = vmatpush1.xpose.msra.mxu0 0.0
        %1551 = vmatprep.subr.mxu0 0.0
        %1552 = vmatpush1.xpose.msra.mxu0 0.0
        %1553 = vmatprep.subr.mxu0 0.0
        %1554 = vmatpush1.xpose.msra.mxu0 0.0
        %1555 = vmatprep.subr.mxu0 0.0
        %1556 = vmatpush1.xpose.msra.mxu0 0.0
        %1557 = vmatprep.subr.mxu0 0.0
        %1558 = vmatpush1.xpose.msra.mxu0 0.0
        %1559 = vmatprep.subr.mxu0 0.0
        %1560 = vmatpush1.xpose.msra.mxu0 0.0
        %1561 = vmatprep.subr.mxu0 0.0
        %1562 = vmatpush1.xpose.msra.mxu0 0.0
        %1563 = vmatprep.mubr.f32.mxu0 0.0
        %1564 = vmatmul.mubr.f32.gmra.mrb[0].mxu0 %v1491
        %v1565 = vpop.f32.mrb[0].mxu0
        %v1566 = vadd.f32 0.0, %v1565
        %v1567 = vpop.f32.mrb[0].mxu0
        %1568 = vmatprep.mubr.f32.mxu0 0.0
        %1569 = vmatmul.mubr.f32.gmra.mrb[0].mxu0 %v1493
        %v1570 = vpop.f32.mrb[0].mxu0
        %v1571 = vadd.f32 0.0, %v1570
        %v1572 = vpop.f32.mrb[0].mxu0
        %1573 = vdwg.mxu0
        %v1574 = vmul.f32 %v1566, 0.35355338
        %v1575 = vmul.f32 %v1571, 0.35355338
        %v1576 = vadd.f32 %v1574, %v1182
        %v1577 = vadd.f32 %v1575, %v1183
        %v1578 = vsel %vm1371, %v1576, -inf
        %1579 = vmax.xlane.f32.xlu0 %v1578
        %v1580 = vpop.xlane.xlu0 %1579
        %v1581 = vsel %vm1371, %v1577, -inf
        %1582 = vmax.xlane.f32.xlu0 %v1581
        %v1583 = vpop.xlane.xlu0 %1582
        %v1584 = vsub.f32 %v1576, %v1580
        %v1585 = vsub.f32 %v1577, %v1583
        %v1586 = vmul.f32 %v1584, 1.442695
        %v1587 = vpow.pop %v1586
        %v1588 = vmul.f32 %v1585, 1.442695
        %v1589 = vpow.pop %v1588
        %v1590 = vsel %vm1371, %v1587, 0.0
        %1591 = vadd.xlane.f32.xlu0 %v1590
        %v1592 = vpop.xlane.xlu0 %1591
        %v1593 = vsel %vm1371, %v1589, 0.0
        %1594 = vadd.xlane.f32.xlu0 %v1593
        %v1595 = vpop.xlane.xlu0 %1594
        %v1596 = vrcp.pop %v1592
        %v1597 = vrcp.pop %v1595
        %v1598 = vmul.f32 %v1587, %v1596
        %v1599 = vmul.f32 %v1589, %v1597
        %1600 = vrot.lane.b32.xlu0 %v1269, 56
        %v1601 = vpop.permute.xlu0 %1600
        %1602 = vrot.lane.b32.xlu0 %v1274, 56
        %v1603 = vpop.permute.xlu0 %1602
        %v1607 = vsel %vm1371, %v1598, 0
        %v1610 = vsel %vm1371, %v1599, 0
        %1612 = vmatprep.subr.mxu0 0.0
        %1613 = vmatpush1.msra.mxu0 %v1601
        %1614 = vmatprep.subr.mxu0 0.0
        %1615 = vmatpush1.msra.mxu0 %v1603
        %1616 = vmatprep.subr.mxu0 0.0
        %1617 = vmatpush1.msra.mxu0 0.0
        %1618 = vmatprep.subr.mxu0 0.0
        %1619 = vmatpush1.msra.mxu0 0.0
        %1620 = vmatprep.subr.mxu0 0.0
        %1621 = vmatpush1.msra.mxu0 0.0
        %1622 = vmatprep.subr.mxu0 0.0
        %1623 = vmatpush1.msra.mxu0 0.0
        %1624 = vmatprep.subr.mxu0 0.0
        %1625 = vmatpush1.msra.mxu0 0.0
        %1626 = vmatprep.subr.mxu0 0.0
        %1627 = vmatpush1.msra.mxu0 0.0
        %1628 = vmatprep.subr.mxu0 0.0
        %1629 = vmatpush1.msra.mxu0 0.0
        %1630 = vmatprep.subr.mxu0 0.0
        %1631 = vmatpush1.msra.mxu0 0.0
        %1632 = vmatprep.subr.mxu0 0.0
        %1633 = vmatpush1.msra.mxu0 0.0
        %1634 = vmatprep.subr.mxu0 0.0
        %1635 = vmatpush1.msra.mxu0 0.0
        %1636 = vmatprep.subr.mxu0 0.0
        %1637 = vmatpush1.msra.mxu0 0.0
        %1638 = vmatprep.subr.mxu0 0.0
        %1639 = vmatpush1.msra.mxu0 0.0
        %1640 = vmatprep.subr.mxu0 0.0
        %1641 = vmatpush1.msra.mxu0 0.0
        %1642 = vmatprep.subr.mxu0 0.0
        %1643 = vmatpush1.msra.mxu0 0.0
        %1644 = vmatprep.subr.mxu0 0.0
        %1645 = vmatpush1.msra.mxu0 0.0
        %1646 = vmatprep.subr.mxu0 0.0
        %1647 = vmatpush1.msra.mxu0 0.0
        %1648 = vmatprep.subr.mxu0 0.0
        %1649 = vmatpush1.msra.mxu0 0.0
        %1650 = vmatprep.subr.mxu0 0.0
        %1651 = vmatpush1.msra.mxu0 0.0
        %1652 = vmatprep.subr.mxu0 0.0
        %1653 = vmatpush1.msra.mxu0 0.0
        %1654 = vmatprep.subr.mxu0 0.0
        %1655 = vmatpush1.msra.mxu0 0.0
        %1656 = vmatprep.subr.mxu0 0.0
        %1657 = vmatpush1.msra.mxu0 0.0
        %1658 = vmatprep.subr.mxu0 0.0
        %1659 = vmatpush1.msra.mxu0 0.0
        %1660 = vmatprep.subr.mxu0 0.0
        %1661 = vmatpush1.msra.mxu0 0.0
        %1662 = vmatprep.subr.mxu0 0.0
        %1663 = vmatpush1.msra.mxu0 0.0
        %1664 = vmatprep.subr.mxu0 0.0
        %1665 = vmatpush1.msra.mxu0 0.0
        %1666 = vmatprep.subr.mxu0 0.0
        %1667 = vmatpush1.msra.mxu0 0.0
        %1668 = vmatprep.subr.mxu0 0.0
        %1669 = vmatpush1.msra.mxu0 0.0
        %1670 = vmatprep.subr.mxu0 0.0
        %1671 = vmatpush1.msra.mxu0 0.0
        %1672 = vmatprep.subr.mxu0 0.0
        %1673 = vmatpush1.msra.mxu0 0.0
        %1674 = vmatprep.subr.mxu0 0.0
        %1675 = vmatpush1.msra.mxu0 0.0
        %1676 = vmatprep.mubr.f32.mxu0 0.0
        %1677 = vmatmul.mubr.f32.gmra.mrb[0].mxu0 %v1607
        %v1678 = vpop.f32.mrb[0].mxu0
        %v1679 = vadd.f32 0.0, %v1678
        %v1680 = vpop.f32.mrb[0].mxu0
        %1681 = vmatprep.mubr.f32.mxu0 0.0
        %1682 = vmatmul.mubr.f32.gmra.mrb[0].mxu0 %v1610
        %v1683 = vpop.f32.mrb[0].mxu0
        %v1684 = vadd.f32 0.0, %v1683
        %v1685 = vpop.f32.mrb[0].mxu0
        %1686 = vdwg.mxu0
        %1689 = vrot.lane.b32.xlu0 %v1679, 8
        %v1690 = vpop.permute.xlu0 %1689
        %1691 = vrot.lane.b32.xlu0 %v1684, 8
        %v1692 = vpop.permute.xlu0 %1691
        %vm1695 = vcmask 130112
        %1696 = vst.msk [vmem:[#allocation2] sm:$0xff] %vm1695, %v1690
        %1697 = vst.msk [vmem:[#allocation2 + $0x8] sm:$0xff] %vm1695, %v1692
        %1698 = vrot.lane.b32.xlu0 %v1269, 112
        %v1699 = vpop.permute.xlu0 %1698
        %1700 = vrot.lane.b32.xlu0 %v1274, 112
        %v1701 = vpop.permute.xlu0 %1700
        %1702 = vrot.lane.b32.xlu0 %v1269, 80
        %v1703 = vpop.permute.xlu0 %1702
        %1704 = vrot.lane.b32.xlu0 %v1274, 80
        %v1705 = vpop.permute.xlu0 %1704
        %v1706 = vsel %vm1283, %v1699, 0
        %v1708 = vsel %vm1283, %v1701, 0
        %v1710 = vsel %vm1283, %v1703, 0
        %v1712 = vsel %vm1283, %v1705, 0
        %1714 = vmatprep.subr.mxu0 0.0
        %1715 = vmatpush1.xpose.msra.mxu0 %v1710
        %1716 = vmatprep.subr.mxu0 0.0
        %1717 = vmatpush1.xpose.msra.mxu0 %v1712
        %1718 = vmatprep.subr.mxu0 0.0
        %1719 = vmatpush1.xpose.msra.mxu0 0.0
        %1720 = vmatprep.subr.mxu0 0.0
        %1721 = vmatpush1.xpose.msra.mxu0 0.0
        %1722 = vmatprep.subr.mxu0 0.0
        %1723 = vmatpush1.xpose.msra.mxu0 0.0
        %1724 = vmatprep.subr.mxu0 0.0
        %1725 = vmatpush1.xpose.msra.mxu0 0.0
        %1726 = vmatprep.subr.mxu0 0.0
        %1727 = vmatpush1.xpose.msra.mxu0 0.0
        %1728 = vmatprep.subr.mxu0 0.0
        %1729 = vmatpush1.xpose.msra.mxu0 0.0
        %1730 = vmatprep.subr.mxu0 0.0
        %1731 = vmatpush1.xpose.msra.mxu0 0.0
        %1732 = vmatprep.subr.mxu0 0.0
        %1733 = vmatpush1.xpose.msra.mxu0 0.0
        %1734 = vmatprep.subr.mxu0 0.0
        %1735 = vmatpush1.xpose.msra.mxu0 0.0
        %1736 = vmatprep.subr.mxu0 0.0
        %1737 = vmatpush1.xpose.msra.mxu0 0.0
        %1738 = vmatprep.subr.mxu0 0.0
        %1739 = vmatpush1.xpose.msra.mxu0 0.0
        %1740 = vmatprep.subr.mxu0 0.0
        %1741 = vmatpush1.xpose.msra.mxu0 0.0
        %1742 = vmatprep.subr.mxu0 0.0
        %1743 = vmatpush1.xpose.msra.mxu0 0.0
        %1744 = vmatprep.subr.mxu0 0.0
        %1745 = vmatpush1.xpose.msra.mxu0 0.0
        %1746 = vmatprep.subr.mxu0 0.0
        %1747 = vmatpush1.xpose.msra.mxu0 0.0
        %1748 = vmatprep.subr.mxu0 0.0
        %1749 = vmatpush1.xpose.msra.mxu0 0.0
        %1750 = vmatprep.subr.mxu0 0.0
        %1751 = vmatpush1.xpose.msra.mxu0 0.0
        %1752 = vmatprep.subr.mxu0 0.0
        %1753 = vmatpush1.xpose.msra.mxu0 0.0
        %1754 = vmatprep.subr.mxu0 0.0
        %1755 = vmatpush1.xpose.msra.mxu0 0.0
        %1756 = vmatprep.subr.mxu0 0.0
        %1757 = vmatpush1.xpose.msra.mxu0 0.0
        %1758 = vmatprep.subr.mxu0 0.0
        %1759 = vmatpush1.xpose.msra.mxu0 0.0
        %1760 = vmatprep.subr.mxu0 0.0
        %1761 = vmatpush1.xpose.msra.mxu0 0.0
        %1762 = vmatprep.subr.mxu0 0.0
        %1763 = vmatpush1.xpose.msra.mxu0 0.0
        %1764 = vmatprep.subr.mxu0 0.0
        %1765 = vmatpush1.xpose.msra.mxu0 0.0
        %1766 = vmatprep.subr.mxu0 0.0
        %1767 = vmatpush1.xpose.msra.mxu0 0.0
        %1768 = vmatprep.subr.mxu0 0.0
        %1769 = vmatpush1.xpose.msra.mxu0 0.0
        %1770 = vmatprep.subr.mxu0 0.0
        %1771 = vmatpush1.xpose.msra.mxu0 0.0
        %1772 = vmatprep.subr.mxu0 0.0
        %1773 = vmatpush1.xpose.msra.mxu0 0.0
        %1774 = vmatprep.subr.mxu0 0.0
        %1775 = vmatpush1.xpose.msra.mxu0 0.0
        %1776 = vmatprep.subr.mxu0 0.0
        %1777 = vmatpush1.xpose.msra.mxu0 0.0
        %1778 = vmatprep.mubr.f32.mxu0 0.0
        %1779 = vmatmul.mubr.f32.gmra.mrb[0].mxu0 %v1706
        %v1780 = vpop.f32.mrb[0].mxu0
        %v1781 = vadd.f32 0.0, %v1780
        %v1782 = vpop.f32.mrb[0].mxu0
        %1783 = vmatprep.mubr.f32.mxu0 0.0
        %1784 = vmatmul.mubr.f32.gmra.mrb[0].mxu0 %v1708
        %v1785 = vpop.f32.mrb[0].mxu0
        %v1786 = vadd.f32 0.0, %v1785
        %v1787 = vpop.f32.mrb[0].mxu0
        %1788 = vdwg.mxu0
        %v1789 = vmul.f32 %v1781, 0.35355338
        %v1790 = vmul.f32 %v1786, 0.35355338
        %v1791 = vadd.f32 %v1789, %v1182
        %v1792 = vadd.f32 %v1790, %v1183
        %v1793 = vsel %vm1371, %v1791, -inf
        %1794 = vmax.xlane.f32.xlu0 %v1793
        %v1795 = vpop.xlane.xlu0 %1794
        %v1796 = vsel %vm1371, %v1792, -inf
        %1797 = vmax.xlane.f32.xlu0 %v1796
        %v1798 = vpop.xlane.xlu0 %1797
        %v1799 = vsub.f32 %v1791, %v1795
        %v1800 = vsub.f32 %v1792, %v1798
        %v1801 = vmul.f32 %v1799, 1.442695
        %v1802 = vpow.pop %v1801
        %v1803 = vmul.f32 %v1800, 1.442695
        %v1804 = vpow.pop %v1803
        %v1805 = vsel %vm1371, %v1802, 0.0
        %1806 = vadd.xlane.f32.xlu0 %v1805
        %v1807 = vpop.xlane.xlu0 %1806
        %v1808 = vsel %vm1371, %v1804, 0.0
        %1809 = vadd.xlane.f32.xlu0 %v1808
        %v1810 = vpop.xlane.xlu0 %1809
        %v1811 = vrcp.pop %v1807
        %v1812 = vrcp.pop %v1810
        %v1813 = vmul.f32 %v1802, %v1811
        %v1814 = vmul.f32 %v1804, %v1812
        %1815 = vrot.lane.b32.xlu0 %v1269, 48
        %v1816 = vpop.permute.xlu0 %1815
        %1817 = vrot.lane.b32.xlu0 %v1274, 48
        %v1818 = vpop.permute.xlu0 %1817
        %v1822 = vsel %vm1371, %v1813, 0
        %v1825 = vsel %vm1371, %v1814, 0
        %1827 = vmatprep.subr.mxu0 0.0
        %1828 = vmatpush1.msra.mxu0 %v1816
        %1829 = vmatprep.subr.mxu0 0.0
        %1830 = vmatpush1.msra.mxu0 %v1818
        %1831 = vmatprep.subr.mxu0 0.0
        %1832 = vmatpush1.msra.mxu0 0.0
        %1833 = vmatprep.subr.mxu0 0.0
        %1834 = vmatpush1.msra.mxu0 0.0
        %1835 = vmatprep.subr.mxu0 0.0
        %1836 = vmatpush1.msra.mxu0 0.0
        %1837 = vmatprep.subr.mxu0 0.0
        %1838 = vmatpush1.msra.mxu0 0.0
        %1839 = vmatprep.subr.mxu0 0.0
        %1840 = vmatpush1.msra.mxu0 0.0
        %1841 = vmatprep.subr.mxu0 0.0
        %1842 = vmatpush1.msra.mxu0 0.0
        %1843 = vmatprep.subr.mxu0 0.0
        %1844 = vmatpush1.msra.mxu0 0.0
        %1845 = vmatprep.subr.mxu0 0.0
        %1846 = vmatpush1.msra.mxu0 0.0
        %1847 = vmatprep.subr.mxu0 0.0
        %1848 = vmatpush1.msra.mxu0 0.0
        %1849 = vmatprep.subr.mxu0 0.0
        %1850 = vmatpush1.msra.mxu0 0.0
        %1851 = vmatprep.subr.mxu0 0.0
        %1852 = vmatpush1.msra.mxu0 0.0
        %1853 = vmatprep.subr.mxu0 0.0
        %1854 = vmatpush1.msra.mxu0 0.0
        %1855 = vmatprep.subr.mxu0 0.0
        %1856 = vmatpush1.msra.mxu0 0.0
        %1857 = vmatprep.subr.mxu0 0.0
        %1858 = vmatpush1.msra.mxu0 0.0
        %1859 = vmatprep.subr.mxu0 0.0
        %1860 = vmatpush1.msra.mxu0 0.0
        %1861 = vmatprep.subr.mxu0 0.0
        %1862 = vmatpush1.msra.mxu0 0.0
        %1863 = vmatprep.subr.mxu0 0.0
        %1864 = vmatpush1.msra.mxu0 0.0
        %1865 = vmatprep.subr.mxu0 0.0
        %1866 = vmatpush1.msra.mxu0 0.0
        %1867 = vmatprep.subr.mxu0 0.0
        %1868 = vmatpush1.msra.mxu0 0.0
        %1869 = vmatprep.subr.mxu0 0.0
        %1870 = vmatpush1.msra.mxu0 0.0
        %1871 = vmatprep.subr.mxu0 0.0
        %1872 = vmatpush1.msra.mxu0 0.0
        %1873 = vmatprep.subr.mxu0 0.0
        %1874 = vmatpush1.msra.mxu0 0.0
        %1875 = vmatprep.subr.mxu0 0.0
        %1876 = vmatpush1.msra.mxu0 0.0
        %1877 = vmatprep.subr.mxu0 0.0
        %1878 = vmatpush1.msra.mxu0 0.0
        %1879 = vmatprep.subr.mxu0 0.0
        %1880 = vmatpush1.msra.mxu0 0.0
        %1881 = vmatprep.subr.mxu0 0.0
        %1882 = vmatpush1.msra.mxu0 0.0
        %1883 = vmatprep.subr.mxu0 0.0
        %1884 = vmatpush1.msra.mxu0 0.0
        %1885 = vmatprep.subr.mxu0 0.0
        %1886 = vmatpush1.msra.mxu0 0.0
        %1887 = vmatprep.subr.mxu0 0.0
        %1888 = vmatpush1.msra.mxu0 0.0
        %1889 = vmatprep.subr.mxu0 0.0
        %1890 = vmatpush1.msra.mxu0 0.0
        %1891 = vmatprep.mubr.f32.mxu0 0.0
        %1892 = vmatmul.mubr.f32.gmra.mrb[0].mxu0 %v1822
        %v1893 = vpop.f32.mrb[0].mxu0
        %v1894 = vadd.f32 0.0, %v1893
        %v1895 = vpop.f32.mrb[0].mxu0
        %1896 = vmatprep.mubr.f32.mxu0 0.0
        %1897 = vmatmul.mubr.f32.gmra.mrb[0].mxu0 %v1825
        %v1898 = vpop.f32.mrb[0].mxu0
        %v1899 = vadd.f32 0.0, %v1898
        %v1900 = vpop.f32.mrb[0].mxu0
        %1901 = vdwg.mxu0
        %1904 = vrot.lane.b32.xlu0 %v1894, 16
        %v1905 = vpop.permute.xlu0 %1904
        %1906 = vrot.lane.b32.xlu0 %v1899, 16
        %v1907 = vpop.permute.xlu0 %1906
        %vm1910 = vcmask 195712
        %1911 = vst.msk [vmem:[#allocation2] sm:$0xff] %vm1910, %v1905
        %1912 = vst.msk [vmem:[#allocation2 + $0x8] sm:$0xff] %vm1910, %v1907
        %1913 = vrot.lane.b32.xlu0 %v1269, 104
        %v1914 = vpop.permute.xlu0 %1913
        %1915 = vrot.lane.b32.xlu0 %v1274, 104
        %v1916 = vpop.permute.xlu0 %1915
        %1917 = vrot.lane.b32.xlu0 %v1269, 72
        %v1918 = vpop.permute.xlu0 %1917
        %1919 = vrot.lane.b32.xlu0 %v1274, 72
        %v1920 = vpop.permute.xlu0 %1919
        %v1921 = vsel %vm1283, %v1914, 0
        %v1923 = vsel %vm1283, %v1916, 0
        %v1925 = vsel %vm1283, %v1918, 0
        %v1927 = vsel %vm1283, %v1920, 0
        %1929 = vmatprep.subr.mxu0 0.0
        %1930 = vmatpush1.xpose.msra.mxu0 %v1925
        %1931 = vmatprep.subr.mxu0 0.0
        %1932 = vmatpush1.xpose.msra.mxu0 %v1927
        %1933 = vmatprep.subr.mxu0 0.0
        %1934 = vmatpush1.xpose.msra.mxu0 0.0
        %1935 = vmatprep.subr.mxu0 0.0
        %1936 = vmatpush1.xpose.msra.mxu0 0.0
        %1937 = vmatprep.subr.mxu0 0.0
        %1938 = vmatpush1.xpose.msra.mxu0 0.0
        %1939 = vmatprep.subr.mxu0 0.0
        %1940 = vmatpush1.xpose.msra.mxu0 0.0
        %1941 = vmatprep.subr.mxu0 0.0
        %1942 = vmatpush1.xpose.msra.mxu0 0.0
        %1943 = vmatprep.subr.mxu0 0.0
        %1944 = vmatpush1.xpose.msra.mxu0 0.0
        %1945 = vmatprep.subr.mxu0 0.0
        %1946 = vmatpush1.xpose.msra.mxu0 0.0
        %1947 = vmatprep.subr.mxu0 0.0
        %1948 = vmatpush1.xpose.msra.mxu0 0.0
        %1949 = vmatprep.subr.mxu0 0.0
        %1950 = vmatpush1.xpose.msra.mxu0 0.0
        %1951 = vmatprep.subr.mxu0 0.0
        %1952 = vmatpush1.xpose.msra.mxu0 0.0
        %1953 = vmatprep.subr.mxu0 0.0
        %1954 = vmatpush1.xpose.msra.mxu0 0.0
        %1955 = vmatprep.subr.mxu0 0.0
        %1956 = vmatpush1.xpose.msra.mxu0 0.0
        %1957 = vmatprep.subr.mxu0 0.0
        %1958 = vmatpush1.xpose.msra.mxu0 0.0
        %1959 = vmatprep.subr.mxu0 0.0
        %1960 = vmatpush1.xpose.msra.mxu0 0.0
        %1961 = vmatprep.subr.mxu0 0.0
        %1962 = vmatpush1.xpose.msra.mxu0 0.0
        %1963 = vmatprep.subr.mxu0 0.0
        %1964 = vmatpush1.xpose.msra.mxu0 0.0
        %1965 = vmatprep.subr.mxu0 0.0
        %1966 = vmatpush1.xpose.msra.mxu0 0.0
        %1967 = vmatprep.subr.mxu0 0.0
        %1968 = vmatpush1.xpose.msra.mxu0 0.0
        %1969 = vmatprep.subr.mxu0 0.0
        %1970 = vmatpush1.xpose.msra.mxu0 0.0
        %1971 = vmatprep.subr.mxu0 0.0
        %1972 = vmatpush1.xpose.msra.mxu0 0.0
        %1973 = vmatprep.subr.mxu0 0.0
        %1974 = vmatpush1.xpose.msra.mxu0 0.0
        %1975 = vmatprep.subr.mxu0 0.0
        %1976 = vmatpush1.xpose.msra.mxu0 0.0
        %1977 = vmatprep.subr.mxu0 0.0
        %1978 = vmatpush1.xpose.msra.mxu0 0.0
        %1979 = vmatprep.subr.mxu0 0.0
        %1980 = vmatpush1.xpose.msra.mxu0 0.0
        %1981 = vmatprep.subr.mxu0 0.0
        %1982 = vmatpush1.xpose.msra.mxu0 0.0
        %1983 = vmatprep.subr.mxu0 0.0
        %1984 = vmatpush1.xpose.msra.mxu0 0.0
        %1985 = vmatprep.subr.mxu0 0.0
        %1986 = vmatpush1.xpose.msra.mxu0 0.0
        %1987 = vmatprep.subr.mxu0 0.0
        %1988 = vmatpush1.xpose.msra.mxu0 0.0
        %1989 = vmatprep.subr.mxu0 0.0
        %1990 = vmatpush1.xpose.msra.mxu0 0.0
        %1991 = vmatprep.subr.mxu0 0.0
        %1992 = vmatpush1.xpose.msra.mxu0 0.0
        %1993 = vmatprep.mubr.f32.mxu0 0.0
        %1994 = vmatmul.mubr.f32.gmra.mrb[0].mxu0 %v1921
        %v1995 = vpop.f32.mrb[0].mxu0
        %v1996 = vadd.f32 0.0, %v1995
        %v1997 = vpop.f32.mrb[0].mxu0
        %1998 = vmatprep.mubr.f32.mxu0 0.0
        %1999 = vmatmul.mubr.f32.gmra.mrb[0].mxu0 %v1923
        %v2000 = vpop.f32.mrb[0].mxu0
        %v2001 = vadd.f32 0.0, %v2000
        %v2002 = vpop.f32.mrb[0].mxu0
        %2003 = vdwg.mxu0
        %v2004 = vmul.f32 %v1996, 0.35355338
        %v2005 = vmul.f32 %v2001, 0.35355338
        %v2006 = vadd.f32 %v2004, %v1182
        %v2007 = vadd.f32 %v2005, %v1183
        %v2008 = vsel %vm1371, %v2006, -inf
        %2009 = vmax.xlane.f32.xlu0 %v2008
        %v2010 = vpop.xlane.xlu0 %2009
        %v2011 = vsel %vm1371, %v2007, -inf
        %2012 = vmax.xlane.f32.xlu0 %v2011
        %v2013 = vpop.xlane.xlu0 %2012
        %v2014 = vsub.f32 %v2006, %v2010
        %v2015 = vsub.f32 %v2007, %v2013
        %v2016 = vmul.f32 %v2014, 1.442695
        %v2017 = vpow.pop %v2016
        %v2018 = vmul.f32 %v2015, 1.442695
        %v2019 = vpow.pop %v2018
        %v2020 = vsel %vm1371, %v2017, 0.0
        %2021 = vadd.xlane.f32.xlu0 %v2020
        %v2022 = vpop.xlane.xlu0 %2021
        %v2023 = vsel %vm1371, %v2019, 0.0
        %2024 = vadd.xlane.f32.xlu0 %v2023
        %v2025 = vpop.xlane.xlu0 %2024
        %v2026 = vrcp.pop %v2022
        %v2027 = vrcp.pop %v2025
        %v2028 = vmul.f32 %v2017, %v2026
        %v2029 = vmul.f32 %v2019, %v2027
        %2030 = vrot.lane.b32.xlu0 %v1269, 40
        %v2031 = vpop.permute.xlu0 %2030
        %2032 = vrot.lane.b32.xlu0 %v1274, 40
        %v2033 = vpop.permute.xlu0 %2032
        %v2037 = vsel %vm1371, %v2028, 0
        %v2040 = vsel %vm1371, %v2029, 0
        %2042 = vmatprep.subr.mxu0 0.0
        %2043 = vmatpush1.msra.mxu0 %v2031
        %2044 = vmatprep.subr.mxu0 0.0
        %2045 = vmatpush1.msra.mxu0 %v2033
        %2046 = vmatprep.subr.mxu0 0.0
        %2047 = vmatpush1.msra.mxu0 0.0
        %2048 = vmatprep.subr.mxu0 0.0
        %2049 = vmatpush1.msra.mxu0 0.0
        %2050 = vmatprep.subr.mxu0 0.0
        %2051 = vmatpush1.msra.mxu0 0.0
        %2052 = vmatprep.subr.mxu0 0.0
        %2053 = vmatpush1.msra.mxu0 0.0
        %2054 = vmatprep.subr.mxu0 0.0
        %2055 = vmatpush1.msra.mxu0 0.0
        %2056 = vmatprep.subr.mxu0 0.0
        %2057 = vmatpush1.msra.mxu0 0.0
        %2058 = vmatprep.subr.mxu0 0.0
        %2059 = vmatpush1.msra.mxu0 0.0
        %2060 = vmatprep.subr.mxu0 0.0
        %2061 = vmatpush1.msra.mxu0 0.0
        %2062 = vmatprep.subr.mxu0 0.0
        %2063 = vmatpush1.msra.mxu0 0.0
        %2064 = vmatprep.subr.mxu0 0.0
        %2065 = vmatpush1.msra.mxu0 0.0
        %2066 = vmatprep.subr.mxu0 0.0
        %2067 = vmatpush1.msra.mxu0 0.0
        %2068 = vmatprep.subr.mxu0 0.0
        %2069 = vmatpush1.msra.mxu0 0.0
        %2070 = vmatprep.subr.mxu0 0.0
        %2071 = vmatpush1.msra.mxu0 0.0
        %2072 = vmatprep.subr.mxu0 0.0
        %2073 = vmatpush1.msra.mxu0 0.0
        %2074 = vmatprep.subr.mxu0 0.0
        %2075 = vmatpush1.msra.mxu0 0.0
        %2076 = vmatprep.subr.mxu0 0.0
        %2077 = vmatpush1.msra.mxu0 0.0
        %2078 = vmatprep.subr.mxu0 0.0
        %2079 = vmatpush1.msra.mxu0 0.0
        %2080 = vmatprep.subr.mxu0 0.0
        %2081 = vmatpush1.msra.mxu0 0.0
        %2082 = vmatprep.subr.mxu0 0.0
        %2083 = vmatpush1.msra.mxu0 0.0
        %2084 = vmatprep.subr.mxu0 0.0
        %2085 = vmatpush1.msra.mxu0 0.0
        %2086 = vmatprep.subr.mxu0 0.0
        %2087 = vmatpush1.msra.mxu0 0.0
        %2088 = vmatprep.subr.mxu0 0.0
        %2089 = vmatpush1.msra.mxu0 0.0
        %2090 = vmatprep.subr.mxu0 0.0
        %2091 = vmatpush1.msra.mxu0 0.0
        %2092 = vmatprep.subr.mxu0 0.0
        %2093 = vmatpush1.msra.mxu0 0.0
        %2094 = vmatprep.subr.mxu0 0.0
        %2095 = vmatpush1.msra.mxu0 0.0
        %2096 = vmatprep.subr.mxu0 0.0
        %2097 = vmatpush1.msra.mxu0 0.0
        %2098 = vmatprep.subr.mxu0 0.0
        %2099 = vmatpush1.msra.mxu0 0.0
        %2100 = vmatprep.subr.mxu0 0.0
        %2101 = vmatpush1.msra.mxu0 0.0
        %2102 = vmatprep.subr.mxu0 0.0
        %2103 = vmatpush1.msra.mxu0 0.0
        %2104 = vmatprep.subr.mxu0 0.0
        %2105 = vmatpush1.msra.mxu0 0.0
        %2106 = vmatprep.mubr.f32.mxu0 0.0
        %2107 = vmatmul.mubr.f32.gmra.mrb[0].mxu0 %v2037
        %v2108 = vpop.f32.mrb[0].mxu0
        %v2109 = vadd.f32 0.0, %v2108
        %v2110 = vpop.f32.mrb[0].mxu0
        %2111 = vmatprep.mubr.f32.mxu0 0.0
        %2112 = vmatmul.mubr.f32.gmra.mrb[0].mxu0 %v2040
        %v2113 = vpop.f32.mrb[0].mxu0
        %v2114 = vadd.f32 0.0, %v2113
        %v2115 = vpop.f32.mrb[0].mxu0
        %2116 = vdwg.mxu0
        %2119 = vrot.lane.b32.xlu0 %v2109, 24
        %v2120 = vpop.permute.xlu0 %2119
        %2121 = vrot.lane.b32.xlu0 %v2114, 24
        %v2122 = vpop.permute.xlu0 %2121
        %vm2125 = vcmask 261312
        %2126 = vst.msk [vmem:[#allocation2] sm:$0xff] %vm2125, %v2120
        %2127 = vst.msk [vmem:[#allocation2 + $0x8] sm:$0xff] %vm2125, %v2122
        %v2128 = vld [vmem:[#allocation2] sm:$0xff]
        %v2129 = vld [vmem:[#allocation2 + $0x8] sm:$0xff]
        %v2130 = vld [vmem:[%s1008] sm:$0xff]
        %v2131 = vld [vmem:[%s1008 + $0x8] sm:$0xff]
        %v2132 = vld [vmem:[%s1008 + $0x10] sm:$0xff]
        %v2133 = vld [vmem:[%s1008 + $0x18] sm:$0xff]
        %v2134 = vld [vmem:[%s1011] sm:$0x1]
        %v2136 = vlaneseq
        %v2137 = vshrl.u32 %v2136, 7
        %v2138 = vsub.s32 0, %v2137
        %v2139 = vrot.slane %v2134, %v2138
        %v2142 = vsel %vm1195, %v2128, 0
        %v2145 = vsel %vm1195, %v2129, 0
        %2147 = vmatprep.subr.mxu0 0.0
        %2148 = vmatpush1.msra.mxu0 %v2130
        %2149 = vmatprep.subr.mxu0 0.0
        %2150 = vmatpush1.msra.mxu0 %v2131
        %2151 = vmatprep.subr.mxu0 0.0
        %2152 = vmatpush1.msra.mxu0 %v2132
        %2153 = vmatprep.subr.mxu0 0.0
        %2154 = vmatpush1.msra.mxu0 %v2133
        %2155 = vmatprep.subr.mxu0 0.0
        %2156 = vmatpush1.msra.mxu0 0.0
        %2157 = vmatprep.subr.mxu0 0.0
        %2158 = vmatpush1.msra.mxu0 0.0
        %2159 = vmatprep.subr.mxu0 0.0
        %2160 = vmatpush1.msra.mxu0 0.0
        %2161 = vmatprep.subr.mxu0 0.0
        %2162 = vmatpush1.msra.mxu0 0.0
        %2163 = vmatprep.subr.mxu0 0.0
        %2164 = vmatpush1.msra.mxu0 0.0
        %2165 = vmatprep.subr.mxu0 0.0
        %2166 = vmatpush1.msra.mxu0 0.0
        %2167 = vmatprep.subr.mxu0 0.0
        %2168 = vmatpush1.msra.mxu0 0.0
        %2169 = vmatprep.subr.mxu0 0.0
        %2170 = vmatpush1.msra.mxu0 0.0
        %2171 = vmatprep.subr.mxu0 0.0
        %2172 = vmatpush1.msra.mxu0 0.0
        %2173 = vmatprep.subr.mxu0 0.0
        %2174 = vmatpush1.msra.mxu0 0.0
        %2175 = vmatprep.subr.mxu0 0.0
        %2176 = vmatpush1.msra.mxu0 0.0
        %2177 = vmatprep.subr.mxu0 0.0
        %2178 = vmatpush1.msra.mxu0 0.0
        %2179 = vmatprep.subr.mxu0 0.0
        %2180 = vmatpush1.msra.mxu0 0.0
        %2181 = vmatprep.subr.mxu0 0.0
        %2182 = vmatpush1.msra.mxu0 0.0
        %2183 = vmatprep.subr.mxu0 0.0
        %2184 = vmatpush1.msra.mxu0 0.0
        %2185 = vmatprep.subr.mxu0 0.0
        %2186 = vmatpush1.msra.mxu0 0.0
        %2187 = vmatprep.subr.mxu0 0.0
        %2188 = vmatpush1.msra.mxu0 0.0
        %2189 = vmatprep.subr.mxu0 0.0
        %2190 = vmatpush1.msra.mxu0 0.0
        %2191 = vmatprep.subr.mxu0 0.0
        %2192 = vmatpush1.msra.mxu0 0.0
        %2193 = vmatprep.subr.mxu0 0.0
        %2194 = vmatpush1.msra.mxu0 0.0
        %2195 = vmatprep.subr.mxu0 0.0
        %2196 = vmatpush1.msra.mxu0 0.0
        %2197 = vmatprep.subr.mxu0 0.0
        %2198 = vmatpush1.msra.mxu0 0.0
        %2199 = vmatprep.subr.mxu0 0.0
        %2200 = vmatpush1.msra.mxu0 0.0
        %2201 = vmatprep.subr.mxu0 0.0
        %2202 = vmatpush1.msra.mxu0 0.0
        %2203 = vmatprep.subr.mxu0 0.0
        %2204 = vmatpush1.msra.mxu0 0.0
        %2205 = vmatprep.subr.mxu0 0.0
        %2206 = vmatpush1.msra.mxu0 0.0
        %2207 = vmatprep.subr.mxu0 0.0
        %2208 = vmatpush1.msra.mxu0 0.0
        %2209 = vmatprep.subr.mxu0 0.0
        %2210 = vmatpush1.msra.mxu0 0.0
        %2211 = vmatprep.mubr.f32.mxu0 0.0
        %2212 = vmatmul.mubr.f32.gmra.mrb[0].mxu0 %v2142
        %v2213 = vpop.f32.mrb[0].mxu0
        %v2214 = vadd.f32 %v2139, %v2213
        %v2215 = vpop.f32.mrb[0].mxu0
        %2216 = vmatprep.mubr.f32.mxu0 0.0
        %2217 = vmatmul.mubr.f32.gmra.mrb[0].mxu0 %v2145
        %v2218 = vpop.f32.mrb[0].mxu0
        %v2219 = vadd.f32 %v2139, %v2218
        %v2220 = vpop.f32.mrb[0].mxu0
        %2221 = vdwg.mxu0
        %v2222 = vadd.f32 %v1180, %v2214
        %v2223 = vadd.f32 %v1181, %v2219
        %v2224 = vsel %vm1195, %v2222, 0.0
        %2225 = vadd.xlane.f32.xlu0 %v2224
        %v2226 = vpop.xlane.xlu0 %2225
        %v2227 = vsel %vm1195, %v2223, 0.0
        %2228 = vadd.xlane.f32.xlu0 %v2227
        %v2229 = vpop.xlane.xlu0 %2228
        %v2230 = vrcp.pop 32.0
        %v2231 = vmul.f32 %v2226, %v2230
        %v2232 = vmul.f32 %v2229, %v2230
        %v2233 = vsub.f32 %v2222, %v2231
        %v2234 = vsub.f32 %v2223, %v2232
        %v2235 = vmul.f32 %v2233, %v2233
        %v2236 = vmul.f32 %v2234, %v2234
        %v2237 = vsel %vm1195, %v2235, 0.0
        %2238 = vadd.xlane.f32.xlu0 %v2237
        %v2239 = vpop.xlane.xlu0 %2238
        %v2240 = vsel %vm1195, %v2236, 0.0
        %2241 = vadd.xlane.f32.xlu0 %v2240
        %v2242 = vpop.xlane.xlu0 %2241
        %v2243 = vmul.f32 %v2239, %v2230
        %v2244 = vmul.f32 %v2242, %v2230
        %v2245 = vadd.f32 %v2243, 1e-05
        %v2246 = vadd.f32 %v2244, 1e-05
        %v2247 = vrsqrt.pop %v2245
        %v2248 = vrsqrt.pop %v2246
        %v2249 = vmul.f32 %v2233, %v2247
        %v2250 = vmul.f32 %v2234, %v2248
        %v2251 = vld [vmem:[%s1031] sm:$0x1]
        %v2253 = vlaneseq
        %v2254 = vshrl.u32 %v2253, 7
        %v2255 = vsub.s32 0, %v2254
        %v2256 = vrot.slane %v2251, %v2255
        %v2258 = vmul.f32 %v2249, %v2256
        %v2259 = vmul.f32 %v2250, %v2256
        %v2260 = vld [vmem:[%s1034] sm:$0x1]
        %v2262 = vlaneseq
        %v2263 = vshrl.u32 %v2262, 7
        %v2264 = vsub.s32 0, %v2263
        %v2265 = vrot.slane %v2260, %v2264
        %v2267 = vadd.f32 %v2258, %v2265
        %v2268 = vadd.f32 %v2259, %v2265
        %v2269 = vld [vmem:[%s1016] sm:$0xff]
        %v2270 = vld [vmem:[%s1016 + $0x8] sm:$0xff]
        %v2271 = vld [vmem:[%s1016 + $0x10] sm:$0xff]
        %v2272 = vld [vmem:[%s1016 + $0x18] sm:$0xff]
        %v2273 = vld [vmem:[%s1016 + $0x20] sm:$0xff]
        %v2274 = vld [vmem:[%s1016 + $0x28] sm:$0xff]
        %v2275 = vld [vmem:[%s1016 + $0x30] sm:$0xff]
        %v2276 = vld [vmem:[%s1016 + $0x38] sm:$0xff]
        %v2277 = vld [vmem:[%s1016 + $0x40] sm:$0xff]
        %v2278 = vld [vmem:[%s1016 + $0x48] sm:$0xff]
        %v2279 = vld [vmem:[%s1016 + $0x50] sm:$0xff]
        %v2280 = vld [vmem:[%s1016 + $0x58] sm:$0xff]
        %v2281 = vld [vmem:[%s1016 + $0x60] sm:$0xff]
        %v2282 = vld [vmem:[%s1016 + $0x68] sm:$0xff]
        %v2283 = vld [vmem:[%s1016 + $0x70] sm:$0xff]
        %v2284 = vld [vmem:[%s1016 + $0x78] sm:$0xff]
        %v2285 = vld [vmem:[%s1016 + $0x80] sm:$0xff]
        %v2286 = vld [vmem:[%s1016 + $0x88] sm:$0xff]
        %v2287 = vld [vmem:[%s1016 + $0x90] sm:$0xff]
        %v2288 = vld [vmem:[%s1016 + $0x98] sm:$0xff]
        %v2289 = vld [vmem:[%s1016 + $0xa0] sm:$0xff]
        %v2290 = vld [vmem:[%s1016 + $0xa8] sm:$0xff]
        %v2291 = vld [vmem:[%s1016 + $0xb0] sm:$0xff]
        %v2292 = vld [vmem:[%s1016 + $0xb8] sm:$0xff]
        %v2293 = vld [vmem:[%s1016 + $0xc0] sm:$0xff]
        %v2294 = vld [vmem:[%s1016 + $0xc8] sm:$0xff]
        %v2295 = vld [vmem:[%s1016 + $0xd0] sm:$0xff]
        %v2296 = vld [vmem:[%s1016 + $0xd8] sm:$0xff]
        %v2297 = vld [vmem:[%s1016 + $0xe0] sm:$0xff]
        %v2298 = vld [vmem:[%s1016 + $0xe8] sm:$0xff]
        %v2299 = vld [vmem:[%s1016 + $0xf0] sm:$0xff]
        %v2300 = vld [vmem:[%s1016 + $0xf8] sm:$0xff]
        %v2301 = vld [vmem:[%s1016 + $0x100] sm:$0xff]
        %v2302 = vld [vmem:[%s1016 + $0x108] sm:$0xff]
        %v2303 = vld [vmem:[%s1016 + $0x110] sm:$0xff]
        %v2304 = vld [vmem:[%s1016 + $0x118] sm:$0xff]
        %v2305 = vld [vmem:[%s1016 + $0x120] sm:$0xff]
        %v2306 = vld [vmem:[%s1016 + $0x128] sm:$0xff]
        %v2307 = vld [vmem:[%s1016 + $0x130] sm:$0xff]
        %v2308 = vld [vmem:[%s1016 + $0x138] sm:$0xff]
        %v2309 = vld [vmem:[%s1016 + $0x140] sm:$0xff]
        %v2310 = vld [vmem:[%s1016 + $0x148] sm:$0xff]
        %v2311 = vld [vmem:[%s1016 + $0x150] sm:$0xff]
        %v2312 = vld [vmem:[%s1016 + $0x158] sm:$0xff]
        %v2313 = vld [vmem:[%s1016 + $0x160] sm:$0xff]
        %v2314 = vld [vmem:[%s1016 + $0x168] sm:$0xff]
        %v2315 = vld [vmem:[%s1016 + $0x170] sm:$0xff]
        %v2316 = vld [vmem:[%s1016 + $0x178] sm:$0xff]
        %v2317 = vld [vmem:[%s1016 + $0x180] sm:$0xff]
        %v2318 = vld [vmem:[%s1016 + $0x188] sm:$0xff]
        %v2319 = vld [vmem:[%s1016 + $0x190] sm:$0xff]
        %v2320 = vld [vmem:[%s1016 + $0x198] sm:$0xff]
        %v2321 = vld [vmem:[%s1016 + $0x1a0] sm:$0xff]
        %v2322 = vld [vmem:[%s1016 + $0x1a8] sm:$0xff]
        %v2323 = vld [vmem:[%s1016 + $0x1b0] sm:$0xff]
        %v2324 = vld [vmem:[%s1016 + $0x1b8] sm:$0xff]
        %v2325 = vld [vmem:[%s1016 + $0x1c0] sm:$0xff]
        %v2326 = vld [vmem:[%s1016 + $0x1c8] sm:$0xff]
        %v2327 = vld [vmem:[%s1016 + $0x1d0] sm:$0xff]
        %v2328 = vld [vmem:[%s1016 + $0x1d8] sm:$0xff]
        %v2329 = vld [vmem:[%s1016 + $0x1e0] sm:$0xff]
        %v2330 = vld [vmem:[%s1016 + $0x1e8] sm:$0xff]
        %v2331 = vld [vmem:[%s1016 + $0x1f0] sm:$0xff]
        %v2332 = vld [vmem:[%s1016 + $0x1f8] sm:$0xff]
        %v2333 = vld [vmem:[%s1020] sm:$0xff]
        %v2334 = vld [vmem:[%s1020 + $0x8] sm:$0xff]
        %v2337 = vlaneseq
        %v2338 = vshrl.u32 %v2337, 7
        %v2339 = vsub.s32 0, %v2338
        %v2340 = vrot.slane %v2333, %v2339
        %v2341 = vlaneseq
        %v2342 = vshrl.u32 %v2341, 7
        %v2343 = vsub.s32 1, %v2342
        %v2344 = vrot.slane %v2333, %v2343
        %v2345 = vlaneseq
        %v2346 = vshrl.u32 %v2345, 7
        %v2347 = vsub.s32 2, %v2346
        %v2348 = vrot.slane %v2333, %v2347
        %v2349 = vlaneseq
        %v2350 = vshrl.u32 %v2349, 7
        %v2351 = vsub.s32 3, %v2350
        %v2352 = vrot.slane %v2333, %v2351
        %v2353 = vlaneseq
        %v2354 = vshrl.u32 %v2353, 7
        %v2355 = vsub.s32 4, %v2354
        %v2356 = vrot.slane %v2333, %v2355
        %v2357 = vlaneseq
        %v2358 = vshrl.u32 %v2357, 7
        %v2359 = vsub.s32 5, %v2358
        %v2360 = vrot.slane %v2333, %v2359
        %v2361 = vlaneseq
        %v2362 = vshrl.u32 %v2361, 7
        %v2363 = vsub.s32 6, %v2362
        %v2364 = vrot.slane %v2333, %v2363
        %v2365 = vlaneseq
        %v2366 = vshrl.u32 %v2365, 7
        %v2367 = vsub.s32 7, %v2366
        %v2368 = vrot.slane %v2333, %v2367
        %v2369 = vlaneseq
        %v2370 = vshrl.u32 %v2369, 7
        %v2371 = vsub.s32 0, %v2370
        %v2372 = vrot.slane %v2334, %v2371
        %v2373 = vlaneseq
        %v2374 = vshrl.u32 %v2373, 7
        %v2375 = vsub.s32 1, %v2374
        %v2376 = vrot.slane %v2334, %v2375
        %v2377 = vlaneseq
        %v2378 = vshrl.u32 %v2377, 7
        %v2379 = vsub.s32 2, %v2378
        %v2380 = vrot.slane %v2334, %v2379
        %v2381 = vlaneseq
        %v2382 = vshrl.u32 %v2381, 7
        %v2383 = vsub.s32 3, %v2382
        %v2384 = vrot.slane %v2334, %v2383
        %v2385 = vlaneseq
        %v2386 = vshrl.u32 %v2385, 7
        %v2387 = vsub.s32 4, %v2386
        %v2388 = vrot.slane %v2334, %v2387
        %v2389 = vlaneseq
        %v2390 = vshrl.u32 %v2389, 7
        %v2391 = vsub.s32 5, %v2390
        %v2392 = vrot.slane %v2334, %v2391
        %v2393 = vlaneseq
        %v2394 = vshrl.u32 %v2393, 7
        %v2395 = vsub.s32 6, %v2394
        %v2396 = vrot.slane %v2334, %v2395
        %v2397 = vlaneseq
        %v2398 = vshrl.u32 %v2397, 7
        %v2399 = vsub.s32 7, %v2398
        %v2400 = vrot.slane %v2334, %v2399
        %v2418 = vsel %vm1195, %v2267, 0
        %v2421 = vsel %vm1195, %v2268, 0
        %2423 = vmatprep.subr.mxu0 %v2270
        %2424 = vmatpush1.msra.mxu0 %v2269
        %2425 = vmatprep.subr.mxu0 %v2286
        %2426 = vmatpush1.msra.mxu0 %v2285
        %2427 = vmatprep.subr.mxu0 %v2302
        %2428 = vmatpush1.msra.mxu0 %v2301
        %2429 = vmatprep.subr.mxu0 %v2318
        %2430 = vmatpush1.msra.mxu0 %v2317
        %2431 = vmatprep.subr.mxu0 0.0
        %2432 = vmatpush1.msra.mxu0 0.0
        %2433 = vmatprep.subr.mxu0 0.0
        %2434 = vmatpush1.msra.mxu0 0.0
        %2435 = vmatprep.subr.mxu0 0.0
        %2436 = vmatpush1.msra.mxu0 0.0
        %2437 = vmatprep.subr.mxu0 0.0
        %2438 = vmatpush1.msra.mxu0 0.0
        %2439 = vmatprep.subr.mxu0 0.0
        %2440 = vmatpush1.msra.mxu0 0.0
        %2441 = vmatprep.subr.mxu0 0.0
        %2442 = vmatpush1.msra.mxu0 0.0
        %2443 = vmatprep.subr.mxu0 0.0
        %2444 = vmatpush1.msra.mxu0 0.0
        %2445 = vmatprep.subr.mxu0 0.0
        %2446 = vmatpush1.msra.mxu0 0.0
        %2447 = vmatprep.subr.mxu0 0.0
        %2448 = vmatpush1.msra.mxu0 0.0
        %2449 = vmatprep.subr.mxu0 0.0
        %2450 = vmatpush1.msra.mxu0 0.0
        %2451 = vmatprep.subr.mxu0 0.0
        %2452 = vmatpush1.msra.mxu0 0.0
        %2453 = vmatprep.subr.mxu0 0.0
        %2454 = vmatpush1.msra.mxu0 0.0
        %2455 = vmatprep.subr.mxu0 0.0
        %2456 = vmatpush1.msra.mxu0 0.0
        %2457 = vmatprep.subr.mxu0 0.0
        %2458 = vmatpush1.msra.mxu0 0.0
        %2459 = vmatprep.subr.mxu0 0.0
        %2460 = vmatpush1.msra.mxu0 0.0
        %2461 = vmatprep.subr.mxu0 0.0
        %2462 = vmatpush1.msra.mxu0 0.0
        %2463 = vmatprep.subr.mxu0 0.0
        %2464 = vmatpush1.msra.mxu0 0.0
        %2465 = vmatprep.subr.mxu0 0.0
        %2466 = vmatpush1.msra.mxu0 0.0
        %2467 = vmatprep.subr.mxu0 0.0
        %2468 = vmatpush1.msra.mxu0 0.0
        %2469 = vmatprep.subr.mxu0 0.0
        %2470 = vmatpush1.msra.mxu0 0.0
        %2471 = vmatprep.subr.mxu0 0.0
        %2472 = vmatpush1.msra.mxu0 0.0
        %2473 = vmatprep.subr.mxu0 0.0
        %2474 = vmatpush1.msra.mxu0 0.0
        %2475 = vmatprep.subr.mxu0 0.0
        %2476 = vmatpush1.msra.mxu0 0.0
        %2477 = vmatprep.subr.mxu0 0.0
        %2478 = vmatpush1.msra.mxu0 0.0
        %2479 = vmatprep.subr.mxu0 0.0
        %2480 = vmatpush1.msra.mxu0 0.0
        %2481 = vmatprep.subr.mxu0 0.0
        %2482 = vmatpush1.msra.mxu0 0.0
        %2483 = vmatprep.subr.mxu0 0.0
        %2484 = vmatpush1.msra.mxu0 0.0
        %2485 = vmatprep.subr.mxu0 0.0
        %2486 = vmatpush1.msra.mxu0 0.0
        %2487 = vmatprep.mubr.f32.mxu0 0.0
        %2488 = vmatmul.mubr.f32.gmra.mrb[0].mxu0 %v2418
        %v2489 = vpop.f32.mrb[0].mxu0
        %v2490 = vadd.f32 %v2340, %v2489
        %v2491 = vpop.f32.mrb[0].mxu0
        %v2492 = vadd.f32 %v2344, %v2491
        %2493 = vmatprep.mubr.f32.mxu0 0.0
        %2494 = vmatmul.mubr.f32.gmra.mrb[0].mxu0 %v2421
        %v2495 = vpop.f32.mrb[0].mxu0
        %v2496 = vadd.f32 %v2340, %v2495
        %v2497 = vpop.f32.mrb[0].mxu0
        %v2498 = vadd.f32 %v2344, %v2497
        %2499 = vdwg.mxu0
        %2500 = vmatprep.subr.mxu0 %v2272
        %2501 = vmatpush1.msra.mxu0 %v2271
        %2502 = vmatprep.subr.mxu0 %v2288
        %2503 = vmatpush1.msra.mxu0 %v2287
        %2504 = vmatprep.subr.mxu0 %v2304
        %2505 = vmatpush1.msra.mxu0 %v2303
        %2506 = vmatprep.subr.mxu0 %v2320
        %2507 = vmatpush1.msra.mxu0 %v2319
        %2508 = vmatprep.subr.mxu0 0.0
        %2509 = vmatpush1.msra.mxu0 0.0
        %2510 = vmatprep.subr.mxu0 0.0
        %2511 = vmatpush1.msra.mxu0 0.0
        %2512 = vmatprep.subr.mxu0 0.0
        %2513 = vmatpush1.msra.mxu0 0.0
        %2514 = vmatprep.subr.mxu0 0.0
        %2515 = vmatpush1.msra.mxu0 0.0
        %2516 = vmatprep.subr.mxu0 0.0
        %2517 = vmatpush1.msra.mxu0 0.0
        %2518 = vmatprep.subr.mxu0 0.0
        %2519 = vmatpush1.msra.mxu0 0.0
        %2520 = vmatprep.subr.mxu0 0.0
        %2521 = vmatpush1.msra.mxu0 0.0
        %2522 = vmatprep.subr.mxu0 0.0
        %2523 = vmatpush1.msra.mxu0 0.0
        %2524 = vmatprep.subr.mxu0 0.0
        %2525 = vmatpush1.msra.mxu0 0.0
        %2526 = vmatprep.subr.mxu0 0.0
        %2527 = vmatpush1.msra.mxu0 0.0
        %2528 = vmatprep.subr.mxu0 0.0
        %2529 = vmatpush1.msra.mxu0 0.0
        %2530 = vmatprep.subr.mxu0 0.0
        %2531 = vmatpush1.msra.mxu0 0.0
        %2532 = vmatprep.subr.mxu0 0.0
        %2533 = vmatpush1.msra.mxu0 0.0
        %2534 = vmatprep.subr.mxu0 0.0
        %2535 = vmatpush1.msra.mxu0 0.0
        %2536 = vmatprep.subr.mxu0 0.0
        %2537 = vmatpush1.msra.mxu0 0.0
        %2538 = vmatprep.subr.mxu0 0.0
        %2539 = vmatpush1.msra.mxu0 0.0
        %2540 = vmatprep.subr.mxu0 0.0
        %2541 = vmatpush1.msra.mxu0 0.0
        %2542 = vmatprep.subr.mxu0 0.0
        %2543 = vmatpush1.msra.mxu0 0.0
        %2544 = vmatprep.subr.mxu0 0.0
        %2545 = vmatpush1.msra.mxu0 0.0
        %2546 = vmatprep.subr.mxu0 0.0
        %2547 = vmatpush1.msra.mxu0 0.0
        %2548 = vmatprep.subr.mxu0 0.0
        %2549 = vmatpush1.msra.mxu0 0.0
        %2550 = vmatprep.subr.mxu0 0.0
        %2551 = vmatpush1.msra.mxu0 0.0
        %2552 = vmatprep.subr.mxu0 0.0
        %2553 = vmatpush1.msra.mxu0 0.0
        %2554 = vmatprep.subr.mxu0 0.0
        %2555 = vmatpush1.msra.mxu0 0.0
        %2556 = vmatprep.subr.mxu0 0.0
        %2557 = vmatpush1.msra.mxu0 0.0
        %2558 = vmatprep.subr.mxu0 0.0
        %2559 = vmatpush1.msra.mxu0 0.0
        %2560 = vmatprep.subr.mxu0 0.0
        %2561 = vmatpush1.msra.mxu0 0.0
        %2562 = vmatprep.subr.mxu0 0.0
        %2563 = vmatpush1.msra.mxu0 0.0
        %2564 = vmatprep.mubr.f32.mxu0 0.0
        %2565 = vmatmul.mubr.f32.gmra.mrb[0].mxu0 %v2418
        %v2566 = vpop.f32.mrb[0].mxu0
        %v2567 = vadd.f32 %v2348, %v2566
        %v2568 = vpop.f32.mrb[0].mxu0
        %v2569 = vadd.f32 %v2352, %v2568
        %2570 = vmatprep.mubr.f32.mxu0 0.0
        %2571 = vmatmul.mubr.f32.gmra.mrb[0].mxu0 %v2421
        %v2572 = vpop.f32.mrb[0].mxu0
        %v2573 = vadd.f32 %v2348, %v2572
        %v2574 = vpop.f32.mrb[0].mxu0
        %v2575 = vadd.f32 %v2352, %v2574
        %2576 = vdwg.mxu0
        %2577 = vmatprep.subr.mxu0 %v2274
        %2578 = vmatpush1.msra.mxu0 %v2273
        %2579 = vmatprep.subr.mxu0 %v2290
        %2580 = vmatpush1.msra.mxu0 %v2289
        %2581 = vmatprep.subr.mxu0 %v2306
        %2582 = vmatpush1.msra.mxu0 %v2305
        %2583 = vmatprep.subr.mxu0 %v2322
        %2584 = vmatpush1.msra.mxu0 %v2321
        %2585 = vmatprep.subr.mxu0 0.0
        %2586 = vmatpush1.msra.mxu0 0.0
        %2587 = vmatprep.subr.mxu0 0.0
        %2588 = vmatpush1.msra.mxu0 0.0
        %2589 = vmatprep.subr.mxu0 0.0
        %2590 = vmatpush1.msra.mxu0 0.0
        %2591 = vmatprep.subr.mxu0 0.0
        %2592 = vmatpush1.msra.mxu0 0.0
        %2593 = vmatprep.subr.mxu0 0.0
        %2594 = vmatpush1.msra.mxu0 0.0
        %2595 = vmatprep.subr.mxu0 0.0
        %2596 = vmatpush1.msra.mxu0 0.0
        %2597 = vmatprep.subr.mxu0 0.0
        %2598 = vmatpush1.msra.mxu0 0.0
        %2599 = vmatprep.subr.mxu0 0.0
        %2600 = vmatpush1.msra.mxu0 0.0
        %2601 = vmatprep.subr.mxu0 0.0
        %2602 = vmatpush1.msra.mxu0 0.0
        %2603 = vmatprep.subr.mxu0 0.0
        %2604 = vmatpush1.msra.mxu0 0.0
        %2605 = vmatprep.subr.mxu0 0.0
        %2606 = vmatpush1.msra.mxu0 0.0
        %2607 = vmatprep.subr.mxu0 0.0
        %2608 = vmatpush1.msra.mxu0 0.0
        %2609 = vmatprep.subr.mxu0 0.0
        %2610 = vmatpush1.msra.mxu0 0.0
        %2611 = vmatprep.subr.mxu0 0.0
        %2612 = vmatpush1.msra.mxu0 0.0
        %2613 = vmatprep.subr.mxu0 0.0
        %2614 = vmatpush1.msra.mxu0 0.0
        %2615 = vmatprep.subr.mxu0 0.0
        %2616 = vmatpush1.msra.mxu0 0.0
        %2617 = vmatprep.subr.mxu0 0.0
        %2618 = vmatpush1.msra.mxu0 0.0
        %2619 = vmatprep.subr.mxu0 0.0
        %2620 = vmatpush1.msra.mxu0 0.0
        %2621 = vmatprep.subr.mxu0 0.0
        %2622 = vmatpush1.msra.mxu0 0.0
        %2623 = vmatprep.subr.mxu0 0.0
        %2624 = vmatpush1.msra.mxu0 0.0
        %2625 = vmatprep.subr.mxu0 0.0
        %2626 = vmatpush1.msra.mxu0 0.0
        %2627 = vmatprep.subr.mxu0 0.0
        %2628 = vmatpush1.msra.mxu0 0.0
        %2629 = vmatprep.subr.mxu0 0.0
        %2630 = vmatpush1.msra.mxu0 0.0
        %2631 = vmatprep.subr.mxu0 0.0
        %2632 = vmatpush1.msra.mxu0 0.0
        %2633 = vmatprep.subr.mxu0 0.0
        %2634 = vmatpush1.msra.mxu0 0.0
        %2635 = vmatprep.subr.mxu0 0.0
        %2636 = vmatpush1.msra.mxu0 0.0
        %2637 = vmatprep.subr.mxu0 0.0
        %2638 = vmatpush1.msra.mxu0 0.0
        %2639 = vmatprep.subr.mxu0 0.0
        %2640 = vmatpush1.msra.mxu0 0.0
        %2641 = vmatprep.mubr.f32.mxu0 0.0
        %2642 = vmatmul.mubr.f32.gmra.mrb[0].mxu0 %v2418
        %v2643 = vpop.f32.mrb[0].mxu0
        %v2644 = vadd.f32 %v2356, %v2643
        %v2645 = vpop.f32.mrb[0].mxu0
        %v2646 = vadd.f32 %v2360, %v2645
        %2647 = vmatprep.mubr.f32.mxu0 0.0
        %2648 = vmatmul.mubr.f32.gmra.mrb[0].mxu0 %v2421
        %v2649 = vpop.f32.mrb[0].mxu0
        %v2650 = vadd.f32 %v2356, %v2649
        %v2651 = vpop.f32.mrb[0].mxu0
        %v2652 = vadd.f32 %v2360, %v2651
        %2653 = vdwg.mxu0
        %2654 = vmatprep.subr.mxu0 %v2276
        %2655 = vmatpush1.msra.mxu0 %v2275
        %2656 = vmatprep.subr.mxu0 %v2292
        %2657 = vmatpush1.msra.mxu0 %v2291
        %2658 = vmatprep.subr.mxu0 %v2308
        %2659 = vmatpush1.msra.mxu0 %v2307
        %2660 = vmatprep.subr.mxu0 %v2324
        %2661 = vmatpush1.msra.mxu0 %v2323
        %2662 = vmatprep.subr.mxu0 0.0
        %2663 = vmatpush1.msra.mxu0 0.0
        %2664 = vmatprep.subr.mxu0 0.0
        %2665 = vmatpush1.msra.mxu0 0.0
        %2666 = vmatprep.subr.mxu0 0.0
        %2667 = vmatpush1.msra.mxu0 0.0
        %2668 = vmatprep.subr.mxu0 0.0
        %2669 = vmatpush1.msra.mxu0 0.0
        %2670 = vmatprep.subr.mxu0 0.0
        %2671 = vmatpush1.msra.mxu0 0.0
        %2672 = vmatprep.subr.mxu0 0.0
        %2673 = vmatpush1.msra.mxu0 0.0
        %2674 = vmatprep.subr.mxu0 0.0
        %2675 = vmatpush1.msra.mxu0 0.0
        %2676 = vmatprep.subr.mxu0 0.0
        %2677 = vmatpush1.msra.mxu0 0.0
        %2678 = vmatprep.subr.mxu0 0.0
        %2679 = vmatpush1.msra.mxu0 0.0
        %2680 = vmatprep.subr.mxu0 0.0
        %2681 = vmatpush1.msra.mxu0 0.0
        %2682 = vmatprep.subr.mxu0 0.0
        %2683 = vmatpush1.msra.mxu0 0.0
        %2684 = vmatprep.subr.mxu0 0.0
        %2685 = vmatpush1.msra.mxu0 0.0
        %2686 = vmatprep.subr.mxu0 0.0
        %2687 = vmatpush1.msra.mxu0 0.0
        %2688 = vmatprep.subr.mxu0 0.0
        %2689 = vmatpush1.msra.mxu0 0.0
        %2690 = vmatprep.subr.mxu0 0.0
        %2691 = vmatpush1.msra.mxu0 0.0
        %2692 = vmatprep.subr.mxu0 0.0
        %2693 = vmatpush1.msra.mxu0 0.0
        %2694 = vmatprep.subr.mxu0 0.0
        %2695 = vmatpush1.msra.mxu0 0.0
        %2696 = vmatprep.subr.mxu0 0.0
        %2697 = vmatpush1.msra.mxu0 0.0
        %2698 = vmatprep.subr.mxu0 0.0
        %2699 = vmatpush1.msra.mxu0 0.0
        %2700 = vmatprep.subr.mxu0 0.0
        %2701 = vmatpush1.msra.mxu0 0.0
        %2702 = vmatprep.subr.mxu0 0.0
        %2703 = vmatpush1.msra.mxu0 0.0
        %2704 = vmatprep.subr.mxu0 0.0
        %2705 = vmatpush1.msra.mxu0 0.0
        %2706 = vmatprep.subr.mxu0 0.0
        %2707 = vmatpush1.msra.mxu0 0.0
        %2708 = vmatprep.subr.mxu0 0.0
        %2709 = vmatpush1.msra.mxu0 0.0
        %2710 = vmatprep.subr.mxu0 0.0
        %2711 = vmatpush1.msra.mxu0 0.0
        %2712 = vmatprep.subr.mxu0 0.0
        %2713 = vmatpush1.msra.mxu0 0.0
        %2714 = vmatprep.subr.mxu0 0.0
        %2715 = vmatpush1.msra.mxu0 0.0
        %2716 = vmatprep.subr.mxu0 0.0
        %2717 = vmatpush1.msra.mxu0 0.0
        %2718 = vmatprep.mubr.f32.mxu0 0.0
        %2719 = vmatmul.mubr.f32.gmra.mrb[0].mxu0 %v2418
        %v2720 = vpop.f32.mrb[0].mxu0
        %v2721 = vadd.f32 %v2364, %v2720
        %v2722 = vpop.f32.mrb[0].mxu0
        %v2723 = vadd.f32 %v2368, %v2722
        %2724 = vmatprep.mubr.f32.mxu0 0.0
        %2725 = vmatmul.mubr.f32.gmra.mrb[0].mxu0 %v2421
        %v2726 = vpop.f32.mrb[0].mxu0
        %v2727 = vadd.f32 %v2364, %v2726
        %v2728 = vpop.f32.mrb[0].mxu0
        %v2729 = vadd.f32 %v2368, %v2728
        %2730 = vdwg.mxu0
        %2731 = vmatprep.subr.mxu0 %v2278
        %2732 = vmatpush1.msra.mxu0 %v2277
        %2733 = vmatprep.subr.mxu0 %v2294
        %2734 = vmatpush1.msra.mxu0 %v2293
        %2735 = vmatprep.subr.mxu0 %v2310
        %2736 = vmatpush1.msra.mxu0 %v2309
        %2737 = vmatprep.subr.mxu0 %v2326
        %2738 = vmatpush1.msra.mxu0 %v2325
        %2739 = vmatprep.subr.mxu0 0.0
        %2740 = vmatpush1.msra.mxu0 0.0
        %2741 = vmatprep.subr.mxu0 0.0
        %2742 = vmatpush1.msra.mxu0 0.0
        %2743 = vmatprep.subr.mxu0 0.0
        %2744 = vmatpush1.msra.mxu0 0.0
        %2745 = vmatprep.subr.mxu0 0.0
        %2746 = vmatpush1.msra.mxu0 0.0
        %2747 = vmatprep.subr.mxu0 0.0
        %2748 = vmatpush1.msra.mxu0 0.0
        %2749 = vmatprep.subr.mxu0 0.0
        %2750 = vmatpush1.msra.mxu0 0.0
        %2751 = vmatprep.subr.mxu0 0.0
        %2752 = vmatpush1.msra.mxu0 0.0
        %2753 = vmatprep.subr.mxu0 0.0
        %2754 = vmatpush1.msra.mxu0 0.0
        %2755 = vmatprep.subr.mxu0 0.0
        %2756 = vmatpush1.msra.mxu0 0.0
        %2757 = vmatprep.subr.mxu0 0.0
        %2758 = vmatpush1.msra.mxu0 0.0
        %2759 = vmatprep.subr.mxu0 0.0
        %2760 = vmatpush1.msra.mxu0 0.0
        %2761 = vmatprep.subr.mxu0 0.0
        %2762 = vmatpush1.msra.mxu0 0.0
        %2763 = vmatprep.subr.mxu0 0.0
        %2764 = vmatpush1.msra.mxu0 0.0
        %2765 = vmatprep.subr.mxu0 0.0
        %2766 = vmatpush1.msra.mxu0 0.0
        %2767 = vmatprep.subr.mxu0 0.0
        %2768 = vmatpush1.msra.mxu0 0.0
        %2769 = vmatprep.subr.mxu0 0.0
        %2770 = vmatpush1.msra.mxu0 0.0
        %2771 = vmatprep.subr.mxu0 0.0
        %2772 = vmatpush1.msra.mxu0 0.0
        %2773 = vmatprep.subr.mxu0 0.0
        %2774 = vmatpush1.msra.mxu0 0.0
        %2775 = vmatprep.subr.mxu0 0.0
        %2776 = vmatpush1.msra.mxu0 0.0
        %2777 = vmatprep.subr.mxu0 0.0
        %2778 = vmatpush1.msra.mxu0 0.0
        %2779 = vmatprep.subr.mxu0 0.0
        %2780 = vmatpush1.msra.mxu0 0.0
        %2781 = vmatprep.subr.mxu0 0.0
        %2782 = vmatpush1.msra.mxu0 0.0
        %2783 = vmatprep.subr.mxu0 0.0
        %2784 = vmatpush1.msra.mxu0 0.0
        %2785 = vmatprep.subr.mxu0 0.0
        %2786 = vmatpush1.msra.mxu0 0.0
        %2787 = vmatprep.subr.mxu0 0.0
        %2788 = vmatpush1.msra.mxu0 0.0
        %2789 = vmatprep.subr.mxu0 0.0
        %2790 = vmatpush1.msra.mxu0 0.0
        %2791 = vmatprep.subr.mxu0 0.0
        %2792 = vmatpush1.msra.mxu0 0.0
        %2793 = vmatprep.subr.mxu0 0.0
        %2794 = vmatpush1.msra.mxu0 0.0
        %2795 = vmatprep.mubr.f32.mxu0 0.0
        %2796 = vmatmul.mubr.f32.gmra.mrb[0].mxu0 %v2418
        %v2797 = vpop.f32.mrb[0].mxu0
        %v2798 = vadd.f32 %v2372, %v2797
        %v2799 = vpop.f32.mrb[0].mxu0
        %v2800 = vadd.f32 %v2376, %v2799
        %2801 = vmatprep.mubr.f32.mxu0 0.0
        %2802 = vmatmul.mubr.f32.gmra.mrb[0].mxu0 %v2421
        %v2803 = vpop.f32.mrb[0].mxu0
        %v2804 = vadd.f32 %v2372, %v2803
        %v2805 = vpop.f32.mrb[0].mxu0
        %v2806 = vadd.f32 %v2376, %v2805
        %2807 = vdwg.mxu0
        %2808 = vmatprep.subr.mxu0 %v2280
        %2809 = vmatpush1.msra.mxu0 %v2279
        %2810 = vmatprep.subr.mxu0 %v2296
        %2811 = vmatpush1.msra.mxu0 %v2295
        %2812 = vmatprep.subr.mxu0 %v2312
        %2813 = vmatpush1.msra.mxu0 %v2311
        %2814 = vmatprep.subr.mxu0 %v2328
        %2815 = vmatpush1.msra.mxu0 %v2327
        %2816 = vmatprep.subr.mxu0 0.0
        %2817 = vmatpush1.msra.mxu0 0.0
        %2818 = vmatprep.subr.mxu0 0.0
        %2819 = vmatpush1.msra.mxu0 0.0
        %2820 = vmatprep.subr.mxu0 0.0
        %2821 = vmatpush1.msra.mxu0 0.0
        %2822 = vmatprep.subr.mxu0 0.0
        %2823 = vmatpush1.msra.mxu0 0.0
        %2824 = vmatprep.subr.mxu0 0.0
        %2825 = vmatpush1.msra.mxu0 0.0
        %2826 = vmatprep.subr.mxu0 0.0
        %2827 = vmatpush1.msra.mxu0 0.0
        %2828 = vmatprep.subr.mxu0 0.0
        %2829 = vmatpush1.msra.mxu0 0.0
        %2830 = vmatprep.subr.mxu0 0.0
        %2831 = vmatpush1.msra.mxu0 0.0
        %2832 = vmatprep.subr.mxu0 0.0
        %2833 = vmatpush1.msra.mxu0 0.0
        %2834 = vmatprep.subr.mxu0 0.0
        %2835 = vmatpush1.msra.mxu0 0.0
        %2836 = vmatprep.subr.mxu0 0.0
        %2837 = vmatpush1.msra.mxu0 0.0
        %2838 = vmatprep.subr.mxu0 0.0
        %2839 = vmatpush1.msra.mxu0 0.0
        %2840 = vmatprep.subr.mxu0 0.0
        %2841 = vmatpush1.msra.mxu0 0.0
        %2842 = vmatprep.subr.mxu0 0.0
        %2843 = vmatpush1.msra.mxu0 0.0
        %2844 = vmatprep.subr.mxu0 0.0
        %2845 = vmatpush1.msra.mxu0 0.0
        %2846 = vmatprep.subr.mxu0 0.0
        %2847 = vmatpush1.msra.mxu0 0.0
        %2848 = vmatprep.subr.mxu0 0.0
        %2849 = vmatpush1.msra.mxu0 0.0
        %2850 = vmatprep.subr.mxu0 0.0
        %2851 = vmatpush1.msra.mxu0 0.0
        %2852 = vmatprep.subr.mxu0 0.0
        %2853 = vmatpush1.msra.mxu0 0.0
        %2854 = vmatprep.subr.mxu0 0.0
        %2855 = vmatpush1.msra.mxu0 0.0
        %2856 = vmatprep.subr.mxu0 0.0
        %2857 = vmatpush1.msra.mxu0 0.0
        %2858 = vmatprep.subr.mxu0 0.0
        %2859 = vmatpush1.msra.mxu0 0.0
        %2860 = vmatprep.subr.mxu0 0.0
        %2861 = vmatpush1.msra.mxu0 0.0
        %2862 = vmatprep.subr.mxu0 0.0
        %2863 = vmatpush1.msra.mxu0 0.0
        %2864 = vmatprep.subr.mxu0 0.0
        %2865 = vmatpush1.msra.mxu0 0.0
        %2866 = vmatprep.subr.mxu0 0.0
        %2867 = vmatpush1.msra.mxu0 0.0
        %2868 = vmatprep.subr.mxu0 0.0
        %2869 = vmatpush1.msra.mxu0 0.0
        %2870 = vmatprep.subr.mxu0 0.0
        %2871 = vmatpush1.msra.mxu0 0.0
        %2872 = vmatprep.mubr.f32.mxu0 0.0
        %2873 = vmatmul.mubr.f32.gmra.mrb[0].mxu0 %v2418
        %v2874 = vpop.f32.mrb[0].mxu0
        %v2875 = vadd.f32 %v2380, %v2874
        %v2876 = vpop.f32.mrb[0].mxu0
        %v2877 = vadd.f32 %v2384, %v2876
        %2878 = vmatprep.mubr.f32.mxu0 0.0
        %2879 = vmatmul.mubr.f32.gmra.mrb[0].mxu0 %v2421
        %v2880 = vpop.f32.mrb[0].mxu0
        %v2881 = vadd.f32 %v2380, %v2880
        %v2882 = vpop.f32.mrb[0].mxu0
        %v2883 = vadd.f32 %v2384, %v2882
        %2884 = vdwg.mxu0
        %2885 = vmatprep.subr.mxu0 %v2282
        %2886 = vmatpush1.msra.mxu0 %v2281
        %2887 = vmatprep.subr.mxu0 %v2298
        %2888 = vmatpush1.msra.mxu0 %v2297
        %2889 = vmatprep.subr.mxu0 %v2314
        %2890 = vmatpush1.msra.mxu0 %v2313
        %2891 = vmatprep.subr.mxu0 %v2330
        %2892 = vmatpush1.msra.mxu0 %v2329
        %2893 = vmatprep.subr.mxu0 0.0
        %2894 = vmatpush1.msra.mxu0 0.0
        %2895 = vmatprep.subr.mxu0 0.0
        %2896 = vmatpush1.msra.mxu0 0.0
        %2897 = vmatprep.subr.mxu0 0.0
        %2898 = vmatpush1.msra.mxu0 0.0
        %2899 = vmatprep.subr.mxu0 0.0
        %2900 = vmatpush1.msra.mxu0 0.0
        %2901 = vmatprep.subr.mxu0 0.0
        %2902 = vmatpush1.msra.mxu0 0.0
        %2903 = vmatprep.subr.mxu0 0.0
        %2904 = vmatpush1.msra.mxu0 0.0
        %2905 = vmatprep.subr.mxu0 0.0
        %2906 = vmatpush1.msra.mxu0 0.0
        %2907 = vmatprep.subr.mxu0 0.0
        %2908 = vmatpush1.msra.mxu0 0.0
        %2909 = vmatprep.subr.mxu0 0.0
        %2910 = vmatpush1.msra.mxu0 0.0
        %2911 = vmatprep.subr.mxu0 0.0
        %2912 = vmatpush1.msra.mxu0 0.0
        %2913 = vmatprep.subr.mxu0 0.0
        %2914 = vmatpush1.msra.mxu0 0.0
        %2915 = vmatprep.subr.mxu0 0.0
        %2916 = vmatpush1.msra.mxu0 0.0
        %2917 = vmatprep.subr.mxu0 0.0
        %2918 = vmatpush1.msra.mxu0 0.0
        %2919 = vmatprep.subr.mxu0 0.0
        %2920 = vmatpush1.msra.mxu0 0.0
        %2921 = vmatprep.subr.mxu0 0.0
        %2922 = vmatpush1.msra.mxu0 0.0
        %2923 = vmatprep.subr.mxu0 0.0
        %2924 = vmatpush1.msra.mxu0 0.0
        %2925 = vmatprep.subr.mxu0 0.0
        %2926 = vmatpush1.msra.mxu0 0.0
        %2927 = vmatprep.subr.mxu0 0.0
        %2928 = vmatpush1.msra.mxu0 0.0
        %2929 = vmatprep.subr.mxu0 0.0
        %2930 = vmatpush1.msra.mxu0 0.0
        %2931 = vmatprep.subr.mxu0 0.0
        %2932 = vmatpush1.msra.mxu0 0.0
        %2933 = vmatprep.subr.mxu0 0.0
        %2934 = vmatpush1.msra.mxu0 0.0
        %2935 = vmatprep.subr.mxu0 0.0
        %2936 = vmatpush1.msra.mxu0 0.0
        %2937 = vmatprep.subr.mxu0 0.0
        %2938 = vmatpush1.msra.mxu0 0.0
        %2939 = vmatprep.subr.mxu0 0.0
        %2940 = vmatpush1.msra.mxu0 0.0
        %2941 = vmatprep.subr.mxu0 0.0
        %2942 = vmatpush1.msra.mxu0 0.0
        %2943 = vmatprep.subr.mxu0 0.0
        %2944 = vmatpush1.msra.mxu0 0.0
        %2945 = vmatprep.subr.mxu0 0.0
        %2946 = vmatpush1.msra.mxu0 0.0
        %2947 = vmatprep.subr.mxu0 0.0
        %2948 = vmatpush1.msra.mxu0 0.0
        %2949 = vmatprep.mubr.f32.mxu0 0.0
        %2950 = vmatmul.mubr.f32.gmra.mrb[0].mxu0 %v2418
        %v2951 = vpop.f32.mrb[0].mxu0
        %v2952 = vadd.f32 %v2388, %v2951
        %v2953 = vpop.f32.mrb[0].mxu0
        %v2954 = vadd.f32 %v2392, %v2953
        %2955 = vmatprep.mubr.f32.mxu0 0.0
        %2956 = vmatmul.mubr.f32.gmra.mrb[0].mxu0 %v2421
        %v2957 = vpop.f32.mrb[0].mxu0
        %v2958 = vadd.f32 %v2388, %v2957
        %v2959 = vpop.f32.mrb[0].mxu0
        %v2960 = vadd.f32 %v2392, %v2959
        %2961 = vdwg.mxu0
        %2962 = vmatprep.subr.mxu0 %v2284
        %2963 = vmatpush1.msra.mxu0 %v2283
        %2964 = vmatprep.subr.mxu0 %v2300
        %2965 = vmatpush1.msra.mxu0 %v2299
        %2966 = vmatprep.subr.mxu0 %v2316
        %2967 = vmatpush1.msra.mxu0 %v2315
        %2968 = vmatprep.subr.mxu0 %v2332
        %2969 = vmatpush1.msra.mxu0 %v2331
        %2970 = vmatprep.subr.mxu0 0.0
        %2971 = vmatpush1.msra.mxu0 0.0
        %2972 = vmatprep.subr.mxu0 0.0
        %2973 = vmatpush1.msra.mxu0 0.0
        %2974 = vmatprep.subr.mxu0 0.0
        %2975 = vmatpush1.msra.mxu0 0.0
        %2976 = vmatprep.subr.mxu0 0.0
        %2977 = vmatpush1.msra.mxu0 0.0
        %2978 = vmatprep.subr.mxu0 0.0
        %2979 = vmatpush1.msra.mxu0 0.0
        %2980 = vmatprep.subr.mxu0 0.0
        %2981 = vmatpush1.msra.mxu0 0.0
        %2982 = vmatprep.subr.mxu0 0.0
        %2983 = vmatpush1.msra.mxu0 0.0
        %2984 = vmatprep.subr.mxu0 0.0
        %2985 = vmatpush1.msra.mxu0 0.0
        %2986 = vmatprep.subr.mxu0 0.0
        %2987 = vmatpush1.msra.mxu0 0.0
        %2988 = vmatprep.subr.mxu0 0.0
        %2989 = vmatpush1.msra.mxu0 0.0
        %2990 = vmatprep.subr.mxu0 0.0
        %2991 = vmatpush1.msra.mxu0 0.0
        %2992 = vmatprep.subr.mxu0 0.0
        %2993 = vmatpush1.msra.mxu0 0.0
        %2994 = vmatprep.subr.mxu0 0.0
        %2995 = vmatpush1.msra.mxu0 0.0
        %2996 = vmatprep.subr.mxu0 0.0
        %2997 = vmatpush1.msra.mxu0 0.0
        %2998 = vmatprep.subr.mxu0 0.0
        %2999 = vmatpush1.msra.mxu0 0.0
        %3000 = vmatprep.subr.mxu0 0.0
        %3001 = vmatpush1.msra.mxu0 0.0
        %3002 = vmatprep.subr.mxu0 0.0
        %3003 = vmatpush1.msra.mxu0 0.0
        %3004 = vmatprep.subr.mxu0 0.0
        %3005 = vmatpush1.msra.mxu0 0.0
        %3006 = vmatprep.subr.mxu0 0.0
        %3007 = vmatpush1.msra.mxu0 0.0
        %3008 = vmatprep.subr.mxu0 0.0
        %3009 = vmatpush1.msra.mxu0 0.0
        %3010 = vmatprep.subr.mxu0 0.0
        %3011 = vmatpush1.msra.mxu0 0.0
        %3012 = vmatprep.subr.mxu0 0.0
        %3013 = vmatpush1.msra.mxu0 0.0
        %3014 = vmatprep.subr.mxu0 0.0
        %3015 = vmatpush1.msra.mxu0 0.0
        %3016 = vmatprep.subr.mxu0 0.0
        %3017 = vmatpush1.msra.mxu0 0.0
        %3018 = vmatprep.subr.mxu0 0.0
        %3019 = vmatpush1.msra.mxu0 0.0
        %3020 = vmatprep.subr.mxu0 0.0
        %3021 = vmatpush1.msra.mxu0 0.0
        %3022 = vmatprep.subr.mxu0 0.0
        %3023 = vmatpush1.msra.mxu0 0.0
        %3024 = vmatprep.subr.mxu0 0.0
        %3025 = vmatpush1.msra.mxu0 0.0
        %3026 = vmatprep.mubr.f32.mxu0 0.0
        %3027 = vmatmul.mubr.f32.gmra.mrb[0].mxu0 %v2418
        %v3028 = vpop.f32.mrb[0].mxu0
        %v3029 = vadd.f32 %v2396, %v3028
        %v3030 = vpop.f32.mrb[0].mxu0
        %v3031 = vadd.f32 %v2400, %v3030
        %3032 = vmatprep.mubr.f32.mxu0 0.0
        %3033 = vmatmul.mubr.f32.gmra.mrb[0].mxu0 %v2421
        %v3034 = vpop.f32.mrb[0].mxu0
        %v3035 = vadd.f32 %v2396, %v3034
        %v3036 = vpop.f32.mrb[0].mxu0
        %v3037 = vadd.f32 %v2400, %v3036
        %3038 = vdwg.mxu0
        %v3039 = vmax.f32 %v2490, 0.0
        %v3040 = vmax.f32 %v2492, 0.0
        %v3041 = vmax.f32 %v2567, 0.0
        %v3042 = vmax.f32 %v2569, 0.0
        %v3043 = vmax.f32 %v2644, 0.0
        %v3044 = vmax.f32 %v2646, 0.0
        %v3045 = vmax.f32 %v2721, 0.0
        %v3046 = vmax.f32 %v2723, 0.0
        %v3047 = vmax.f32 %v2798, 0.0
        %v3048 = vmax.f32 %v2800, 0.0
        %v3049 = vmax.f32 %v2875, 0.0
        %v3050 = vmax.f32 %v2877, 0.0
        %v3051 = vmax.f32 %v2952, 0.0
        %v3052 = vmax.f32 %v2954, 0.0
        %v3053 = vmax.f32 %v3029, 0.0
        %v3054 = vmax.f32 %v3031, 0.0
        %v3055 = vmax.f32 %v2496, 0.0
        %v3056 = vmax.f32 %v2498, 0.0
        %v3057 = vmax.f32 %v2573, 0.0
        %v3058 = vmax.f32 %v2575, 0.0
        %v3059 = vmax.f32 %v2650, 0.0
        %v3060 = vmax.f32 %v2652, 0.0
        %v3061 = vmax.f32 %v2727, 0.0
        %v3062 = vmax.f32 %v2729, 0.0
        %v3063 = vmax.f32 %v2804, 0.0
        %v3064 = vmax.f32 %v2806, 0.0
        %v3065 = vmax.f32 %v2881, 0.0
        %v3066 = vmax.f32 %v2883, 0.0
        %v3067 = vmax.f32 %v2958, 0.0
        %v3068 = vmax.f32 %v2960, 0.0
        %v3069 = vmax.f32 %v3035, 0.0
        %v3070 = vmax.f32 %v3037, 0.0
        %v3071 = vld [vmem:[%s1025] sm:$0xff]
        %v3072 = vld [vmem:[%s1025 + $0x8] sm:$0xff]
        %v3073 = vld [vmem:[%s1025 + $0x10] sm:$0xff]
        %v3074 = vld [vmem:[%s1025 + $0x18] sm:$0xff]
        %v3075 = vld [vmem:[%s1025 + $0x20] sm:$0xff]
        %v3076 = vld [vmem:[%s1025 + $0x28] sm:$0xff]
        %v3077 = vld [vmem:[%s1025 + $0x30] sm:$0xff]
        %v3078 = vld [vmem:[%s1025 + $0x38] sm:$0xff]
        %v3079 = vld [vmem:[%s1025 + $0x40] sm:$0xff]
        %v3080 = vld [vmem:[%s1025 + $0x48] sm:$0xff]
        %v3081 = vld [vmem:[%s1025 + $0x50] sm:$0xff]
        %v3082 = vld [vmem:[%s1025 + $0x58] sm:$0xff]
        %v3083 = vld [vmem:[%s1025 + $0x60] sm:$0xff]
        %v3084 = vld [vmem:[%s1025 + $0x68] sm:$0xff]
        %v3085 = vld [vmem:[%s1025 + $0x70] sm:$0xff]
        %v3086 = vld [vmem:[%s1025 + $0x78] sm:$0xff]
        %v3087 = vld [vmem:[%s1025 + $0x80] sm:$0xff]
        %v3088 = vld [vmem:[%s1025 + $0x88] sm:$0xff]
        %v3089 = vld [vmem:[%s1025 + $0x90] sm:$0xff]
        %v3090 = vld [vmem:[%s1025 + $0x98] sm:$0xff]
        %v3091 = vld [vmem:[%s1025 + $0xa0] sm:$0xff]
        %v3092 = vld [vmem:[%s1025 + $0xa8] sm:$0xff]
        %v3093 = vld [vmem:[%s1025 + $0xb0] sm:$0xff]
        %v3094 = vld [vmem:[%s1025 + $0xb8] sm:$0xff]
        %v3095 = vld [vmem:[%s1025 + $0xc0] sm:$0xff]
        %v3096 = vld [vmem:[%s1025 + $0xc8] sm:$0xff]
        %v3097 = vld [vmem:[%s1025 + $0xd0] sm:$0xff]
        %v3098 = vld [vmem:[%s1025 + $0xd8] sm:$0xff]
        %v3099 = vld [vmem:[%s1025 + $0xe0] sm:$0xff]
        %v3100 = vld [vmem:[%s1025 + $0xe8] sm:$0xff]
        %v3101 = vld [vmem:[%s1025 + $0xf0] sm:$0xff]
        %v3102 = vld [vmem:[%s1025 + $0xf8] sm:$0xff]
        %v3103 = vld [vmem:[%s1025 + $0x100] sm:$0xff]
        %v3104 = vld [vmem:[%s1025 + $0x108] sm:$0xff]
        %v3105 = vld [vmem:[%s1025 + $0x110] sm:$0xff]
        %v3106 = vld [vmem:[%s1025 + $0x118] sm:$0xff]
        %v3107 = vld [vmem:[%s1025 + $0x120] sm:$0xff]
        %v3108 = vld [vmem:[%s1025 + $0x128] sm:$0xff]
        %v3109 = vld [vmem:[%s1025 + $0x130] sm:$0xff]
        %v3110 = vld [vmem:[%s1025 + $0x138] sm:$0xff]
        %v3111 = vld [vmem:[%s1025 + $0x140] sm:$0xff]
        %v3112 = vld [vmem:[%s1025 + $0x148] sm:$0xff]
        %v3113 = vld [vmem:[%s1025 + $0x150] sm:$0xff]
        %v3114 = vld [vmem:[%s1025 + $0x158] sm:$0xff]
        %v3115 = vld [vmem:[%s1025 + $0x160] sm:$0xff]
        %v3116 = vld [vmem:[%s1025 + $0x168] sm:$0xff]
        %v3117 = vld [vmem:[%s1025 + $0x170] sm:$0xff]
        %v3118 = vld [vmem:[%s1025 + $0x178] sm:$0xff]
        %v3119 = vld [vmem:[%s1025 + $0x180] sm:$0xff]
        %v3120 = vld [vmem:[%s1025 + $0x188] sm:$0xff]
        %v3121 = vld [vmem:[%s1025 + $0x190] sm:$0xff]
        %v3122 = vld [vmem:[%s1025 + $0x198] sm:$0xff]
        %v3123 = vld [vmem:[%s1025 + $0x1a0] sm:$0xff]
        %v3124 = vld [vmem:[%s1025 + $0x1a8] sm:$0xff]
        %v3125 = vld [vmem:[%s1025 + $0x1b0] sm:$0xff]
        %v3126 = vld [vmem:[%s1025 + $0x1b8] sm:$0xff]
        %v3127 = vld [vmem:[%s1025 + $0x1c0] sm:$0xff]
        %v3128 = vld [vmem:[%s1025 + $0x1c8] sm:$0xff]
        %v3129 = vld [vmem:[%s1025 + $0x1d0] sm:$0xff]
        %v3130 = vld [vmem:[%s1025 + $0x1d8] sm:$0xff]
        %v3131 = vld [vmem:[%s1025 + $0x1e0] sm:$0xff]
        %v3132 = vld [vmem:[%s1025 + $0x1e8] sm:$0xff]
        %v3133 = vld [vmem:[%s1025 + $0x1f0] sm:$0xff]
        %v3134 = vld [vmem:[%s1025 + $0x1f8] sm:$0xff]
        %v3135 = vld [vmem:[%s1025 + $0x200] sm:$0xff]
        %v3136 = vld [vmem:[%s1025 + $0x208] sm:$0xff]
        %v3137 = vld [vmem:[%s1025 + $0x210] sm:$0xff]
        %v3138 = vld [vmem:[%s1025 + $0x218] sm:$0xff]
        %v3139 = vld [vmem:[%s1025 + $0x220] sm:$0xff]
        %v3140 = vld [vmem:[%s1025 + $0x228] sm:$0xff]
        %v3141 = vld [vmem:[%s1025 + $0x230] sm:$0xff]
        %v3142 = vld [vmem:[%s1025 + $0x238] sm:$0xff]
        %v3143 = vld [vmem:[%s1025 + $0x240] sm:$0xff]
        %v3144 = vld [vmem:[%s1025 + $0x248] sm:$0xff]
        %v3145 = vld [vmem:[%s1025 + $0x250] sm:$0xff]
        %v3146 = vld [vmem:[%s1025 + $0x258] sm:$0xff]
        %v3147 = vld [vmem:[%s1025 + $0x260] sm:$0xff]
        %v3148 = vld [vmem:[%s1025 + $0x268] sm:$0xff]
        %v3149 = vld [vmem:[%s1025 + $0x270] sm:$0xff]
        %v3150 = vld [vmem:[%s1025 + $0x278] sm:$0xff]
        %v3151 = vld [vmem:[%s1025 + $0x280] sm:$0xff]
        %v3152 = vld [vmem:[%s1025 + $0x288] sm:$0xff]
        %v3153 = vld [vmem:[%s1025 + $0x290] sm:$0xff]
        %v3154 = vld [vmem:[%s1025 + $0x298] sm:$0xff]
        %v3155 = vld [vmem:[%s1025 + $0x2a0] sm:$0xff]
        %v3156 = vld [vmem:[%s1025 + $0x2a8] sm:$0xff]
        %v3157 = vld [vmem:[%s1025 + $0x2b0] sm:$0xff]
        %v3158 = vld [vmem:[%s1025 + $0x2b8] sm:$0xff]
        %v3159 = vld [vmem:[%s1025 + $0x2c0] sm:$0xff]
        %v3160 = vld [vmem:[%s1025 + $0x2c8] sm:$0xff]
        %v3161 = vld [vmem:[%s1025 + $0x2d0] sm:$0xff]
        %v3162 = vld [vmem:[%s1025 + $0x2d8] sm:$0xff]
        %v3163 = vld [vmem:[%s1025 + $0x2e0] sm:$0xff]
        %v3164 = vld [vmem:[%s1025 + $0x2e8] sm:$0xff]
        %v3165 = vld [vmem:[%s1025 + $0x2f0] sm:$0xff]
        %v3166 = vld [vmem:[%s1025 + $0x2f8] sm:$0xff]
        %v3167 = vld [vmem:[%s1025 + $0x300] sm:$0xff]
        %v3168 = vld [vmem:[%s1025 + $0x308] sm:$0xff]
        %v3169 = vld [vmem:[%s1025 + $0x310] sm:$0xff]
        %v3170 = vld [vmem:[%s1025 + $0x318] sm:$0xff]
        %v3171 = vld [vmem:[%s1025 + $0x320] sm:$0xff]
        %v3172 = vld [vmem:[%s1025 + $0x328] sm:$0xff]
        %v3173 = vld [vmem:[%s1025 + $0x330] sm:$0xff]
        %v3174 = vld [vmem:[%s1025 + $0x338] sm:$0xff]
        %v3175 = vld [vmem:[%s1025 + $0x340] sm:$0xff]
        %v3176 = vld [vmem:[%s1025 + $0x348] sm:$0xff]
        %v3177 = vld [vmem:[%s1025 + $0x350] sm:$0xff]
        %v3178 = vld [vmem:[%s1025 + $0x358] sm:$0xff]
        %v3179 = vld [vmem:[%s1025 + $0x360] sm:$0xff]
        %v3180 = vld [vmem:[%s1025 + $0x368] sm:$0xff]
        %v3181 = vld [vmem:[%s1025 + $0x370] sm:$0xff]
        %v3182 = vld [vmem:[%s1025 + $0x378] sm:$0xff]
        %v3183 = vld [vmem:[%s1025 + $0x380] sm:$0xff]
        %v3184 = vld [vmem:[%s1025 + $0x388] sm:$0xff]
        %v3185 = vld [vmem:[%s1025 + $0x390] sm:$0xff]
        %v3186 = vld [vmem:[%s1025 + $0x398] sm:$0xff]
        %v3187 = vld [vmem:[%s1025 + $0x3a0] sm:$0xff]
        %v3188 = vld [vmem:[%s1025 + $0x3a8] sm:$0xff]
        %v3189 = vld [vmem:[%s1025 + $0x3b0] sm:$0xff]
        %v3190 = vld [vmem:[%s1025 + $0x3b8] sm:$0xff]
        %v3191 = vld [vmem:[%s1025 + $0x3c0] sm:$0xff]
        %v3192 = vld [vmem:[%s1025 + $0x3c8] sm:$0xff]
        %v3193 = vld [vmem:[%s1025 + $0x3d0] sm:$0xff]
        %v3194 = vld [vmem:[%s1025 + $0x3d8] sm:$0xff]
        %v3195 = vld [vmem:[%s1025 + $0x3e0] sm:$0xff]
        %v3196 = vld [vmem:[%s1025 + $0x3e8] sm:$0xff]
        %v3197 = vld [vmem:[%s1025 + $0x3f0] sm:$0xff]
        %v3198 = vld [vmem:[%s1025 + $0x3f8] sm:$0xff]
        %v3199 = vld [vmem:[%s1025 + $0x400] sm:$0xff]
        %v3200 = vld [vmem:[%s1025 + $0x408] sm:$0xff]
        %v3201 = vld [vmem:[%s1025 + $0x410] sm:$0xff]
        %v3202 = vld [vmem:[%s1025 + $0x418] sm:$0xff]
        %v3203 = vld [vmem:[%s1025 + $0x420] sm:$0xff]
        %v3204 = vld [vmem:[%s1025 + $0x428] sm:$0xff]
        %v3205 = vld [vmem:[%s1025 + $0x430] sm:$0xff]
        %v3206 = vld [vmem:[%s1025 + $0x438] sm:$0xff]
        %v3207 = vld [vmem:[%s1025 + $0x440] sm:$0xff]
        %v3208 = vld [vmem:[%s1025 + $0x448] sm:$0xff]
        %v3209 = vld [vmem:[%s1025 + $0x450] sm:$0xff]
        %v3210 = vld [vmem:[%s1025 + $0x458] sm:$0xff]
        %v3211 = vld [vmem:[%s1025 + $0x460] sm:$0xff]
        %v3212 = vld [vmem:[%s1025 + $0x468] sm:$0xff]
        %v3213 = vld [vmem:[%s1025 + $0x470] sm:$0xff]
        %v3214 = vld [vmem:[%s1025 + $0x478] sm:$0xff]
        %v3215 = vld [vmem:[%s1025 + $0x480] sm:$0xff]
        %v3216 = vld [vmem:[%s1025 + $0x488] sm:$0xff]
        %v3217 = vld [vmem:[%s1025 + $0x490] sm:$0xff]
        %v3218 = vld [vmem:[%s1025 + $0x498] sm:$0xff]
        %v3219 = vld [vmem:[%s1025 + $0x4a0] sm:$0xff]
        %v3220 = vld [vmem:[%s1025 + $0x4a8] sm:$0xff]
        %v3221 = vld [vmem:[%s1025 + $0x4b0] sm:$0xff]
        %v3222 = vld [vmem:[%s1025 + $0x4b8] sm:$0xff]
        %v3223 = vld [vmem:[%s1025 + $0x4c0] sm:$0xff]
        %v3224 = vld [vmem:[%s1025 + $0x4c8] sm:$0xff]
        %v3225 = vld [vmem:[%s1025 + $0x4d0] sm:$0xff]
        %v3226 = vld [vmem:[%s1025 + $0x4d8] sm:$0xff]
        %v3227 = vld [vmem:[%s1025 + $0x4e0] sm:$0xff]
        %v3228 = vld [vmem:[%s1025 + $0x4e8] sm:$0xff]
        %v3229 = vld [vmem:[%s1025 + $0x4f0] sm:$0xff]
        %v3230 = vld [vmem:[%s1025 + $0x4f8] sm:$0xff]
        %v3231 = vld [vmem:[%s1025 + $0x500] sm:$0xff]
        %v3232 = vld [vmem:[%s1025 + $0x508] sm:$0xff]
        %v3233 = vld [vmem:[%s1025 + $0x510] sm:$0xff]
        %v3234 = vld [vmem:[%s1025 + $0x518] sm:$0xff]
        %v3235 = vld [vmem:[%s1025 + $0x520] sm:$0xff]
        %v3236 = vld [vmem:[%s1025 + $0x528] sm:$0xff]
        %v3237 = vld [vmem:[%s1025 + $0x530] sm:$0xff]
        %v3238 = vld [vmem:[%s1025 + $0x538] sm:$0xff]
        %v3239 = vld [vmem:[%s1025 + $0x540] sm:$0xff]
        %v3240 = vld [vmem:[%s1025 + $0x548] sm:$0xff]
        %v3241 = vld [vmem:[%s1025 + $0x550] sm:$0xff]
        %v3242 = vld [vmem:[%s1025 + $0x558] sm:$0xff]
        %v3243 = vld [vmem:[%s1025 + $0x560] sm:$0xff]
        %v3244 = vld [vmem:[%s1025 + $0x568] sm:$0xff]
        %v3245 = vld [vmem:[%s1025 + $0x570] sm:$0xff]
        %v3246 = vld [vmem:[%s1025 + $0x578] sm:$0xff]
        %v3247 = vld [vmem:[%s1025 + $0x580] sm:$0xff]
        %v3248 = vld [vmem:[%s1025 + $0x588] sm:$0xff]
        %v3249 = vld [vmem:[%s1025 + $0x590] sm:$0xff]
        %v3250 = vld [vmem:[%s1025 + $0x598] sm:$0xff]
        %v3251 = vld [vmem:[%s1025 + $0x5a0] sm:$0xff]
        %v3252 = vld [vmem:[%s1025 + $0x5a8] sm:$0xff]
        %v3253 = vld [vmem:[%s1025 + $0x5b0] sm:$0xff]
        %v3254 = vld [vmem:[%s1025 + $0x5b8] sm:$0xff]
        %v3255 = vld [vmem:[%s1025 + $0x5c0] sm:$0xff]
        %v3256 = vld [vmem:[%s1025 + $0x5c8] sm:$0xff]
        %v3257 = vld [vmem:[%s1025 + $0x5d0] sm:$0xff]
        %v3258 = vld [vmem:[%s1025 + $0x5d8] sm:$0xff]
        %v3259 = vld [vmem:[%s1025 + $0x5e0] sm:$0xff]
        %v3260 = vld [vmem:[%s1025 + $0x5e8] sm:$0xff]
        %v3261 = vld [vmem:[%s1025 + $0x5f0] sm:$0xff]
        %v3262 = vld [vmem:[%s1025 + $0x5f8] sm:$0xff]
        %v3263 = vld [vmem:[%s1025 + $0x600] sm:$0xff]
        %v3264 = vld [vmem:[%s1025 + $0x608] sm:$0xff]
        %v3265 = vld [vmem:[%s1025 + $0x610] sm:$0xff]
        %v3266 = vld [vmem:[%s1025 + $0x618] sm:$0xff]
        %v3267 = vld [vmem:[%s1025 + $0x620] sm:$0xff]
        %v3268 = vld [vmem:[%s1025 + $0x628] sm:$0xff]
        %v3269 = vld [vmem:[%s1025 + $0x630] sm:$0xff]
        %v3270 = vld [vmem:[%s1025 + $0x638] sm:$0xff]
        %v3271 = vld [vmem:[%s1025 + $0x640] sm:$0xff]
        %v3272 = vld [vmem:[%s1025 + $0x648] sm:$0xff]
        %v3273 = vld [vmem:[%s1025 + $0x650] sm:$0xff]
        %v3274 = vld [vmem:[%s1025 + $0x658] sm:$0xff]
        %v3275 = vld [vmem:[%s1025 + $0x660] sm:$0xff]
        %v3276 = vld [vmem:[%s1025 + $0x668] sm:$0xff]
        %v3277 = vld [vmem:[%s1025 + $0x670] sm:$0xff]
        %v3278 = vld [vmem:[%s1025 + $0x678] sm:$0xff]
        %v3279 = vld [vmem:[%s1025 + $0x680] sm:$0xff]
        %v3280 = vld [vmem:[%s1025 + $0x688] sm:$0xff]
        %v3281 = vld [vmem:[%s1025 + $0x690] sm:$0xff]
        %v3282 = vld [vmem:[%s1025 + $0x698] sm:$0xff]
        %v3283 = vld [vmem:[%s1025 + $0x6a0] sm:$0xff]
        %v3284 = vld [vmem:[%s1025 + $0x6a8] sm:$0xff]
        %v3285 = vld [vmem:[%s1025 + $0x6b0] sm:$0xff]
        %v3286 = vld [vmem:[%s1025 + $0x6b8] sm:$0xff]
        %v3287 = vld [vmem:[%s1025 + $0x6c0] sm:$0xff]
        %v3288 = vld [vmem:[%s1025 + $0x6c8] sm:$0xff]
        %v3289 = vld [vmem:[%s1025 + $0x6d0] sm:$0xff]
        %v3290 = vld [vmem:[%s1025 + $0x6d8] sm:$0xff]
        %v3291 = vld [vmem:[%s1025 + $0x6e0] sm:$0xff]
        %v3292 = vld [vmem:[%s1025 + $0x6e8] sm:$0xff]
        %v3293 = vld [vmem:[%s1025 + $0x6f0] sm:$0xff]
        %v3294 = vld [vmem:[%s1025 + $0x6f8] sm:$0xff]
        %v3295 = vld [vmem:[%s1025 + $0x700] sm:$0xff]
        %v3296 = vld [vmem:[%s1025 + $0x708] sm:$0xff]
        %v3297 = vld [vmem:[%s1025 + $0x710] sm:$0xff]
        %v3298 = vld [vmem:[%s1025 + $0x718] sm:$0xff]
        %v3299 = vld [vmem:[%s1025 + $0x720] sm:$0xff]
        %v3300 = vld [vmem:[%s1025 + $0x728] sm:$0xff]
        %v3301 = vld [vmem:[%s1025 + $0x730] sm:$0xff]
        %v3302 = vld [vmem:[%s1025 + $0x738] sm:$0xff]
        %v3303 = vld [vmem:[%s1025 + $0x740] sm:$0xff]
        %v3304 = vld [vmem:[%s1025 + $0x748] sm:$0xff]
        %v3305 = vld [vmem:[%s1025 + $0x750] sm:$0xff]
        %v3306 = vld [vmem:[%s1025 + $0x758] sm:$0xff]
        %v3307 = vld [vmem:[%s1025 + $0x760] sm:$0xff]
        %v3308 = vld [vmem:[%s1025 + $0x768] sm:$0xff]
        %v3309 = vld [vmem:[%s1025 + $0x770] sm:$0xff]
        %v3310 = vld [vmem:[%s1025 + $0x778] sm:$0xff]
        %v3311 = vld [vmem:[%s1025 + $0x780] sm:$0xff]
        %v3312 = vld [vmem:[%s1025 + $0x788] sm:$0xff]
        %v3313 = vld [vmem:[%s1025 + $0x790] sm:$0xff]
        %v3314 = vld [vmem:[%s1025 + $0x798] sm:$0xff]
        %v3315 = vld [vmem:[%s1025 + $0x7a0] sm:$0xff]
        %v3316 = vld [vmem:[%s1025 + $0x7a8] sm:$0xff]
        %v3317 = vld [vmem:[%s1025 + $0x7b0] sm:$0xff]
        %v3318 = vld [vmem:[%s1025 + $0x7b8] sm:$0xff]
        %v3319 = vld [vmem:[%s1025 + $0x7c0] sm:$0xff]
        %v3320 = vld [vmem:[%s1025 + $0x7c8] sm:$0xff]
        %v3321 = vld [vmem:[%s1025 + $0x7d0] sm:$0xff]
        %v3322 = vld [vmem:[%s1025 + $0x7d8] sm:$0xff]
        %v3323 = vld [vmem:[%s1025 + $0x7e0] sm:$0xff]
        %v3324 = vld [vmem:[%s1025 + $0x7e8] sm:$0xff]
        %v3325 = vld [vmem:[%s1025 + $0x7f0] sm:$0xff]
        %v3326 = vld [vmem:[%s1025 + $0x7f8] sm:$0xff]
        %v3327 = vld [vmem:[%s1028] sm:$0x1]
        %v3329 = vlaneseq
        %v3330 = vshrl.u32 %v3329, 7
        %v3331 = vsub.s32 0, %v3330
        %v3332 = vrot.slane %v3327, %v3331
        %3334 = vmatprep.subr.mxu0 0.0
        %3335 = vmatpush1.msra.mxu0 %v3071
        %3336 = vmatprep.subr.mxu0 0.0
        %3337 = vmatpush1.msra.mxu0 %v3072
        %3338 = vmatprep.subr.mxu0 0.0
        %3339 = vmatpush1.msra.mxu0 %v3073
        %3340 = vmatprep.subr.mxu0 0.0
        %3341 = vmatpush1.msra.mxu0 %v3074
        %3342 = vmatprep.subr.mxu0 0.0
        %3343 = vmatpush1.msra.mxu0 %v3075
        %3344 = vmatprep.subr.mxu0 0.0
        %3345 = vmatpush1.msra.mxu0 %v3076
        %3346 = vmatprep.subr.mxu0 0.0
        %3347 = vmatpush1.msra.mxu0 %v3077
        %3348 = vmatprep.subr.mxu0 0.0
        %3349 = vmatpush1.msra.mxu0 %v3078
        %3350 = vmatprep.subr.mxu0 0.0
        %3351 = vmatpush1.msra.mxu0 %v3079
        %3352 = vmatprep.subr.mxu0 0.0
        %3353 = vmatpush1.msra.mxu0 %v3080
        %3354 = vmatprep.subr.mxu0 0.0
        %3355 = vmatpush1.msra.mxu0 %v3081
        %3356 = vmatprep.subr.mxu0 0.0
        %3357 = vmatpush1.msra.mxu0 %v3082
        %3358 = vmatprep.subr.mxu0 0.0
        %3359 = vmatpush1.msra.mxu0 %v3083
        %3360 = vmatprep.subr.mxu0 0.0
        %3361 = vmatpush1.msra.mxu0 %v3084
        %3362 = vmatprep.subr.mxu0 0.0
        %3363 = vmatpush1.msra.mxu0 %v3085
        %3364 = vmatprep.subr.mxu0 0.0
        %3365 = vmatpush1.msra.mxu0 %v3086
        %3366 = vmatprep.subr.mxu0 0.0
        %3367 = vmatpush1.msra.mxu0 %v3087
        %3368 = vmatprep.subr.mxu0 0.0
        %3369 = vmatpush1.msra.mxu0 %v3088
        %3370 = vmatprep.subr.mxu0 0.0
        %3371 = vmatpush1.msra.mxu0 %v3089
        %3372 = vmatprep.subr.mxu0 0.0
        %3373 = vmatpush1.msra.mxu0 %v3090
        %3374 = vmatprep.subr.mxu0 0.0
        %3375 = vmatpush1.msra.mxu0 %v3091
        %3376 = vmatprep.subr.mxu0 0.0
        %3377 = vmatpush1.msra.mxu0 %v3092
        %3378 = vmatprep.subr.mxu0 0.0
        %3379 = vmatpush1.msra.mxu0 %v3093
        %3380 = vmatprep.subr.mxu0 0.0
        %3381 = vmatpush1.msra.mxu0 %v3094
        %3382 = vmatprep.subr.mxu0 0.0
        %3383 = vmatpush1.msra.mxu0 %v3095
        %3384 = vmatprep.subr.mxu0 0.0
        %3385 = vmatpush1.msra.mxu0 %v3096
        %3386 = vmatprep.subr.mxu0 0.0
        %3387 = vmatpush1.msra.mxu0 %v3097
        %3388 = vmatprep.subr.mxu0 0.0
        %3389 = vmatpush1.msra.mxu0 %v3098
        %3390 = vmatprep.subr.mxu0 0.0
        %3391 = vmatpush1.msra.mxu0 %v3099
        %3392 = vmatprep.subr.mxu0 0.0
        %3393 = vmatpush1.msra.mxu0 %v3100
        %3394 = vmatprep.subr.mxu0 0.0
        %3395 = vmatpush1.msra.mxu0 %v3101
        %3396 = vmatprep.subr.mxu0 0.0
        %3397 = vmatpush1.msra.mxu0 %v3102
        %3398 = vmatprep.mubr.f32.mxu0 %v3040
        %3399 = vmatmul.mubr.f32.gmra.mrb[0].mxu0 %v3039
        %v3400 = vpop.f32.mrb[0].mxu0
        %v3401 = vadd.f32 %v3332, %v3400
        %v3402 = vpop.f32.mrb[0].mxu0
        %3403 = vmatprep.mubr.f32.mxu0 %v3056
        %3404 = vmatmul.mubr.f32.gmra.mrb[0].mxu0 %v3055
        %v3405 = vpop.f32.mrb[0].mxu0
        %v3406 = vadd.f32 %v3332, %v3405
        %v3407 = vpop.f32.mrb[0].mxu0
        %3408 = vdwg.mxu0
        %3409 = vmatprep.subr.mxu0 0.0
        %3410 = vmatpush1.msra.mxu0 %v3103
        %3411 = vmatprep.subr.mxu0 0.0
        %3412 = vmatpush1.msra.mxu0 %v3104
        %3413 = vmatprep.subr.mxu0 0.0
        %3414 = vmatpush1.msra.mxu0 %v3105
        %3415 = vmatprep.subr.mxu0 0.0
        %3416 = vmatpush1.msra.mxu0 %v3106
        %3417 = vmatprep.subr.mxu0 0.0
        %3418 = vmatpush1.msra.mxu0 %v3107
        %3419 = vmatprep.subr.mxu0 0.0
        %3420 = vmatpush1.msra.mxu0 %v3108
        %3421 = vmatprep.subr.mxu0 0.0
        %3422 = vmatpush1.msra.mxu0 %v3109
        %3423 = vmatprep.subr.mxu0 0.0
        %3424 = vmatpush1.msra.mxu0 %v3110
        %3425 = vmatprep.subr.mxu0 0.0
        %3426 = vmatpush1.msra.mxu0 %v3111
        %3427 = vmatprep.subr.mxu0 0.0
        %3428 = vmatpush1.msra.mxu0 %v3112
        %3429 = vmatprep.subr.mxu0 0.0
        %3430 = vmatpush1.msra.mxu0 %v3113
        %3431 = vmatprep.subr.mxu0 0.0
        %3432 = vmatpush1.msra.mxu0 %v3114
        %3433 = vmatprep.subr.mxu0 0.0
        %3434 = vmatpush1.msra.mxu0 %v3115
        %3435 = vmatprep.subr.mxu0 0.0
        %3436 = vmatpush1.msra.mxu0 %v3116
        %3437 = vmatprep.subr.mxu0 0.0
        %3438 = vmatpush1.msra.mxu0 %v3117
        %3439 = vmatprep.subr.mxu0 0.0
        %3440 = vmatpush1.msra.mxu0 %v3118
        %3441 = vmatprep.subr.mxu0 0.0
        %3442 = vmatpush1.msra.mxu0 %v3119
        %3443 = vmatprep.subr.mxu0 0.0
        %3444 = vmatpush1.msra.mxu0 %v3120
        %3445 = vmatprep.subr.mxu0 0.0
        %3446 = vmatpush1.msra.mxu0 %v3121
        %3447 = vmatprep.subr.mxu0 0.0
        %3448 = vmatpush1.msra.mxu0 %v3122
        %3449 = vmatprep.subr.mxu0 0.0
        %3450 = vmatpush1.msra.mxu0 %v3123
        %3451 = vmatprep.subr.mxu0 0.0
        %3452 = vmatpush1.msra.mxu0 %v3124
        %3453 = vmatprep.subr.mxu0 0.0
        %3454 = vmatpush1.msra.mxu0 %v3125
        %3455 = vmatprep.subr.mxu0 0.0
        %3456 = vmatpush1.msra.mxu0 %v3126
        %3457 = vmatprep.subr.mxu0 0.0
        %3458 = vmatpush1.msra.mxu0 %v3127
        %3459 = vmatprep.subr.mxu0 0.0
        %3460 = vmatpush1.msra.mxu0 %v3128
        %3461 = vmatprep.subr.mxu0 0.0
        %3462 = vmatpush1.msra.mxu0 %v3129
        %3463 = vmatprep.subr.mxu0 0.0
        %3464 = vmatpush1.msra.mxu0 %v3130
        %3465 = vmatprep.subr.mxu0 0.0
        %3466 = vmatpush1.msra.mxu0 %v3131
        %3467 = vmatprep.subr.mxu0 0.0
        %3468 = vmatpush1.msra.mxu0 %v3132
        %3469 = vmatprep.subr.mxu0 0.0
        %3470 = vmatpush1.msra.mxu0 %v3133
        %3471 = vmatprep.subr.mxu0 0.0
        %3472 = vmatpush1.msra.mxu0 %v3134
        %3473 = vmatprep.mubr.f32.mxu0 %v3042
        %3474 = vmatmul.mubr.f32.gmra.mrb[0].mxu0 %v3041
        %v3475 = vpop.f32.mrb[0].mxu0
        %v3476 = vadd.f32 %v3401, %v3475
        %v3477 = vpop.f32.mrb[0].mxu0
        %3478 = vmatprep.mubr.f32.mxu0 %v3058
        %3479 = vmatmul.mubr.f32.gmra.mrb[0].mxu0 %v3057
        %v3480 = vpop.f32.mrb[0].mxu0
        %v3481 = vadd.f32 %v3406, %v3480
        %v3482 = vpop.f32.mrb[0].mxu0
        %3483 = vdwg.mxu0
        %3484 = vmatprep.subr.mxu0 0.0
        %3485 = vmatpush1.msra.mxu0 %v3135
        %3486 = vmatprep.subr.mxu0 0.0
        %3487 = vmatpush1.msra.mxu0 %v3136
        %3488 = vmatprep.subr.mxu0 0.0
        %3489 = vmatpush1.msra.mxu0 %v3137
        %3490 = vmatprep.subr.mxu0 0.0
        %3491 = vmatpush1.msra.mxu0 %v3138
        %3492 = vmatprep.subr.mxu0 0.0
        %3493 = vmatpush1.msra.mxu0 %v3139
        %3494 = vmatprep.subr.mxu0 0.0
        %3495 = vmatpush1.msra.mxu0 %v3140
        %3496 = vmatprep.subr.mxu0 0.0
        %3497 = vmatpush1.msra.mxu0 %v3141
        %3498 = vmatprep.subr.mxu0 0.0
        %3499 = vmatpush1.msra.mxu0 %v3142
        %3500 = vmatprep.subr.mxu0 0.0
        %3501 = vmatpush1.msra.mxu0 %v3143
        %3502 = vmatprep.subr.mxu0 0.0
        %3503 = vmatpush1.msra.mxu0 %v3144
        %3504 = vmatprep.subr.mxu0 0.0
        %3505 = vmatpush1.msra.mxu0 %v3145
        %3506 = vmatprep.subr.mxu0 0.0
        %3507 = vmatpush1.msra.mxu0 %v3146
        %3508 = vmatprep.subr.mxu0 0.0
        %3509 = vmatpush1.msra.mxu0 %v3147
        %3510 = vmatprep.subr.mxu0 0.0
        %3511 = vmatpush1.msra.mxu0 %v3148
        %3512 = vmatprep.subr.mxu0 0.0
        %3513 = vmatpush1.msra.mxu0 %v3149
        %3514 = vmatprep.subr.mxu0 0.0
        %3515 = vmatpush1.msra.mxu0 %v3150
        %3516 = vmatprep.subr.mxu0 0.0
        %3517 = vmatpush1.msra.mxu0 %v3151
        %3518 = vmatprep.subr.mxu0 0.0
        %3519 = vmatpush1.msra.mxu0 %v3152
        %3520 = vmatprep.subr.mxu0 0.0
        %3521 = vmatpush1.msra.mxu0 %v3153
        %3522 = vmatprep.subr.mxu0 0.0
        %3523 = vmatpush1.msra.mxu0 %v3154
        %3524 = vmatprep.subr.mxu0 0.0
        %3525 = vmatpush1.msra.mxu0 %v3155
        %3526 = vmatprep.subr.mxu0 0.0
        %3527 = vmatpush1.msra.mxu0 %v3156
        %3528 = vmatprep.subr.mxu0 0.0
        %3529 = vmatpush1.msra.mxu0 %v3157
        %3530 = vmatprep.subr.mxu0 0.0
        %3531 = vmatpush1.msra.mxu0 %v3158
        %3532 = vmatprep.subr.mxu0 0.0
        %3533 = vmatpush1.msra.mxu0 %v3159
        %3534 = vmatprep.subr.mxu0 0.0
        %3535 = vmatpush1.msra.mxu0 %v3160
        %3536 = vmatprep.subr.mxu0 0.0
        %3537 = vmatpush1.msra.mxu0 %v3161
        %3538 = vmatprep.subr.mxu0 0.0
        %3539 = vmatpush1.msra.mxu0 %v3162
        %3540 = vmatprep.subr.mxu0 0.0
        %3541 = vmatpush1.msra.mxu0 %v3163
        %3542 = vmatprep.subr.mxu0 0.0
        %3543 = vmatpush1.msra.mxu0 %v3164
        %3544 = vmatprep.subr.mxu0 0.0
        %3545 = vmatpush1.msra.mxu0 %v3165
        %3546 = vmatprep.subr.mxu0 0.0
        %3547 = vmatpush1.msra.mxu0 %v3166
        %3548 = vmatprep.mubr.f32.mxu0 %v3044
        %3549 = vmatmul.mubr.f32.gmra.mrb[0].mxu0 %v3043
        %v3550 = vpop.f32.mrb[0].mxu0
        %v3551 = vadd.f32 %v3476, %v3550
        %v3552 = vpop.f32.mrb[0].mxu0
        %3553 = vmatprep.mubr.f32.mxu0 %v3060
        %3554 = vmatmul.mubr.f32.gmra.mrb[0].mxu0 %v3059
        %v3555 = vpop.f32.mrb[0].mxu0
        %v3556 = vadd.f32 %v3481, %v3555
        %v3557 = vpop.f32.mrb[0].mxu0
        %3558 = vdwg.mxu0
        %3559 = vmatprep.subr.mxu0 0.0
        %3560 = vmatpush1.msra.mxu0 %v3167
        %3561 = vmatprep.subr.mxu0 0.0
        %3562 = vmatpush1.msra.mxu0 %v3168
        %3563 = vmatprep.subr.mxu0 0.0
        %3564 = vmatpush1.msra.mxu0 %v3169
        %3565 = vmatprep.subr.mxu0 0.0
        %3566 = vmatpush1.msra.mxu0 %v3170
        %3567 = vmatprep.subr.mxu0 0.0
        %3568 = vmatpush1.msra.mxu0 %v3171
        %3569 = vmatprep.subr.mxu0 0.0
        %3570 = vmatpush1.msra.mxu0 %v3172
        %3571 = vmatprep.subr.mxu0 0.0
        %3572 = vmatpush1.msra.mxu0 %v3173
        %3573 = vmatprep.subr.mxu0 0.0
        %3574 = vmatpush1.msra.mxu0 %v3174
        %3575 = vmatprep.subr.mxu0 0.0
        %3576 = vmatpush1.msra.mxu0 %v3175
        %3577 = vmatprep.subr.mxu0 0.0
        %3578 = vmatpush1.msra.mxu0 %v3176
        %3579 = vmatprep.subr.mxu0 0.0
        %3580 = vmatpush1.msra.mxu0 %v3177
        %3581 = vmatprep.subr.mxu0 0.0
        %3582 = vmatpush1.msra.mxu0 %v3178
        %3583 = vmatprep.subr.mxu0 0.0
        %3584 = vmatpush1.msra.mxu0 %v3179
        %3585 = vmatprep.subr.mxu0 0.0
        %3586 = vmatpush1.msra.mxu0 %v3180
        %3587 = vmatprep.subr.mxu0 0.0
        %3588 = vmatpush1.msra.mxu0 %v3181
        %3589 = vmatprep.subr.mxu0 0.0
        %3590 = vmatpush1.msra.mxu0 %v3182
        %3591 = vmatprep.subr.mxu0 0.0
        %3592 = vmatpush1.msra.mxu0 %v3183
        %3593 = vmatprep.subr.mxu0 0.0
        %3594 = vmatpush1.msra.mxu0 %v3184
        %3595 = vmatprep.subr.mxu0 0.0
        %3596 = vmatpush1.msra.mxu0 %v3185
        %3597 = vmatprep.subr.mxu0 0.0
        %3598 = vmatpush1.msra.mxu0 %v3186
        %3599 = vmatprep.subr.mxu0 0.0
        %3600 = vmatpush1.msra.mxu0 %v3187
        %3601 = vmatprep.subr.mxu0 0.0
        %3602 = vmatpush1.msra.mxu0 %v3188
        %3603 = vmatprep.subr.mxu0 0.0
        %3604 = vmatpush1.msra.mxu0 %v3189
        %3605 = vmatprep.subr.mxu0 0.0
        %3606 = vmatpush1.msra.mxu0 %v3190
        %3607 = vmatprep.subr.mxu0 0.0
        %3608 = vmatpush1.msra.mxu0 %v3191
        %3609 = vmatprep.subr.mxu0 0.0
        %3610 = vmatpush1.msra.mxu0 %v3192
        %3611 = vmatprep.subr.mxu0 0.0
        %3612 = vmatpush1.msra.mxu0 %v3193
        %3613 = vmatprep.subr.mxu0 0.0
        %3614 = vmatpush1.msra.mxu0 %v3194
        %3615 = vmatprep.subr.mxu0 0.0
        %3616 = vmatpush1.msra.mxu0 %v3195
        %3617 = vmatprep.subr.mxu0 0.0
        %3618 = vmatpush1.msra.mxu0 %v3196
        %3619 = vmatprep.subr.mxu0 0.0
        %3620 = vmatpush1.msra.mxu0 %v3197
        %3621 = vmatprep.subr.mxu0 0.0
        %3622 = vmatpush1.msra.mxu0 %v3198
        %3623 = vmatprep.mubr.f32.mxu0 %v3046
        %3624 = vmatmul.mubr.f32.gmra.mrb[0].mxu0 %v3045
        %v3625 = vpop.f32.mrb[0].mxu0
        %v3626 = vadd.f32 %v3551, %v3625
        %v3627 = vpop.f32.mrb[0].mxu0
        %3628 = vmatprep.mubr.f32.mxu0 %v3062
        %3629 = vmatmul.mubr.f32.gmra.mrb[0].mxu0 %v3061
        %v3630 = vpop.f32.mrb[0].mxu0
        %v3631 = vadd.f32 %v3556, %v3630
        %v3632 = vpop.f32.mrb[0].mxu0
        %3633 = vdwg.mxu0
        %3634 = vmatprep.subr.mxu0 0.0
        %3635 = vmatpush1.msra.mxu0 %v3199
        %3636 = vmatprep.subr.mxu0 0.0
        %3637 = vmatpush1.msra.mxu0 %v3200
        %3638 = vmatprep.subr.mxu0 0.0
        %3639 = vmatpush1.msra.mxu0 %v3201
        %3640 = vmatprep.subr.mxu0 0.0
        %3641 = vmatpush1.msra.mxu0 %v3202
        %3642 = vmatprep.subr.mxu0 0.0
        %3643 = vmatpush1.msra.mxu0 %v3203
        %3644 = vmatprep.subr.mxu0 0.0
        %3645 = vmatpush1.msra.mxu0 %v3204
        %3646 = vmatprep.subr.mxu0 0.0
        %3647 = vmatpush1.msra.mxu0 %v3205
        %3648 = vmatprep.subr.mxu0 0.0
        %3649 = vmatpush1.msra.mxu0 %v3206
        %3650 = vmatprep.subr.mxu0 0.0
        %3651 = vmatpush1.msra.mxu0 %v3207
        %3652 = vmatprep.subr.mxu0 0.0
        %3653 = vmatpush1.msra.mxu0 %v3208
        %3654 = vmatprep.subr.mxu0 0.0
        %3655 = vmatpush1.msra.mxu0 %v3209
        %3656 = vmatprep.subr.mxu0 0.0
        %3657 = vmatpush1.msra.mxu0 %v3210
        %3658 = vmatprep.subr.mxu0 0.0
        %3659 = vmatpush1.msra.mxu0 %v3211
        %3660 = vmatprep.subr.mxu0 0.0
        %3661 = vmatpush1.msra.mxu0 %v3212
        %3662 = vmatprep.subr.mxu0 0.0
        %3663 = vmatpush1.msra.mxu0 %v3213
        %3664 = vmatprep.subr.mxu0 0.0
        %3665 = vmatpush1.msra.mxu0 %v3214
        %3666 = vmatprep.subr.mxu0 0.0
        %3667 = vmatpush1.msra.mxu0 %v3215
        %3668 = vmatprep.subr.mxu0 0.0
        %3669 = vmatpush1.msra.mxu0 %v3216
        %3670 = vmatprep.subr.mxu0 0.0
        %3671 = vmatpush1.msra.mxu0 %v3217
        %3672 = vmatprep.subr.mxu0 0.0
        %3673 = vmatpush1.msra.mxu0 %v3218
        %3674 = vmatprep.subr.mxu0 0.0
        %3675 = vmatpush1.msra.mxu0 %v3219
        %3676 = vmatprep.subr.mxu0 0.0
        %3677 = vmatpush1.msra.mxu0 %v3220
        %3678 = vmatprep.subr.mxu0 0.0
        %3679 = vmatpush1.msra.mxu0 %v3221
        %3680 = vmatprep.subr.mxu0 0.0
        %3681 = vmatpush1.msra.mxu0 %v3222
        %3682 = vmatprep.subr.mxu0 0.0
        %3683 = vmatpush1.msra.mxu0 %v3223
        %3684 = vmatprep.subr.mxu0 0.0
        %3685 = vmatpush1.msra.mxu0 %v3224
        %3686 = vmatprep.subr.mxu0 0.0
        %3687 = vmatpush1.msra.mxu0 %v3225
        %3688 = vmatprep.subr.mxu0 0.0
        %3689 = vmatpush1.msra.mxu0 %v3226
        %3690 = vmatprep.subr.mxu0 0.0
        %3691 = vmatpush1.msra.mxu0 %v3227
        %3692 = vmatprep.subr.mxu0 0.0
        %3693 = vmatpush1.msra.mxu0 %v3228
        %3694 = vmatprep.subr.mxu0 0.0
        %3695 = vmatpush1.msra.mxu0 %v3229
        %3696 = vmatprep.subr.mxu0 0.0
        %3697 = vmatpush1.msra.mxu0 %v3230
        %3698 = vmatprep.mubr.f32.mxu0 %v3048
        %3699 = vmatmul.mubr.f32.gmra.mrb[0].mxu0 %v3047
        %v3700 = vpop.f32.mrb[0].mxu0
        %v3701 = vadd.f32 %v3626, %v3700
        %v3702 = vpop.f32.mrb[0].mxu0
        %3703 = vmatprep.mubr.f32.mxu0 %v3064
        %3704 = vmatmul.mubr.f32.gmra.mrb[0].mxu0 %v3063
        %v3705 = vpop.f32.mrb[0].mxu0
        %v3706 = vadd.f32 %v3631, %v3705
        %v3707 = vpop.f32.mrb[0].mxu0
        %3708 = vdwg.mxu0
        %3709 = vmatprep.subr.mxu0 0.0
        %3710 = vmatpush1.msra.mxu0 %v3231
        %3711 = vmatprep.subr.mxu0 0.0
        %3712 = vmatpush1.msra.mxu0 %v3232
        %3713 = vmatprep.subr.mxu0 0.0
        %3714 = vmatpush1.msra.mxu0 %v3233
        %3715 = vmatprep.subr.mxu0 0.0
        %3716 = vmatpush1.msra.mxu0 %v3234
        %3717 = vmatprep.subr.mxu0 0.0
        %3718 = vmatpush1.msra.mxu0 %v3235
        %3719 = vmatprep.subr.mxu0 0.0
        %3720 = vmatpush1.msra.mxu0 %v3236
        %3721 = vmatprep.subr.mxu0 0.0
        %3722 = vmatpush1.msra.mxu0 %v3237
        %3723 = vmatprep.subr.mxu0 0.0
        %3724 = vmatpush1.msra.mxu0 %v3238
        %3725 = vmatprep.subr.mxu0 0.0
        %3726 = vmatpush1.msra.mxu0 %v3239
        %3727 = vmatprep.subr.mxu0 0.0
        %3728 = vmatpush1.msra.mxu0 %v3240
        %3729 = vmatprep.subr.mxu0 0.0
        %3730 = vmatpush1.msra.mxu0 %v3241
        %3731 = vmatprep.subr.mxu0 0.0
        %3732 = vmatpush1.msra.mxu0 %v3242
        %3733 = vmatprep.subr.mxu0 0.0
        %3734 = vmatpush1.msra.mxu0 %v3243
        %3735 = vmatprep.subr.mxu0 0.0
        %3736 = vmatpush1.msra.mxu0 %v3244
        %3737 = vmatprep.subr.mxu0 0.0
        %3738 = vmatpush1.msra.mxu0 %v3245
        %3739 = vmatprep.subr.mxu0 0.0
        %3740 = vmatpush1.msra.mxu0 %v3246
        %3741 = vmatprep.subr.mxu0 0.0
        %3742 = vmatpush1.msra.mxu0 %v3247
        %3743 = vmatprep.subr.mxu0 0.0
        %3744 = vmatpush1.msra.mxu0 %v3248
        %3745 = vmatprep.subr.mxu0 0.0
        %3746 = vmatpush1.msra.mxu0 %v3249
        %3747 = vmatprep.subr.mxu0 0.0
        %3748 = vmatpush1.msra.mxu0 %v3250
        %3749 = vmatprep.subr.mxu0 0.0
        %3750 = vmatpush1.msra.mxu0 %v3251
        %3751 = vmatprep.subr.mxu0 0.0
        %3752 = vmatpush1.msra.mxu0 %v3252
        %3753 = vmatprep.subr.mxu0 0.0
        %3754 = vmatpush1.msra.mxu0 %v3253
        %3755 = vmatprep.subr.mxu0 0.0
        %3756 = vmatpush1.msra.mxu0 %v3254
        %3757 = vmatprep.subr.mxu0 0.0
        %3758 = vmatpush1.msra.mxu0 %v3255
        %3759 = vmatprep.subr.mxu0 0.0
        %3760 = vmatpush1.msra.mxu0 %v3256
        %3761 = vmatprep.subr.mxu0 0.0
        %3762 = vmatpush1.msra.mxu0 %v3257
        %3763 = vmatprep.subr.mxu0 0.0
        %3764 = vmatpush1.msra.mxu0 %v3258
        %3765 = vmatprep.subr.mxu0 0.0
        %3766 = vmatpush1.msra.mxu0 %v3259
        %3767 = vmatprep.subr.mxu0 0.0
        %3768 = vmatpush1.msra.mxu0 %v3260
        %3769 = vmatprep.subr.mxu0 0.0
        %3770 = vmatpush1.msra.mxu0 %v3261
        %3771 = vmatprep.subr.mxu0 0.0
        %3772 = vmatpush1.msra.mxu0 %v3262
        %3773 = vmatprep.mubr.f32.mxu0 %v3050
        %3774 = vmatmul.mubr.f32.gmra.mrb[0].mxu0 %v3049
        %v3775 = vpop.f32.mrb[0].mxu0
        %v3776 = vadd.f32 %v3701, %v3775
        %v3777 = vpop.f32.mrb[0].mxu0
        %3778 = vmatprep.mubr.f32.mxu0 %v3066
        %3779 = vmatmul.mubr.f32.gmra.mrb[0].mxu0 %v3065
        %v3780 = vpop.f32.mrb[0].mxu0
        %v3781 = vadd.f32 %v3706, %v3780
        %v3782 = vpop.f32.mrb[0].mxu0
        %3783 = vdwg.mxu0
        %3784 = vmatprep.subr.mxu0 0.0
        %3785 = vmatpush1.msra.mxu0 %v3263
        %3786 = vmatprep.subr.mxu0 0.0
        %3787 = vmatpush1.msra.mxu0 %v3264
        %3788 = vmatprep.subr.mxu0 0.0
        %3789 = vmatpush1.msra.mxu0 %v3265
        %3790 = vmatprep.subr.mxu0 0.0
        %3791 = vmatpush1.msra.mxu0 %v3266
        %3792 = vmatprep.subr.mxu0 0.0
        %3793 = vmatpush1.msra.mxu0 %v3267
        %3794 = vmatprep.subr.mxu0 0.0
        %3795 = vmatpush1.msra.mxu0 %v3268
        %3796 = vmatprep.subr.mxu0 0.0
        %3797 = vmatpush1.msra.mxu0 %v3269
        %3798 = vmatprep.subr.mxu0 0.0
        %3799 = vmatpush1.msra.mxu0 %v3270
        %3800 = vmatprep.subr.mxu0 0.0
        %3801 = vmatpush1.msra.mxu0 %v3271
        %3802 = vmatprep.subr.mxu0 0.0
        %3803 = vmatpush1.msra.mxu0 %v3272
        %3804 = vmatprep.subr.mxu0 0.0
        %3805 = vmatpush1.msra.mxu0 %v3273
        %3806 = vmatprep.subr.mxu0 0.0
        %3807 = vmatpush1.msra.mxu0 %v3274
        %3808 = vmatprep.subr.mxu0 0.0
        %3809 = vmatpush1.msra.mxu0 %v3275
        %3810 = vmatprep.subr.mxu0 0.0
        %3811 = vmatpush1.msra.mxu0 %v3276
        %3812 = vmatprep.subr.mxu0 0.0
        %3813 = vmatpush1.msra.mxu0 %v3277
        %3814 = vmatprep.subr.mxu0 0.0
        %3815 = vmatpush1.msra.mxu0 %v3278
        %3816 = vmatprep.subr.mxu0 0.0
        %3817 = vmatpush1.msra.mxu0 %v3279
        %3818 = vmatprep.subr.mxu0 0.0
        %3819 = vmatpush1.msra.mxu0 %v3280
        %3820 = vmatprep.subr.mxu0 0.0
        %3821 = vmatpush1.msra.mxu0 %v3281
        %3822 = vmatprep.subr.mxu0 0.0
        %3823 = vmatpush1.msra.mxu0 %v3282
        %3824 = vmatprep.subr.mxu0 0.0
        %3825 = vmatpush1.msra.mxu0 %v3283
        %3826 = vmatprep.subr.mxu0 0.0
        %3827 = vmatpush1.msra.mxu0 %v3284
        %3828 = vmatprep.subr.mxu0 0.0
        %3829 = vmatpush1.msra.mxu0 %v3285
        %3830 = vmatprep.subr.mxu0 0.0
        %3831 = vmatpush1.msra.mxu0 %v3286
        %3832 = vmatprep.subr.mxu0 0.0
        %3833 = vmatpush1.msra.mxu0 %v3287
        %3834 = vmatprep.subr.mxu0 0.0
        %3835 = vmatpush1.msra.mxu0 %v3288
        %3836 = vmatprep.subr.mxu0 0.0
        %3837 = vmatpush1.msra.mxu0 %v3289
        %3838 = vmatprep.subr.mxu0 0.0
        %3839 = vmatpush1.msra.mxu0 %v3290
        %3840 = vmatprep.subr.mxu0 0.0
        %3841 = vmatpush1.msra.mxu0 %v3291
        %3842 = vmatprep.subr.mxu0 0.0
        %3843 = vmatpush1.msra.mxu0 %v3292
        %3844 = vmatprep.subr.mxu0 0.0
        %3845 = vmatpush1.msra.mxu0 %v3293
        %3846 = vmatprep.subr.mxu0 0.0
        %3847 = vmatpush1.msra.mxu0 %v3294
        %3848 = vmatprep.mubr.f32.mxu0 %v3052
        %3849 = vmatmul.mubr.f32.gmra.mrb[0].mxu0 %v3051
        %v3850 = vpop.f32.mrb[0].mxu0
        %v3851 = vadd.f32 %v3776, %v3850
        %v3852 = vpop.f32.mrb[0].mxu0
        %3853 = vmatprep.mubr.f32.mxu0 %v3068
        %3854 = vmatmul.mubr.f32.gmra.mrb[0].mxu0 %v3067
        %v3855 = vpop.f32.mrb[0].mxu0
        %v3856 = vadd.f32 %v3781, %v3855
        %v3857 = vpop.f32.mrb[0].mxu0
        %3858 = vdwg.mxu0
        %3859 = vmatprep.subr.mxu0 0.0
        %3860 = vmatpush1.msra.mxu0 %v3295
        %3861 = vmatprep.subr.mxu0 0.0
        %3862 = vmatpush1.msra.mxu0 %v3296
        %3863 = vmatprep.subr.mxu0 0.0
        %3864 = vmatpush1.msra.mxu0 %v3297
        %3865 = vmatprep.subr.mxu0 0.0
        %3866 = vmatpush1.msra.mxu0 %v3298
        %3867 = vmatprep.subr.mxu0 0.0
        %3868 = vmatpush1.msra.mxu0 %v3299
        %3869 = vmatprep.subr.mxu0 0.0
        %3870 = vmatpush1.msra.mxu0 %v3300
        %3871 = vmatprep.subr.mxu0 0.0
        %3872 = vmatpush1.msra.mxu0 %v3301
        %3873 = vmatprep.subr.mxu0 0.0
        %3874 = vmatpush1.msra.mxu0 %v3302
        %3875 = vmatprep.subr.mxu0 0.0
        %3876 = vmatpush1.msra.mxu0 %v3303
        %3877 = vmatprep.subr.mxu0 0.0
        %3878 = vmatpush1.msra.mxu0 %v3304
        %3879 = vmatprep.subr.mxu0 0.0
        %3880 = vmatpush1.msra.mxu0 %v3305
        %3881 = vmatprep.subr.mxu0 0.0
        %3882 = vmatpush1.msra.mxu0 %v3306
        %3883 = vmatprep.subr.mxu0 0.0
        %3884 = vmatpush1.msra.mxu0 %v3307
        %3885 = vmatprep.subr.mxu0 0.0
        %3886 = vmatpush1.msra.mxu0 %v3308
        %3887 = vmatprep.subr.mxu0 0.0
        %3888 = vmatpush1.msra.mxu0 %v3309
        %3889 = vmatprep.subr.mxu0 0.0
        %3890 = vmatpush1.msra.mxu0 %v3310
        %3891 = vmatprep.subr.mxu0 0.0
        %3892 = vmatpush1.msra.mxu0 %v3311
        %3893 = vmatprep.subr.mxu0 0.0
        %3894 = vmatpush1.msra.mxu0 %v3312
        %3895 = vmatprep.subr.mxu0 0.0
        %3896 = vmatpush1.msra.mxu0 %v3313
        %3897 = vmatprep.subr.mxu0 0.0
        %3898 = vmatpush1.msra.mxu0 %v3314
        %3899 = vmatprep.subr.mxu0 0.0
        %3900 = vmatpush1.msra.mxu0 %v3315
        %3901 = vmatprep.subr.mxu0 0.0
        %3902 = vmatpush1.msra.mxu0 %v3316
        %3903 = vmatprep.subr.mxu0 0.0
        %3904 = vmatpush1.msra.mxu0 %v3317
        %3905 = vmatprep.subr.mxu0 0.0
        %3906 = vmatpush1.msra.mxu0 %v3318
        %3907 = vmatprep.subr.mxu0 0.0
        %3908 = vmatpush1.msra.mxu0 %v3319
        %3909 = vmatprep.subr.mxu0 0.0
        %3910 = vmatpush1.msra.mxu0 %v3320
        %3911 = vmatprep.subr.mxu0 0.0
        %3912 = vmatpush1.msra.mxu0 %v3321
        %3913 = vmatprep.subr.mxu0 0.0
        %3914 = vmatpush1.msra.mxu0 %v3322
        %3915 = vmatprep.subr.mxu0 0.0
        %3916 = vmatpush1.msra.mxu0 %v3323
        %3917 = vmatprep.subr.mxu0 0.0
        %3918 = vmatpush1.msra.mxu0 %v3324
        %3919 = vmatprep.subr.mxu0 0.0
        %3920 = vmatpush1.msra.mxu0 %v3325
        %3921 = vmatprep.subr.mxu0 0.0
        %3922 = vmatpush1.msra.mxu0 %v3326
        %3923 = vmatprep.mubr.f32.mxu0 %v3054
        %3924 = vmatmul.mubr.f32.gmra.mrb[0].mxu0 %v3053
        %v3925 = vpop.f32.mrb[0].mxu0
        %v3926 = vadd.f32 %v3851, %v3925
        %v3927 = vpop.f32.mrb[0].mxu0
        %3928 = vmatprep.mubr.f32.mxu0 %v3070
        %3929 = vmatmul.mubr.f32.gmra.mrb[0].mxu0 %v3069
        %v3930 = vpop.f32.mrb[0].mxu0
        %v3931 = vadd.f32 %v3856, %v3930
        %v3932 = vpop.f32.mrb[0].mxu0
        %3933 = vdwg.mxu0
        %v3934 = vadd.f32 %v2267, %v3926
        %v3935 = vadd.f32 %v2268, %v3931
        %v3936 = vsel %vm1195, %v3934, 0.0
        %3937 = vadd.xlane.f32.xlu0 %v3936
        %v3938 = vpop.xlane.xlu0 %3937
        %v3939 = vsel %vm1195, %v3935, 0.0
        %3940 = vadd.xlane.f32.xlu0 %v3939
        %v3941 = vpop.xlane.xlu0 %3940
        %v3942 = vmul.f32 %v3938, %v2230
        %v3943 = vmul.f32 %v3941, %v2230
        %v3944 = vsub.f32 %v3934, %v3942
        %v3945 = vsub.f32 %v3935, %v3943
        %v3946 = vmul.f32 %v3944, %v3944
        %v3947 = vmul.f32 %v3945, %v3945
        %v3948 = vsel %vm1195, %v3946, 0.0
        %3949 = vadd.xlane.f32.xlu0 %v3948
        %v3950 = vpop.xlane.xlu0 %3949
        %v3951 = vsel %vm1195, %v3947, 0.0
        %3952 = vadd.xlane.f32.xlu0 %v3951
        %v3953 = vpop.xlane.xlu0 %3952
        %v3954 = vmul.f32 %v3950, %v2230
        %v3955 = vmul.f32 %v3953, %v2230
        %v3956 = vadd.f32 %v3954, 1e-05
        %v3957 = vadd.f32 %v3955, 1e-05
        %v3958 = vrsqrt.pop %v3956
        %v3959 = vrsqrt.pop %v3957
        %v3960 = vmul.f32 %v3944, %v3958
        %v3961 = vmul.f32 %v3945, %v3959
        %v3962 = vld [vmem:[%s1037] sm:$0x1]
        %v3964 = vlaneseq
        %v3965 = vshrl.u32 %v3964, 7
        %v3966 = vsub.s32 0, %v3965
        %v3967 = vrot.slane %v3962, %v3966
        %v3969 = vmul.f32 %v3960, %v3967
        %v3970 = vmul.f32 %v3961, %v3967
        %v3971 = vld [vmem:[%s1040] sm:$0x1]
        %v3973 = vlaneseq
        %v3974 = vshrl.u32 %v3973, 7
        %v3975 = vsub.s32 0, %v3974
        %v3976 = vrot.slane %v3971, %v3975
        %v3978 = vadd.f32 %v3969, %v3976
        %v3979 = vadd.f32 %v3970, %v3976
        %3980 = vst.msk [vmem:[#allocation3] sm:$0xff] %vm1195, %v3978
        %3981 = vst.msk [vmem:[#allocation3 + $0x8] sm:$0xff] %vm1195, %v3979
        %p3982 = scmp.eq.s32.totalorder %s48, 1
        // Predicated region
        $region133: #{tf_model_forward.1} parent=127 // pred_check
          %p3983 = pneg %p3982
        $region134: #{tf_model_forward.1} parent=127 // pred_check_branch
          %3985 = sbr.rel (%p3983) target = $region136
        $region135: #{tf_model_forward.1} parent=127 // pred_region
          %v3986 = vld [vmem:[%s19] sm:$0xff]
          %v3987 = vld [vmem:[%s19 + $0x8] sm:$0xff]
          %v3988 = vld [vmem:[%s19 + $0x10] sm:$0xff]
          %v3989 = vld [vmem:[%s19 + $0x18] sm:$0xff]
          %v3990 = vld [vmem:[%s20] sm:$0x1]
          %v3992 = vlaneseq
          %v3993 = vshrl.u32 %v3992, 7
          %v3994 = vsub.s32 0, %v3993
          %v3995 = vrot.slane %v3990, %v3994
          %v3998 = vsel %vm1195, %v3978, 0
          %v4001 = vsel %vm1195, %v3979, 0
          %4003 = vmatprep.subr.mxu0 0.0
          %4004 = vmatpush1.msra.mxu0 %v3986
          %4005 = vmatprep.subr.mxu0 0.0
          %4006 = vmatpush1.msra.mxu0 %v3987
          %4007 = vmatprep.subr.mxu0 0.0
          %4008 = vmatpush1.msra.mxu0 %v3988
          %4009 = vmatprep.subr.mxu0 0.0
          %4010 = vmatpush1.msra.mxu0 %v3989
          %4011 = vmatprep.subr.mxu0 0.0
          %4012 = vmatpush1.msra.mxu0 0.0
          %4013 = vmatprep.subr.mxu0 0.0
          %4014 = vmatpush1.msra.mxu0 0.0
          %4015 = vmatprep.subr.mxu0 0.0
          %4016 = vmatpush1.msra.mxu0 0.0
          %4017 = vmatprep.subr.mxu0 0.0
          %4018 = vmatpush1.msra.mxu0 0.0
          %4019 = vmatprep.subr.mxu0 0.0
          %4020 = vmatpush1.msra.mxu0 0.0
          %4021 = vmatprep.subr.mxu0 0.0
          %4022 = vmatpush1.msra.mxu0 0.0
          %4023 = vmatprep.subr.mxu0 0.0
          %4024 = vmatpush1.msra.mxu0 0.0
          %4025 = vmatprep.subr.mxu0 0.0
          %4026 = vmatpush1.msra.mxu0 0.0
          %4027 = vmatprep.subr.mxu0 0.0
          %4028 = vmatpush1.msra.mxu0 0.0
          %4029 = vmatprep.subr.mxu0 0.0
          %4030 = vmatpush1.msra.mxu0 0.0
          %4031 = vmatprep.subr.mxu0 0.0
          %4032 = vmatpush1.msra.mxu0 0.0
          %4033 = vmatprep.subr.mxu0 0.0
          %4034 = vmatpush1.msra.mxu0 0.0
          %4035 = vmatprep.subr.mxu0 0.0
          %4036 = vmatpush1.msra.mxu0 0.0
          %4037 = vmatprep.subr.mxu0 0.0
          %4038 = vmatpush1.msra.mxu0 0.0
          %4039 = vmatprep.subr.mxu0 0.0
          %4040 = vmatpush1.msra.mxu0 0.0
          %4041 = vmatprep.subr.mxu0 0.0
          %4042 = vmatpush1.msra.mxu0 0.0
          %4043 = vmatprep.subr.mxu0 0.0
          %4044 = vmatpush1.msra.mxu0 0.0
          %4045 = vmatprep.subr.mxu0 0.0
          %4046 = vmatpush1.msra.mxu0 0.0
          %4047 = vmatprep.subr.mxu0 0.0
          %4048 = vmatpush1.msra.mxu0 0.0
          %4049 = vmatprep.subr.mxu0 0.0
          %4050 = vmatpush1.msra.mxu0 0.0
          %4051 = vmatprep.subr.mxu0 0.0
          %4052 = vmatpush1.msra.mxu0 0.0
          %4053 = vmatprep.subr.mxu0 0.0
          %4054 = vmatpush1.msra.mxu0 0.0
          %4055 = vmatprep.subr.mxu0 0.0
          %4056 = vmatpush1.msra.mxu0 0.0
          %4057 = vmatprep.subr.mxu0 0.0
          %4058 = vmatpush1.msra.mxu0 0.0
          %4059 = vmatprep.subr.mxu0 0.0
          %4060 = vmatpush1.msra.mxu0 0.0
          %4061 = vmatprep.subr.mxu0 0.0
          %4062 = vmatpush1.msra.mxu0 0.0
          %4063 = vmatprep.subr.mxu0 0.0
          %4064 = vmatpush1.msra.mxu0 0.0
          %4065 = vmatprep.subr.mxu0 0.0
          %4066 = vmatpush1.msra.mxu0 0.0
          %4067 = vmatprep.mubr.f32.mxu0 0.0
          %4068 = vmatmul.mubr.f32.gmra.mrb[0].mxu0 %v3998
          %v4069 = vpop.f32.mrb[0].mxu0
          %v4070 = vadd.f32 %v3995, %v4069
          %v4071 = vpop.f32.mrb[0].mxu0
          %4072 = vmatprep.mubr.f32.mxu0 0.0
          %4073 = vmatmul.mubr.f32.gmra.mrb[0].mxu0 %v4001
          %v4074 = vpop.f32.mrb[0].mxu0
          %v4075 = vadd.f32 %v3995, %v4074
          %v4076 = vpop.f32.mrb[0].mxu0
          %4077 = vdwg.mxu0
          %v4078 = vmax.f32 %v4070, 0.0
          %v4079 = vmax.f32 %v4075, 0.0
          %v4080 = vld [vmem:[%s21] sm:$0x1]
          %v4081 = vld [vmem:[#allocation4] sm:$0x1]
          %4083 = vset.pattern.permute.xlu0 0
          %4084 = vperm.xlu0 %4083, %v4081
          %v4085 = vpop.permute.xlu0 %4084
          %v4087 = vlaneseq
          %v4088 = vshrl.u32 %v4087, 7
          %v4089 = vsub.s32 0, %v4088
          %v4090 = vrot.slane %v4085, %v4089
          %v4092 = vsel %vm1371, %v4080, 0
          %v4095 = vsel %vm1371, %v4078, 0
          %v4098 = vsel %vm1371, %v4079, 0
          %4100 = vmatprep.subr.mxu0 0.0
          %4101 = vmatpush1.xpose.msra.mxu0 %v4095
          %4102 = vmatprep.subr.mxu0 0.0
          %4103 = vmatpush1.xpose.msra.mxu0 %v4098
          %4104 = vmatprep.subr.mxu0 0.0
          %4105 = vmatpush1.xpose.msra.mxu0 0.0
          %4106 = vmatprep.subr.mxu0 0.0
          %4107 = vmatpush1.xpose.msra.mxu0 0.0
          %4108 = vmatprep.subr.mxu0 0.0
          %4109 = vmatpush1.xpose.msra.mxu0 0.0
          %4110 = vmatprep.subr.mxu0 0.0
          %4111 = vmatpush1.xpose.msra.mxu0 0.0
          %4112 = vmatprep.subr.mxu0 0.0
          %4113 = vmatpush1.xpose.msra.mxu0 0.0
          %4114 = vmatprep.subr.mxu0 0.0
          %4115 = vmatpush1.xpose.msra.mxu0 0.0
          %4116 = vmatprep.subr.mxu0 0.0
          %4117 = vmatpush1.xpose.msra.mxu0 0.0
          %4118 = vmatprep.subr.mxu0 0.0
          %4119 = vmatpush1.xpose.msra.mxu0 0.0
          %4120 = vmatprep.subr.mxu0 0.0
          %4121 = vmatpush1.xpose.msra.mxu0 0.0
          %4122 = vmatprep.subr.mxu0 0.0
          %4123 = vmatpush1.xpose.msra.mxu0 0.0
          %4124 = vmatprep.subr.mxu0 0.0
          %4125 = vmatpush1.xpose.msra.mxu0 0.0
          %4126 = vmatprep.subr.mxu0 0.0
          %4127 = vmatpush1.xpose.msra.mxu0 0.0
          %4128 = vmatprep.subr.mxu0 0.0
          %4129 = vmatpush1.xpose.msra.mxu0 0.0
          %4130 = vmatprep.subr.mxu0 0.0
          %4131 = vmatpush1.xpose.msra.mxu0 0.0
          %4132 = vmatprep.subr.mxu0 0.0
          %4133 = vmatpush1.xpose.msra.mxu0 0.0
          %4134 = vmatprep.subr.mxu0 0.0
          %4135 = vmatpush1.xpose.msra.mxu0 0.0
          %4136 = vmatprep.subr.mxu0 0.0
          %4137 = vmatpush1.xpose.msra.mxu0 0.0
          %4138 = vmatprep.subr.mxu0 0.0
          %4139 = vmatpush1.xpose.msra.mxu0 0.0
          %4140 = vmatprep.subr.mxu0 0.0
          %4141 = vmatpush1.xpose.msra.mxu0 0.0
          %4142 = vmatprep.subr.mxu0 0.0
          %4143 = vmatpush1.xpose.msra.mxu0 0.0
          %4144 = vmatprep.subr.mxu0 0.0
          %4145 = vmatpush1.xpose.msra.mxu0 0.0
          %4146 = vmatprep.subr.mxu0 0.0
          %4147 = vmatpush1.xpose.msra.mxu0 0.0
          %4148 = vmatprep.subr.mxu0 0.0
          %4149 = vmatpush1.xpose.msra.mxu0 0.0
          %4150 = vmatprep.subr.mxu0 0.0
          %4151 = vmatpush1.xpose.msra.mxu0 0.0
          %4152 = vmatprep.subr.mxu0 0.0
          %4153 = vmatpush1.xpose.msra.mxu0 0.0
          %4154 = vmatprep.subr.mxu0 0.0
          %4155 = vmatpush1.xpose.msra.mxu0 0.0
          %4156 = vmatprep.subr.mxu0 0.0
          %4157 = vmatpush1.xpose.msra.mxu0 0.0
          %4158 = vmatprep.subr.mxu0 0.0
          %4159 = vmatpush1.xpose.msra.mxu0 0.0
          %4160 = vmatprep.subr.mxu0 0.0
          %4161 = vmatpush1.xpose.msra.mxu0 0.0
          %4162 = vmatprep.subr.mxu0 0.0
          %4163 = vmatpush1.xpose.msra.mxu0 0.0
          %4164 = vmatprep.mubr.f32.mxu0 0.0
          %4165 = vmatmul.mubr.f32.gmra.mrb[0].mxu0 %v4092
          %v4166 = vpop.f32.mrb[0].mxu0
          %v4167 = vadd.f32 %v4090, %v4166
          %v4168 = vpop.f32.mrb[0].mxu0
          %4169 = vdwg.mxu0
          %v4170 = vld [vmem:[%s23] sm:$0xff]
          %v4171 = vld [vmem:[%s23 + $0x8] sm:$0xff]
          %v4172 = vld [vmem:[%s24] sm:$0x1]
          %v4174 = vsel %vm1371, %v4167, 0
          %4176 = vmatprep.subr.mxu0 0.0
          %4177 = vmatpush1.msra.mxu0 %v4170
          %4178 = vmatprep.subr.mxu0 0.0
          %4179 = vmatpush1.msra.mxu0 %v4171
          %4180 = vmatprep.subr.mxu0 0.0
          %4181 = vmatpush1.msra.mxu0 0.0
          %4182 = vmatprep.subr.mxu0 0.0
          %4183 = vmatpush1.msra.mxu0 0.0
          %4184 = vmatprep.subr.mxu0 0.0
          %4185 = vmatpush1.msra.mxu0 0.0
          %4186 = vmatprep.subr.mxu0 0.0
          %4187 = vmatpush1.msra.mxu0 0.0
          %4188 = vmatprep.subr.mxu0 0.0
          %4189 = vmatpush1.msra.mxu0 0.0
          %4190 = vmatprep.subr.mxu0 0.0
          %4191 = vmatpush1.msra.mxu0 0.0
          %4192 = vmatprep.subr.mxu0 0.0
          %4193 = vmatpush1.msra.mxu0 0.0
          %4194 = vmatprep.subr.mxu0 0.0
          %4195 = vmatpush1.msra.mxu0 0.0
          %4196 = vmatprep.subr.mxu0 0.0
          %4197 = vmatpush1.msra.mxu0 0.0
          %4198 = vmatprep.subr.mxu0 0.0
          %4199 = vmatpush1.msra.mxu0 0.0
          %4200 = vmatprep.subr.mxu0 0.0
          %4201 = vmatpush1.msra.mxu0 0.0
          %4202 = vmatprep.subr.mxu0 0.0
          %4203 = vmatpush1.msra.mxu0 0.0
          %4204 = vmatprep.subr.mxu0 0.0
          %4205 = vmatpush1.msra.mxu0 0.0
          %4206 = vmatprep.subr.mxu0 0.0
          %4207 = vmatpush1.msra.mxu0 0.0
          %4208 = vmatprep.subr.mxu0 0.0
          %4209 = vmatpush1.msra.mxu0 0.0
          %4210 = vmatprep.subr.mxu0 0.0
          %4211 = vmatpush1.msra.mxu0 0.0
          %4212 = vmatprep.subr.mxu0 0.0
          %4213 = vmatpush1.msra.mxu0 0.0
          %4214 = vmatprep.subr.mxu0 0.0
          %4215 = vmatpush1.msra.mxu0 0.0
          %4216 = vmatprep.subr.mxu0 0.0
          %4217 = vmatpush1.msra.mxu0 0.0
          %4218 = vmatprep.subr.mxu0 0.0
          %4219 = vmatpush1.msra.mxu0 0.0
          %4220 = vmatprep.subr.mxu0 0.0
          %4221 = vmatpush1.msra.mxu0 0.0
          %4222 = vmatprep.subr.mxu0 0.0
          %4223 = vmatpush1.msra.mxu0 0.0
          %4224 = vmatprep.subr.mxu0 0.0
          %4225 = vmatpush1.msra.mxu0 0.0
          %4226 = vmatprep.subr.mxu0 0.0
          %4227 = vmatpush1.msra.mxu0 0.0
          %4228 = vmatprep.subr.mxu0 0.0
          %4229 = vmatpush1.msra.mxu0 0.0
          %4230 = vmatprep.subr.mxu0 0.0
          %4231 = vmatpush1.msra.mxu0 0.0
          %4232 = vmatprep.subr.mxu0 0.0
          %4233 = vmatpush1.msra.mxu0 0.0
          %4234 = vmatprep.subr.mxu0 0.0
          %4235 = vmatpush1.msra.mxu0 0.0
          %4236 = vmatprep.subr.mxu0 0.0
          %4237 = vmatpush1.msra.mxu0 0.0
          %4238 = vmatprep.subr.mxu0 0.0
          %4239 = vmatpush1.msra.mxu0 0.0
          %4240 = vmatprep.mubr.f32.mxu0 0.0
          %4241 = vmatmul.mubr.f32.gmra.mrb[0].mxu0 %v4174
          %v4242 = vpop.f32.mrb[0].mxu0
          %v4243 = vadd.f32 %v4172, %v4242
          %v4244 = vpop.f32.mrb[0].mxu0
          %4245 = vdwg.mxu0
          %v4246 = vmax.f32 %v4243, 0.0
          %v4247 = vld [vmem:[%s25] sm:$0xff]
          %v4248 = vld [vmem:[%s25 + $0x8] sm:$0xf]
          %v4249 = vld [vmem:[%s26] sm:$0x1]
          %vm4250 = vcmask 97280
          %v4252 = vsel %vm4250, %v4246, 0
          %vm4254 = vcmask 1043456
          %v4256 = vsel %vm4254, %v4248, 0
          %4258 = vmatprep.subr.mxu0 0.0
          %4259 = vmatpush1.msra.mxu0 %v4247
          %4260 = vmatprep.subr.mxu0 0.0
          %4261 = vmatpush1.msra.mxu0 %v4256
          %4262 = vmatprep.subr.mxu0 0.0
          %4263 = vmatpush1.msra.mxu0 0.0
          %4264 = vmatprep.subr.mxu0 0.0
          %4265 = vmatpush1.msra.mxu0 0.0
          %4266 = vmatprep.subr.mxu0 0.0
          %4267 = vmatpush1.msra.mxu0 0.0
          %4268 = vmatprep.subr.mxu0 0.0
          %4269 = vmatpush1.msra.mxu0 0.0
          %4270 = vmatprep.subr.mxu0 0.0
          %4271 = vmatpush1.msra.mxu0 0.0
          %4272 = vmatprep.subr.mxu0 0.0
          %4273 = vmatpush1.msra.mxu0 0.0
          %4274 = vmatprep.subr.mxu0 0.0
          %4275 = vmatpush1.msra.mxu0 0.0
          %4276 = vmatprep.subr.mxu0 0.0
          %4277 = vmatpush1.msra.mxu0 0.0
          %4278 = vmatprep.subr.mxu0 0.0
          %4279 = vmatpush1.msra.mxu0 0.0
          %4280 = vmatprep.subr.mxu0 0.0
          %4281 = vmatpush1.msra.mxu0 0.0
          %4282 = vmatprep.subr.mxu0 0.0
          %4283 = vmatpush1.msra.mxu0 0.0
          %4284 = vmatprep.subr.mxu0 0.0
          %4285 = vmatpush1.msra.mxu0 0.0
          %4286 = vmatprep.subr.mxu0 0.0
          %4287 = vmatpush1.msra.mxu0 0.0
          %4288 = vmatprep.subr.mxu0 0.0
          %4289 = vmatpush1.msra.mxu0 0.0
          %4290 = vmatprep.subr.mxu0 0.0
          %4291 = vmatpush1.msra.mxu0 0.0
          %4292 = vmatprep.subr.mxu0 0.0
          %4293 = vmatpush1.msra.mxu0 0.0
          %4294 = vmatprep.subr.mxu0 0.0
          %4295 = vmatpush1.msra.mxu0 0.0
          %4296 = vmatprep.subr.mxu0 0.0
          %4297 = vmatpush1.msra.mxu0 0.0
          %4298 = vmatprep.subr.mxu0 0.0
          %4299 = vmatpush1.msra.mxu0 0.0
          %4300 = vmatprep.subr.mxu0 0.0
          %4301 = vmatpush1.msra.mxu0 0.0
          %4302 = vmatprep.subr.mxu0 0.0
          %4303 = vmatpush1.msra.mxu0 0.0
          %4304 = vmatprep.subr.mxu0 0.0
          %4305 = vmatpush1.msra.mxu0 0.0
          %4306 = vmatprep.subr.mxu0 0.0
          %4307 = vmatpush1.msra.mxu0 0.0
          %4308 = vmatprep.subr.mxu0 0.0
          %4309 = vmatpush1.msra.mxu0 0.0
          %4310 = vmatprep.subr.mxu0 0.0
          %4311 = vmatpush1.msra.mxu0 0.0
          %4312 = vmatprep.subr.mxu0 0.0
          %4313 = vmatpush1.msra.mxu0 0.0
          %4314 = vmatprep.subr.mxu0 0.0
          %4315 = vmatpush1.msra.mxu0 0.0
          %4316 = vmatprep.subr.mxu0 0.0
          %4317 = vmatpush1.msra.mxu0 0.0
          %4318 = vmatprep.subr.mxu0 0.0
          %4319 = vmatpush1.msra.mxu0 0.0
          %4320 = vmatprep.subr.mxu0 0.0
          %4321 = vmatpush1.msra.mxu0 0.0
          %4322 = vmatprep.mubr.f32.mxu0 0.0
          %4323 = vmatmul.mubr.f32.gmra.mrb[0].mxu0 %v4252
          %v4324 = vpop.f32.mrb[0].mxu0
          %v4325 = vadd.f32 %v4249, %v4324
          %v4326 = vpop.f32.mrb[0].mxu0
          %4327 = vdwg.mxu0
          %vm4328 = vcmask 57344
          %4329 = vst.msk [vmem:[%s986] sm:$0x1] %vm4328, %v4325
        $region136: #{tf_model_forward.1} parent=127 // pred_fallthru
          _
        %s4330 = sand.u32 %s700, 1
        %s4331 = scalar_lea.sflag [#allocation6], %s4330
        %s4332 = sand.u32 %s700, 1
        %s4333 = scalar_lea.vmem [#allocation5], %s4332
        // Predicated region
        $region137: #{tf_model_forward.1} parent=127 // pred_check
          %p4334 = pneg %p710
        $region138: #{tf_model_forward.1} parent=127 // pred_check_branch
          %4336 = sbr.rel (%p4334) target = $region140
        $region139: #{tf_model_forward.1} parent=127 // pred_region
          %s4338 = ssub.s32 16, 16
          %4339 = vsyncadd %s4331, %s4338
          %s4340 = smul.addr %s47, 16
          %s4341 = scalar_lea.hbm %s27, %s4340
          %s4343 = sshll.u32 %s4333, 4
          %s4344 = int_to_ptr.vmem [resolvable:$true] %s4343
          %4346 = dma.vmem_to_hbm [thread:$0]  %s4344, 16, %s4341, %s4331
        $region140: #{tf_model_forward.1} parent=127 // pred_fallthru
          _
      $region128: #{tf_model_forward.1} parent=5 // pred_fallthru
        _
      %p4347 = scmp.le.s32.totalorder 2, %s38
      // Predicated region
      $region141: #{tf_model_forward.1} parent=5 // pred_check
        %p4348 = pneg %p4347
      $region142: #{tf_model_forward.1} parent=5 // pred_check_branch
        %4350 = sbr.rel (%p4348) target = $region144
      $region143: #{tf_model_forward.1} parent=5 // pred_region
        %s4351 = ssub.s32 %s38, 2
        // Predicated region
        $region145: #{tf_model_forward.1} parent=143 // pred_check
          %p4352 = pneg %p716
        $region146: #{tf_model_forward.1} parent=143 // pred_check_branch
          %4354 = sbr.rel (%p4352) target = $region148
        $region147: #{tf_model_forward.1} parent=143 // pred_region
          %s4355 = sand.u32 %s701, 1
          %s4356 = scalar_lea.sflag [#allocation6], %s4355
          %s4357 = sand.u32 %s701, 1
          %s4358 = scalar_lea.vmem [#allocation5], %s4357
          %4359 = dma.done %s4356, 16
        $region148: #{tf_model_forward.1} parent=143 // pred_fallthru
          _
      $region144: #{tf_model_forward.1} parent=5 // pred_fallthru
        _
    $region6: #{tf_model_forward.1} parent=1 // loop_footer
      %s42 = sadd.s32 1, %s38
    $region7: #{tf_model_forward.1} parent=1 // loop_footer_branch
      %37 = sbr.rel target = $region3
    $region8: #{tf_model_forward.1} parent=1 // loop_exit
      _
    %4360 = vsyncpa [#allocation6], 1
    %s4361 = scalar_lea.sflag [#allocation6], 1
    %4362 = vsyncpa %s4361, 1

</llo_original>
